<compile_context>
chip_gen: v7x
topology: tpu7x:2x2x1
jax: 0.10.0
libtpu: 0.0.40
codegen_flags: <defaults>
</compile_context>

<pallas_src>
import math

import jax
import jax.numpy as jnp
from jax.experimental import pallas as pl
from jax.experimental.pallas import tpu as pltpu


# ----------------------------------------------------------------------------
# Kernel: whole encoder (both fused Linear+BN+ReLU stages) for one batch block.
# ----------------------------------------------------------------------------
def _cell_line_encoder_kernel(x_ref, w1_ref, b1_ref, w2_ref, b2_ref, o_ref):
    # Stage 1: Linear(954->512) with BN1 folded in, then ReLU.
    h = jnp.dot(x_ref[...], w1_ref[...],
                preferred_element_type=jnp.float32) + b1_ref[...]
    h = jnp.maximum(h, 0.0).astype(jnp.bfloat16)      # ReLU, bf16 for 2nd MXU pass
    # TODO(synk): Dropout(0.3) is identity here (eval mode); training-mode RNG
    #             masking and BatchNorm batch statistics are not implemented.
    # Stage 2: Linear(512->256) with BN2 folded in, then ReLU.
    o = jnp.dot(h, w2_ref[...],
                preferred_element_type=jnp.float32) + b2_ref[...]
    o_ref[...] = jnp.maximum(o, 0.0)                  # ReLU, f32 output


# ----------------------------------------------------------------------------
# Wrapper.
# ----------------------------------------------------------------------------
def _pick_batch_block(B):
    """Whole batch for small B; 512-2048-row streamed blocks for large B."""
    if B <= 1024:
        return B
    for bm in (2048, 1024, 512, 256, 128):
        if B % bm == 0:
            return bm
    return B  # ragged large batch: fall back to a single block


def _vmem_limit_bytes(bm, Din, H, Dout):
    """Scoped-VMEM estimate: double-buffered x/out/weights + f32 intermediate."""
    bx = 2 * bm * Din * 2                              # bf16 x, double-buffered
    bo = 2 * bm * Dout * 4                             # f32 out, double-buffered
    bw = 2 * ((Din * H + H * Dout) * 2 + (H + Dout) * 4)  # weights + biases
    bh = bm * H * 4                                    # f32 hidden activations
    est = bx + bo + bw + bh
    # headroom, but never above v7x's 64 MiB physical VMEM
    return min(64 * 1024 * 1024,
               max(32 * 1024 * 1024, int(1.5 * est) + (4 << 20)))


def cell_line_encoder(x, folded, *, batch_block=None):
    """x: (B, input_dim) float. folded: dict(w1,b1,w2,b2) pre-transposed,
    BN-folded params (w* in bf16, b* in f32). Returns (B, output_dim) f32."""
    B, Din = x.shape
    H = folded["w1"].shape[1]
    Dout = folded["w2"].shape[1]

    bm = _pick_batch_block(B) if batch_block is None else batch_block
    assert B % bm == 0 and (bm == B or bm % 8 == 0), "batch block must tile B"
    grid = (B // bm,)

    x = x.astype(jnp.bfloat16)  # halves x DMA, native bf16 MXU feed

    bytes_accessed = (B * Din * 2                      # x (bf16)
                      + (Din * H + H * Dout) * 2       # weights (bf16)
                      + (H + Dout) * 4                 # biases (f32)
                      + B * Dout * 4)                  # output (f32)
    cost = pl.CostEstimate(flops=2 * B * (Din * H + H * Dout),
                           transcendentals=0,
                           bytes_accessed=bytes_accessed)

    return pl.pallas_call(
        _cell_line_encoder_kernel,
        grid=grid,
        in_specs=[
            pl.BlockSpec((bm, Din), lambda i: (i, 0)),   # x (batch block)
            pl.BlockSpec((Din, H), lambda i: (0, 0)),    # W1^T (BN1 folded, bf16)
            pl.BlockSpec((1, H), lambda i: (0, 0)),      # bias1 (BN1 folded, f32)
            pl.BlockSpec((H, Dout), lambda i: (0, 0)),   # W2^T (BN2 folded, bf16)
            pl.BlockSpec((1, Dout), lambda i: (0, 0)),   # bias2 (BN2 folded, f32)
        ],
        out_specs=pl.BlockSpec((bm, Dout), lambda i: (i, 0)),
        out_shape=jax.ShapeDtypeStruct((B, Dout), jnp.float32),
        compiler_params=pltpu.CompilerParams(
            dimension_semantics=("parallel",),
            vmem_limit_bytes=_vmem_limit_bytes(bm, Din, H, Dout)),
        cost_estimate=cost,
    )(x, folded["w1"], folded["b1"], folded["w2"], folded["b2"])


# ----------------------------------------------------------------------------
# Host-side parameter preparation.
# ----------------------------------------------------------------------------
def fold_linear_bn(w, b, gamma, beta, mean, var, eps=1e-5):
    """Fold eval-mode BatchNorm1d into the preceding Linear, pre-transposed.

    Linear: h = x @ w.T + b                 (w: (out, in), b: (out,))
    BN    : y = (h - mean)/sqrt(var+eps)*gamma + beta
    =>      y = x @ (w * s[:, None]).T + ((b - mean) * s + beta),
            s = gamma / sqrt(var + eps)
    Returns (w_folded_T: (in, out) bf16, b_folded: (1, out) f32).
    """
    s = gamma / jnp.sqrt(var + eps)
    w_folded_t = (w * s[:, None]).T.astype(jnp.bfloat16)
    b_folded = ((b - mean) * s + beta).reshape(1, -1).astype(jnp.float32)
    return w_folded_t, b_folded


def make_params(key, input_dim, hidden_dim, output_dim):
    """Deterministic PyTorch-shaped raw parameters (Linear + BatchNorm1d stats)."""
    ks = jax.random.split(key, 12)

    def lin(kw, kb, out_d, in_d):
        bound = 1.0 / math.sqrt(in_d)
        w = jax.random.uniform(kw, (out_d, in_d), jnp.float32, -bound, bound)
        b = jax.random.uniform(kb, (out_d,), jnp.float32, -bound, bound)
        return w, b

    def bn(kg, kb, km, kv, n):
        gamma = jax.random.uniform(kg, (n,), jnp.float32, 0.5, 1.5)
        beta = jax.random.normal(kb, (n,), jnp.float32) * 0.1
        mean = jax.random.normal(km, (n,), jnp.float32) * 0.1
        var = jax.random.uniform(kv, (n,), jnp.float32, 0.5, 1.5)
        return gamma, beta, mean, var

    w1, b1 = lin(ks[0], ks[1], hidden_dim, input_dim)
    g1, be1, m1, v1 = bn(ks[2], ks[3], ks[4], ks[5], hidden_dim)
    w2, b2 = lin(ks[6], ks[7], output_dim, hidden_dim)
    g2, be2, m2, v2 = bn(ks[8], ks[9], ks[10], ks[11], output_dim)
    return dict(w1=w1, b1=b1, g1=g1, be1=be1, m1=m1, v1=v1,
                w2=w2, b2=b2, g2=g2, be2=be2, m2=m2, v2=v2)


def fold_params(raw, eps=1e-5):
    w1, b1 = fold_linear_bn(raw["w1"], raw["b1"], raw["g1"], raw["be1"],
                            raw["m1"], raw["v1"], eps)
    w2, b2 = fold_linear_bn(raw["w2"], raw["b2"], raw["g2"], raw["be2"],
                            raw["m2"], raw["v2"], eps)
    return dict(w1=w1, b1=b1, w2=w2, b2=b2)


def reference_forward(x, raw, eps=1e-5):
    """Pure-JAX f32, unfolded replica of CellLineEncoder.forward (eval mode)."""
    h = x @ raw["w1"].T + raw["b1"]
    h = (h - raw["m1"]) / jnp.sqrt(raw["v1"] + eps) * raw["g1"] + raw["be1"]
    h = jnp.maximum(h, 0.0)                      # ReLU; Dropout = identity (eval)
    o = h @ raw["w2"].T + raw["b2"]
    o = (o - raw["m2"]) / jnp.sqrt(raw["v2"] + eps) * raw["g2"] + raw["be2"]
    return jnp.maximum(o, 0.0)


if __name__ == "__main__":
    input_dim, hidden_dim, output_dim = 954, 512, 256
    batch = 256   # >= 256 rows: fills the v6e/v7x MXU, amortizes the weight DMA

    key = jax.random.PRNGKey(0)
    kx, kp = jax.random.split(key)
    x = jax.random.normal(kx, (batch, input_dim), jnp.float32)
    raw = make_params(kp, input_dim, hidden_dim, output_dim)
    folded = fold_params(raw)

    out = cell_line_encoder(x, folded)
    jax.block_until_ready(out)

    assert out.shape == (batch, output_dim)
    ref = reference_forward(x, raw)
    # bf16 weights/inputs with f32 accumulation: allow ~bf16-level deviation.
    assert jnp.allclose(out, ref, atol=5e-2, rtol=2e-2), (
        f"max abs error {float(jnp.max(jnp.abs(out - ref)))}")
    print("KERNEL_OK")
</pallas_src>

<mosaic_0001>
module attributes {stable_mosaic.version = 11 : i64} {
  func.func @_cell_line_encoder_kernel(%arg0: i32, %arg1: memref<256x954xbf16, #tpu.memory_space<vmem>>, %arg2: memref<954x512xbf16, #tpu.memory_space<vmem>>, %arg3: memref<1x512xf32, #tpu.memory_space<vmem>>, %arg4: memref<512x256xbf16, #tpu.memory_space<vmem>>, %arg5: memref<1x256xf32, #tpu.memory_space<vmem>>, %arg6: memref<256x256xf32, #tpu.memory_space<vmem>>) attributes {dimension_semantics = [#tpu.dimension_semantics<parallel>], iteration_bounds = array<i64: 1>, scalar_prefetch = 0 : i64, scratch_operands = 0 : i64, tpu.core_type = #tpu.core_type<tc>, window_params = [{transform_indices = @transform_0, window_bounds = array<i64: 256, 954>}, {pipeline_mode = #tpu.pipeline_mode<synchronous>, transform_indices = @transform_1, window_bounds = array<i64: 954, 512>}, {pipeline_mode = #tpu.pipeline_mode<synchronous>, transform_indices = @transform_2, window_bounds = array<i64: 1, 512>}, {pipeline_mode = #tpu.pipeline_mode<synchronous>, transform_indices = @transform_3, window_bounds = array<i64: 512, 256>}, {pipeline_mode = #tpu.pipeline_mode<synchronous>, transform_indices = @transform_4, window_bounds = array<i64: 1, 256>}, {transform_indices = @transform_5, window_bounds = array<i64: 256, 256>}]} {
    %c0 = arith.constant 0 : index
    %c0_0 = arith.constant 0 : index
    %0 = vector.load %arg1[%c0, %c0_0] : memref<256x954xbf16, #tpu.memory_space<vmem>>, vector<256x954xbf16>
    %c0_1 = arith.constant 0 : index
    %c0_2 = arith.constant 0 : index
    %1 = vector.load %arg2[%c0_1, %c0_2] : memref<954x512xbf16, #tpu.memory_space<vmem>>, vector<954x512xbf16>
    %cst = arith.constant dense<0.000000e+00> : vector<256x512xf32>
    %2 = tpu.matmul %0, %1, %cst {dimension_numbers = #tpu.dot_dimension_numbers<[1], [0], [0], [1], [0, 0, 1, 1], [], []>} : vector<256x954xbf16>, vector<954x512xbf16>, vector<256x512xf32> -> vector<256x512xf32>
    %c0_3 = arith.constant 0 : index
    %c0_4 = arith.constant 0 : index
    %3 = vector.load %arg3[%c0_3, %c0_4] : memref<1x512xf32, #tpu.memory_space<vmem>>, vector<1x512xf32>
    %4 = vector.broadcast %3 : vector<1x512xf32> to vector<256x512xf32>
    %5 = arith.addf %2, %4 : vector<256x512xf32>
    %cst_5 = arith.constant 0.000000e+00 : f32
    %6 = vector.broadcast %cst_5 : f32 to vector<256x512xf32>
    %7 = arith.maximumf %5, %6 : vector<256x512xf32>
    %8 = arith.truncf %7 : vector<256x512xf32> to vector<256x512xbf16>
    %c0_6 = arith.constant 0 : index
    %c0_7 = arith.constant 0 : index
    %9 = vector.load %arg4[%c0_6, %c0_7] : memref<512x256xbf16, #tpu.memory_space<vmem>>, vector<512x256xbf16>
    %cst_8 = arith.constant dense<0.000000e+00> : vector<256x256xf32>
    %10 = tpu.matmul %8, %9, %cst_8 {dimension_numbers = #tpu.dot_dimension_numbers<[1], [0], [0], [1], [0, 0, 1, 1], [], []>} : vector<256x512xbf16>, vector<512x256xbf16>, vector<256x256xf32> -> vector<256x256xf32>
    %c0_9 = arith.constant 0 : index
    %c0_10 = arith.constant 0 : index
    %11 = vector.load %arg5[%c0_9, %c0_10] : memref<1x256xf32, #tpu.memory_space<vmem>>, vector<1x256xf32>
    %12 = vector.broadcast %11 : vector<1x256xf32> to vector<256x256xf32>
    %13 = arith.addf %10, %12 : vector<256x256xf32>
    %cst_11 = arith.constant 0.000000e+00 : f32
    %14 = vector.broadcast %cst_11 : f32 to vector<256x256xf32>
    %15 = arith.maximumf %13, %14 : vector<256x256xf32>
    %c0_12 = arith.constant 0 : index
    %c0_13 = arith.constant 0 : index
    %16 = vector.load %arg6[%c0_12, %c0_13] : memref<256x256xf32, #tpu.memory_space<vmem>>, vector<256x256xf32>
    tpu.vector_store %arg6[%c0_12, %c0_13], %15 {strides = array<i32>} : memref<256x256xf32, #tpu.memory_space<vmem>>, vector<256x256xf32>,
    return
  }
  func.func @transform_0(%arg0: i32) -> (i32, i32) {
    %c0_i32 = arith.constant 0 : i32
    %c0_i32_0 = arith.constant 0 : i32
    return %arg0, %c0_i32 : i32, i32
  }
  func.func @transform_1(%arg0: i32) -> (i32, i32) {
    %c0_i32 = arith.constant 0 : i32
    %c0_i32_0 = arith.constant 0 : i32
    %c0_i32_1 = arith.constant 0 : i32
    return %c0_i32, %c0_i32_0 : i32, i32
  }
  func.func @transform_2(%arg0: i32) -> (i32, i32) {
    %c0_i32 = arith.constant 0 : i32
    %c0_i32_0 = arith.constant 0 : i32
    %c0_i32_1 = arith.constant 0 : i32
    return %c0_i32, %c0_i32_0 : i32, i32
  }
  func.func @transform_3(%arg0: i32) -> (i32, i32) {
    %c0_i32 = arith.constant 0 : i32
    %c0_i32_0 = arith.constant 0 : i32
    %c0_i32_1 = arith.constant 0 : i32
    return %c0_i32, %c0_i32_0 : i32, i32
  }
  func.func @transform_4(%arg0: i32) -> (i32, i32) {
    %c0_i32 = arith.constant 0 : i32
    %c0_i32_0 = arith.constant 0 : i32
    %c0_i32_1 = arith.constant 0 : i32
    return %c0_i32, %c0_i32_0 : i32, i32
  }
  func.func @transform_5(%arg0: i32) -> (i32, i32) {
    %c0_i32 = arith.constant 0 : i32
    %c0_i32_0 = arith.constant 0 : i32
    return %arg0, %c0_i32 : i32, i32
  }
}

</mosaic_0001>

<llo_original>
// kernel: tpu_custom_call.1
$region0: #{tpu_custom_call.1}
  #allocation0 [shape = 'u32[]', space=smem, size = 0x4, offset = 0x4, fixed_abs, tag = 'smem constant byte address 0x4 - core index']
  #allocation1 [shape = 'u32[144,128]{1,0:T(1,128)}', space=vmem, size = 0x12000, scoped, tag = 'internal scratch']
  %s0 = inlined_call_operand.vmem [shape: bf16[256,954], index: 0, kind: input, shape index: {}]
  %s1 = inlined_call_operand.vmem [shape: bf16[954,512], index: 1, kind: input, shape index: {}]
  %s2 = inlined_call_operand.vmem [shape: f32[1,512], index: 2, kind: input, shape index: {}]
  %s3 = inlined_call_operand.hbm [shape: bf16[512,256], index: 3, kind: input, shape index: {}]
  %s4 = inlined_call_operand.vmem [shape: f32[1,256], index: 4, kind: input, shape index: {}]
  %s5 = inlined_call_operand.hbm [shape: f32[256,256], index: 5, kind: output, shape index: {}]
  %s6 = sld [smem:[#allocation0]]
  $region34: #{tpu_custom_call.1} parent=0
    _
  %s8 = ssub.s32 1, %s6
  %s9 = scalar_select 0, %s8, %s6
  $region1: #{tpu_custom_call.1} parent=0
    #allocation2 [shape = 'u8[262144]{0}', space=vmem, size = 0x40000, scoped, tag = 'input window, operand 3, single buffered']
    #allocation3 [shape = 's32[1]{0}', space=sflag, size = 0x4, scoped, tag = 'scoped memory for tpu_custom_call.1']
    #allocation4 [shape = 's32[1]{0}', space=sflag, size = 0x4, scoped, tag = 'scoped memory for tpu_custom_call.1']
    #allocation5 [shape = 'u8[262144]{0}', space=vmem, size = 0x40000, scoped, tag = 'output window, operand 0, single buffered']
    %10 = vsyncpa [#allocation3], 0
    %11 = vsyncpa [#allocation4], 0
    // Predicated region
    $region2: #{tpu_custom_call.1} parent=1 // pred_check
      _
    $region3: #{tpu_custom_call.1} parent=1 // pred_check_branch
      %13 = sbr.rel (0) target = $region5
    $region4: #{tpu_custom_call.1} parent=1 // pred_region
      _
    $region5: #{tpu_custom_call.1} parent=1 // pred_fallthru
      _
    // Predicated region
    $region6: #{tpu_custom_call.1} parent=1 // pred_check
      _
    $region7: #{tpu_custom_call.1} parent=1 // pred_check_branch
      %15 = sbr.rel (0) target = $region9
    $region8: #{tpu_custom_call.1} parent=1 // pred_region
      _
    $region9: #{tpu_custom_call.1} parent=1 // pred_fallthru
      _
    // Predicated region
    $region10: #{tpu_custom_call.1} parent=1 // pred_check
      _
    $region11: #{tpu_custom_call.1} parent=1 // pred_check_branch
      %17 = sbr.rel (0) target = $region13
    $region12: #{tpu_custom_call.1} parent=1 // pred_region
      _
    $region13: #{tpu_custom_call.1} parent=1 // pred_fallthru
      _
    // Predicated region
    $region14: #{tpu_custom_call.1} parent=1 // pred_check
      _
    $region15: #{tpu_custom_call.1} parent=1 // pred_check_branch
      %19 = sbr.rel (0) target = $region17
    $region16: #{tpu_custom_call.1} parent=1 // pred_region
      %s21 = ssub.s32 8192, 8192
      %22 = vsyncadd [#allocation3], %s21
      %s23 = sshll.u32 [#allocation2], 4
      %s24 = int_to_ptr.vmem [resolvable:$true] %s23
      %29 = dma.hbm_to_vmem [thread:$0]  %s3, 8192, %s24, [#allocation3], 128, 128, 8
    $region17: #{tpu_custom_call.1} parent=1 // pred_fallthru
      _
    // Predicated region
    $region18: #{tpu_custom_call.1} parent=1 // pred_check
      _
    $region19: #{tpu_custom_call.1} parent=1 // pred_check_branch
      %31 = sbr.rel (0) target = $region21
    $region20: #{tpu_custom_call.1} parent=1 // pred_region
      _
    $region21: #{tpu_custom_call.1} parent=1 // pred_fallthru
      _
    // Predicated region
    $region22: #{tpu_custom_call.1} parent=1 // pred_check
      _
    $region23: #{tpu_custom_call.1} parent=1 // pred_check_branch
      %33 = sbr.rel (0) target = $region25
    $region24: #{tpu_custom_call.1} parent=1 // pred_region
      %34 = dma.done [#allocation3], 8192
    $region25: #{tpu_custom_call.1} parent=1 // pred_fallthru
      _
    %v36 = vld [vmem:[%s0] sm:$0xff]
    %v37 = vld [vmem:[%s0 + $0x8] sm:$0xff]
    %v38 = vld [vmem:[%s0 + $0x10] sm:$0xff]
    %v39 = vld [vmem:[%s0 + $0x18] sm:$0xff]
    %v40 = vld [vmem:[%s0 + $0x20] sm:$0xff]
    %v41 = vld [vmem:[%s0 + $0x28] sm:$0xff]
    %v42 = vld [vmem:[%s0 + $0x30] sm:$0xff]
    %v43 = vld [vmem:[%s0 + $0x38] sm:$0xff]
    %v44 = vld [vmem:[%s0 + $0x40] sm:$0xff]
    %v45 = vld [vmem:[%s0 + $0x48] sm:$0xff]
    %v46 = vld [vmem:[%s0 + $0x50] sm:$0xff]
    %v47 = vld [vmem:[%s0 + $0x58] sm:$0xff]
    %v48 = vld [vmem:[%s0 + $0x60] sm:$0xff]
    %v49 = vld [vmem:[%s0 + $0x68] sm:$0xff]
    %v50 = vld [vmem:[%s0 + $0x70] sm:$0xff]
    %v51 = vld [vmem:[%s0 + $0x78] sm:$0xff]
    %v52 = vld [vmem:[%s0 + $0x80] sm:$0xff]
    %v53 = vld [vmem:[%s0 + $0x88] sm:$0xff]
    %v54 = vld [vmem:[%s0 + $0x90] sm:$0xff]
    %v55 = vld [vmem:[%s0 + $0x98] sm:$0xff]
    %v56 = vld [vmem:[%s0 + $0xa0] sm:$0xff]
    %v57 = vld [vmem:[%s0 + $0xa8] sm:$0xff]
    %v58 = vld [vmem:[%s0 + $0xb0] sm:$0xff]
    %v59 = vld [vmem:[%s0 + $0xb8] sm:$0xff]
    %v60 = vld [vmem:[%s0 + $0xc0] sm:$0xff]
    %v61 = vld [vmem:[%s0 + $0xc8] sm:$0xff]
    %v62 = vld [vmem:[%s0 + $0xd0] sm:$0xff]
    %v63 = vld [vmem:[%s0 + $0xd8] sm:$0xff]
    %v64 = vld [vmem:[%s0 + $0xe0] sm:$0xff]
    %v65 = vld [vmem:[%s0 + $0xe8] sm:$0xff]
    %v66 = vld [vmem:[%s0 + $0xf0] sm:$0xff]
    %v67 = vld [vmem:[%s0 + $0xf8] sm:$0xff]
    %v68 = vld [vmem:[%s0 + $0x100] sm:$0xff]
    %v69 = vld [vmem:[%s0 + $0x108] sm:$0xff]
    %v70 = vld [vmem:[%s0 + $0x110] sm:$0xff]
    %v71 = vld [vmem:[%s0 + $0x118] sm:$0xff]
    %v72 = vld [vmem:[%s0 + $0x120] sm:$0xff]
    %v73 = vld [vmem:[%s0 + $0x128] sm:$0xff]
    %v74 = vld [vmem:[%s0 + $0x130] sm:$0xff]
    %v75 = vld [vmem:[%s0 + $0x138] sm:$0xff]
    %v76 = vld [vmem:[%s0 + $0x140] sm:$0xff]
    %v77 = vld [vmem:[%s0 + $0x148] sm:$0xff]
    %v78 = vld [vmem:[%s0 + $0x150] sm:$0xff]
    %v79 = vld [vmem:[%s0 + $0x158] sm:$0xff]
    %v80 = vld [vmem:[%s0 + $0x160] sm:$0xff]
    %v81 = vld [vmem:[%s0 + $0x168] sm:$0xff]
    %v82 = vld [vmem:[%s0 + $0x170] sm:$0xff]
    %v83 = vld [vmem:[%s0 + $0x178] sm:$0xff]
    %v84 = vld [vmem:[%s0 + $0x180] sm:$0xff]
    %v85 = vld [vmem:[%s0 + $0x188] sm:$0xff]
    %v86 = vld [vmem:[%s0 + $0x190] sm:$0xff]
    %v87 = vld [vmem:[%s0 + $0x198] sm:$0xff]
    %v88 = vld [vmem:[%s0 + $0x1a0] sm:$0xff]
    %v89 = vld [vmem:[%s0 + $0x1a8] sm:$0xff]
    %v90 = vld [vmem:[%s0 + $0x1b0] sm:$0xff]
    %v91 = vld [vmem:[%s0 + $0x1b8] sm:$0xff]
    %v92 = vld [vmem:[%s0 + $0x1c0] sm:$0xff]
    %v93 = vld [vmem:[%s0 + $0x1c8] sm:$0xff]
    %v94 = vld [vmem:[%s0 + $0x1d0] sm:$0xff]
    %v95 = vld [vmem:[%s0 + $0x1d8] sm:$0xff]
    %v96 = vld [vmem:[%s0 + $0x1e0] sm:$0xff]
    %v97 = vld [vmem:[%s0 + $0x1e8] sm:$0xff]
    %v98 = vld [vmem:[%s0 + $0x1f0] sm:$0xff]
    %v99 = vld [vmem:[%s0 + $0x1f8] sm:$0xff]
    %v100 = vld [vmem:[%s0 + $0x200] sm:$0xff]
    %v101 = vld [vmem:[%s0 + $0x208] sm:$0xff]
    %v102 = vld [vmem:[%s0 + $0x210] sm:$0xff]
    %v103 = vld [vmem:[%s0 + $0x218] sm:$0xff]
    %v104 = vld [vmem:[%s0 + $0x220] sm:$0xff]
    %v105 = vld [vmem:[%s0 + $0x228] sm:$0xff]
    %v106 = vld [vmem:[%s0 + $0x230] sm:$0xff]
    %v107 = vld [vmem:[%s0 + $0x238] sm:$0xff]
    %v108 = vld [vmem:[%s0 + $0x240] sm:$0xff]
    %v109 = vld [vmem:[%s0 + $0x248] sm:$0xff]
    %v110 = vld [vmem:[%s0 + $0x250] sm:$0xff]
    %v111 = vld [vmem:[%s0 + $0x258] sm:$0xff]
    %v112 = vld [vmem:[%s0 + $0x260] sm:$0xff]
    %v113 = vld [vmem:[%s0 + $0x268] sm:$0xff]
    %v114 = vld [vmem:[%s0 + $0x270] sm:$0xff]
    %v115 = vld [vmem:[%s0 + $0x278] sm:$0xff]
    %v116 = vld [vmem:[%s0 + $0x280] sm:$0xff]
    %v117 = vld [vmem:[%s0 + $0x288] sm:$0xff]
    %v118 = vld [vmem:[%s0 + $0x290] sm:$0xff]
    %v119 = vld [vmem:[%s0 + $0x298] sm:$0xff]
    %v120 = vld [vmem:[%s0 + $0x2a0] sm:$0xff]
    %v121 = vld [vmem:[%s0 + $0x2a8] sm:$0xff]
    %v122 = vld [vmem:[%s0 + $0x2b0] sm:$0xff]
    %v123 = vld [vmem:[%s0 + $0x2b8] sm:$0xff]
    %v124 = vld [vmem:[%s0 + $0x2c0] sm:$0xff]
    %v125 = vld [vmem:[%s0 + $0x2c8] sm:$0xff]
    %v126 = vld [vmem:[%s0 + $0x2d0] sm:$0xff]
    %v127 = vld [vmem:[%s0 + $0x2d8] sm:$0xff]
    %v128 = vld [vmem:[%s0 + $0x2e0] sm:$0xff]
    %v129 = vld [vmem:[%s0 + $0x2e8] sm:$0xff]
    %v130 = vld [vmem:[%s0 + $0x2f0] sm:$0xff]
    %v131 = vld [vmem:[%s0 + $0x2f8] sm:$0xff]
    %v132 = vld [vmem:[%s0 + $0x300] sm:$0xff]
    %v133 = vld [vmem:[%s0 + $0x308] sm:$0xff]
    %v134 = vld [vmem:[%s0 + $0x310] sm:$0xff]
    %v135 = vld [vmem:[%s0 + $0x318] sm:$0xff]
    %v136 = vld [vmem:[%s0 + $0x320] sm:$0xff]
    %v137 = vld [vmem:[%s0 + $0x328] sm:$0xff]
    %v138 = vld [vmem:[%s0 + $0x330] sm:$0xff]
    %v139 = vld [vmem:[%s0 + $0x338] sm:$0xff]
    %v140 = vld [vmem:[%s0 + $0x340] sm:$0xff]
    %v141 = vld [vmem:[%s0 + $0x348] sm:$0xff]
    %v142 = vld [vmem:[%s0 + $0x350] sm:$0xff]
    %v143 = vld [vmem:[%s0 + $0x358] sm:$0xff]
    %v144 = vld [vmem:[%s0 + $0x360] sm:$0xff]
    %v145 = vld [vmem:[%s0 + $0x368] sm:$0xff]
    %v146 = vld [vmem:[%s0 + $0x370] sm:$0xff]
    %v147 = vld [vmem:[%s0 + $0x378] sm:$0xff]
    %v148 = vld [vmem:[%s0 + $0x380] sm:$0xff]
    %v149 = vld [vmem:[%s0 + $0x388] sm:$0xff]
    %v150 = vld [vmem:[%s0 + $0x390] sm:$0xff]
    %v151 = vld [vmem:[%s0 + $0x398] sm:$0xff]
    %v152 = vld [vmem:[%s0 + $0x3a0] sm:$0xff]
    %v153 = vld [vmem:[%s0 + $0x3a8] sm:$0xff]
    %v154 = vld [vmem:[%s0 + $0x3b0] sm:$0xff]
    %v155 = vld [vmem:[%s0 + $0x3b8] sm:$0xff]
    %v156 = vld [vmem:[%s0 + $0x3c0] sm:$0xff]
    %v157 = vld [vmem:[%s0 + $0x3c8] sm:$0xff]
    %v158 = vld [vmem:[%s0 + $0x3d0] sm:$0xff]
    %v159 = vld [vmem:[%s0 + $0x3d8] sm:$0xff]
    %v160 = vld [vmem:[%s0 + $0x3e0] sm:$0xff]
    %v161 = vld [vmem:[%s0 + $0x3e8] sm:$0xff]
    %v162 = vld [vmem:[%s0 + $0x3f0] sm:$0xff]
    %v163 = vld [vmem:[%s0 + $0x3f8] sm:$0xff]
    %v164 = vld [vmem:[%s1] sm:$0xff]
    %v165 = vld [vmem:[%s1 + $0x8] sm:$0xff]
    %v166 = vld [vmem:[%s1 + $0x10] sm:$0xff]
    %v167 = vld [vmem:[%s1 + $0x18] sm:$0xff]
    %v168 = vld [vmem:[%s1 + $0x20] sm:$0xff]
    %v169 = vld [vmem:[%s1 + $0x28] sm:$0xff]
    %v170 = vld [vmem:[%s1 + $0x30] sm:$0xff]
    %v171 = vld [vmem:[%s1 + $0x38] sm:$0xff]
    %v172 = vld [vmem:[%s1 + $0x40] sm:$0xff]
    %v173 = vld [vmem:[%s1 + $0x48] sm:$0xff]
    %v174 = vld [vmem:[%s1 + $0x50] sm:$0xff]
    %v175 = vld [vmem:[%s1 + $0x58] sm:$0xff]
    %v176 = vld [vmem:[%s1 + $0x60] sm:$0xff]
    %v177 = vld [vmem:[%s1 + $0x68] sm:$0xff]
    %v178 = vld [vmem:[%s1 + $0x70] sm:$0xff]
    %v179 = vld [vmem:[%s1 + $0x78] sm:$0xff]
    %v180 = vld [vmem:[%s1 + $0x80] sm:$0xff]
    %v181 = vld [vmem:[%s1 + $0x88] sm:$0xff]
    %v182 = vld [vmem:[%s1 + $0x90] sm:$0xff]
    %v183 = vld [vmem:[%s1 + $0x98] sm:$0xff]
    %v184 = vld [vmem:[%s1 + $0xa0] sm:$0xff]
    %v185 = vld [vmem:[%s1 + $0xa8] sm:$0xff]
    %v186 = vld [vmem:[%s1 + $0xb0] sm:$0xff]
    %v187 = vld [vmem:[%s1 + $0xb8] sm:$0xff]
    %v188 = vld [vmem:[%s1 + $0xc0] sm:$0xff]
    %v189 = vld [vmem:[%s1 + $0xc8] sm:$0xff]
    %v190 = vld [vmem:[%s1 + $0xd0] sm:$0xff]
    %v191 = vld [vmem:[%s1 + $0xd8] sm:$0xff]
    %v192 = vld [vmem:[%s1 + $0xe0] sm:$0xff]
    %v193 = vld [vmem:[%s1 + $0xe8] sm:$0xff]
    %v194 = vld [vmem:[%s1 + $0xf0] sm:$0xff]
    %v195 = vld [vmem:[%s1 + $0xf8] sm:$0xff]
    %v196 = vld [vmem:[%s1 + $0x100] sm:$0xff]
    %v197 = vld [vmem:[%s1 + $0x108] sm:$0xff]
    %v198 = vld [vmem:[%s1 + $0x110] sm:$0xff]
    %v199 = vld [vmem:[%s1 + $0x118] sm:$0xff]
    %v200 = vld [vmem:[%s1 + $0x120] sm:$0xff]
    %v201 = vld [vmem:[%s1 + $0x128] sm:$0xff]
    %v202 = vld [vmem:[%s1 + $0x130] sm:$0xff]
    %v203 = vld [vmem:[%s1 + $0x138] sm:$0xff]
    %v204 = vld [vmem:[%s1 + $0x140] sm:$0xff]
    %v205 = vld [vmem:[%s1 + $0x148] sm:$0xff]
    %v206 = vld [vmem:[%s1 + $0x150] sm:$0xff]
    %v207 = vld [vmem:[%s1 + $0x158] sm:$0xff]
    %v208 = vld [vmem:[%s1 + $0x160] sm:$0xff]
    %v209 = vld [vmem:[%s1 + $0x168] sm:$0xff]
    %v210 = vld [vmem:[%s1 + $0x170] sm:$0xff]
    %v211 = vld [vmem:[%s1 + $0x178] sm:$0xff]
    %v212 = vld [vmem:[%s1 + $0x180] sm:$0xff]
    %v213 = vld [vmem:[%s1 + $0x188] sm:$0xff]
    %v214 = vld [vmem:[%s1 + $0x190] sm:$0xff]
    %v215 = vld [vmem:[%s1 + $0x198] sm:$0xff]
    %v216 = vld [vmem:[%s1 + $0x1a0] sm:$0xff]
    %v217 = vld [vmem:[%s1 + $0x1a8] sm:$0xff]
    %v218 = vld [vmem:[%s1 + $0x1b0] sm:$0xff]
    %v219 = vld [vmem:[%s1 + $0x1b8] sm:$0xff]
    %v220 = vld [vmem:[%s1 + $0x1c0] sm:$0xff]
    %v221 = vld [vmem:[%s1 + $0x1c8] sm:$0xff]
    %v222 = vld [vmem:[%s1 + $0x1d0] sm:$0xff]
    %v223 = vld [vmem:[%s1 + $0x1d8] sm:$0xff]
    %v224 = vld [vmem:[%s1 + $0x1e0] sm:$0xff]
    %v225 = vld [vmem:[%s1 + $0x1e8] sm:$0xff]
    %v226 = vld [vmem:[%s1 + $0x1f0] sm:$0xff]
    %v227 = vld [vmem:[%s1 + $0x1f8] sm:$0xff]
    %v228 = vld [vmem:[%s1 + $0x200] sm:$0xff]
    %v229 = vld [vmem:[%s1 + $0x208] sm:$0xff]
    %v230 = vld [vmem:[%s1 + $0x210] sm:$0xff]
    %v231 = vld [vmem:[%s1 + $0x218] sm:$0xff]
    %v232 = vld [vmem:[%s1 + $0x220] sm:$0xff]
    %v233 = vld [vmem:[%s1 + $0x228] sm:$0xff]
    %v234 = vld [vmem:[%s1 + $0x230] sm:$0xff]
    %v235 = vld [vmem:[%s1 + $0x238] sm:$0xff]
    %v236 = vld [vmem:[%s1 + $0x240] sm:$0xff]
    %v237 = vld [vmem:[%s1 + $0x248] sm:$0xff]
    %v238 = vld [vmem:[%s1 + $0x250] sm:$0xff]
    %v239 = vld [vmem:[%s1 + $0x258] sm:$0xff]
    %v240 = vld [vmem:[%s1 + $0x260] sm:$0xff]
    %v241 = vld [vmem:[%s1 + $0x268] sm:$0xff]
    %v242 = vld [vmem:[%s1 + $0x270] sm:$0xff]
    %v243 = vld [vmem:[%s1 + $0x278] sm:$0xff]
    %v244 = vld [vmem:[%s1 + $0x280] sm:$0xff]
    %v245 = vld [vmem:[%s1 + $0x288] sm:$0xff]
    %v246 = vld [vmem:[%s1 + $0x290] sm:$0xff]
    %v247 = vld [vmem:[%s1 + $0x298] sm:$0xff]
    %v248 = vld [vmem:[%s1 + $0x2a0] sm:$0xff]
    %v249 = vld [vmem:[%s1 + $0x2a8] sm:$0xff]
    %v250 = vld [vmem:[%s1 + $0x2b0] sm:$0xff]
    %v251 = vld [vmem:[%s1 + $0x2b8] sm:$0xff]
    %v252 = vld [vmem:[%s1 + $0x2c0] sm:$0xff]
    %v253 = vld [vmem:[%s1 + $0x2c8] sm:$0xff]
    %v254 = vld [vmem:[%s1 + $0x2d0] sm:$0xff]
    %v255 = vld [vmem:[%s1 + $0x2d8] sm:$0xff]
    %v256 = vld [vmem:[%s1 + $0x2e0] sm:$0xff]
    %v257 = vld [vmem:[%s1 + $0x2e8] sm:$0xff]
    %v258 = vld [vmem:[%s1 + $0x2f0] sm:$0xff]
    %v259 = vld [vmem:[%s1 + $0x2f8] sm:$0xff]
    %v260 = vld [vmem:[%s1 + $0x300] sm:$0xff]
    %v261 = vld [vmem:[%s1 + $0x308] sm:$0xff]
    %v262 = vld [vmem:[%s1 + $0x310] sm:$0xff]
    %v263 = vld [vmem:[%s1 + $0x318] sm:$0xff]
    %v264 = vld [vmem:[%s1 + $0x320] sm:$0xff]
    %v265 = vld [vmem:[%s1 + $0x328] sm:$0xff]
    %v266 = vld [vmem:[%s1 + $0x330] sm:$0xff]
    %v267 = vld [vmem:[%s1 + $0x338] sm:$0xff]
    %v268 = vld [vmem:[%s1 + $0x340] sm:$0xff]
    %v269 = vld [vmem:[%s1 + $0x348] sm:$0xff]
    %v270 = vld [vmem:[%s1 + $0x350] sm:$0xff]
    %v271 = vld [vmem:[%s1 + $0x358] sm:$0xff]
    %v272 = vld [vmem:[%s1 + $0x360] sm:$0xff]
    %v273 = vld [vmem:[%s1 + $0x368] sm:$0xff]
    %v274 = vld [vmem:[%s1 + $0x370] sm:$0xff]
    %v275 = vld [vmem:[%s1 + $0x378] sm:$0xff]
    %v276 = vld [vmem:[%s1 + $0x380] sm:$0xff]
    %v277 = vld [vmem:[%s1 + $0x388] sm:$0xff]
    %v278 = vld [vmem:[%s1 + $0x390] sm:$0xff]
    %v279 = vld [vmem:[%s1 + $0x398] sm:$0xff]
    %v280 = vld [vmem:[%s1 + $0x3a0] sm:$0xff]
    %v281 = vld [vmem:[%s1 + $0x3a8] sm:$0xff]
    %v282 = vld [vmem:[%s1 + $0x3b0] sm:$0xff]
    %v283 = vld [vmem:[%s1 + $0x3b8] sm:$0xff]
    %v284 = vld [vmem:[%s1 + $0x3c0] sm:$0xff]
    %v285 = vld [vmem:[%s1 + $0x3c8] sm:$0xff]
    %v286 = vld [vmem:[%s1 + $0x3d0] sm:$0xff]
    %v287 = vld [vmem:[%s1 + $0x3d8] sm:$0xff]
    %v288 = vld [vmem:[%s1 + $0x3e0] sm:$0xff]
    %v289 = vld [vmem:[%s1 + $0x3e8] sm:$0xff]
    %v290 = vld [vmem:[%s1 + $0x3f0] sm:$0xff]
    %v291 = vld [vmem:[%s1 + $0x3f8] sm:$0xff]
    %v292 = vld [vmem:[%s1 + $0x400] sm:$0xff]
    %v293 = vld [vmem:[%s1 + $0x408] sm:$0xff]
    %v294 = vld [vmem:[%s1 + $0x410] sm:$0xff]
    %v295 = vld [vmem:[%s1 + $0x418] sm:$0xff]
    %v296 = vld [vmem:[%s1 + $0x420] sm:$0xff]
    %v297 = vld [vmem:[%s1 + $0x428] sm:$0xff]
    %v298 = vld [vmem:[%s1 + $0x430] sm:$0xff]
    %v299 = vld [vmem:[%s1 + $0x438] sm:$0xff]
    %v300 = vld [vmem:[%s1 + $0x440] sm:$0xff]
    %v301 = vld [vmem:[%s1 + $0x448] sm:$0xff]
    %v302 = vld [vmem:[%s1 + $0x450] sm:$0xff]
    %v303 = vld [vmem:[%s1 + $0x458] sm:$0xff]
    %v304 = vld [vmem:[%s1 + $0x460] sm:$0xff]
    %v305 = vld [vmem:[%s1 + $0x468] sm:$0xff]
    %v306 = vld [vmem:[%s1 + $0x470] sm:$0xff]
    %v307 = vld [vmem:[%s1 + $0x478] sm:$0xff]
    %v308 = vld [vmem:[%s1 + $0x480] sm:$0xff]
    %v309 = vld [vmem:[%s1 + $0x488] sm:$0xff]
    %v310 = vld [vmem:[%s1 + $0x490] sm:$0xff]
    %v311 = vld [vmem:[%s1 + $0x498] sm:$0xff]
    %v312 = vld [vmem:[%s1 + $0x4a0] sm:$0xff]
    %v313 = vld [vmem:[%s1 + $0x4a8] sm:$0xff]
    %v314 = vld [vmem:[%s1 + $0x4b0] sm:$0xff]
    %v315 = vld [vmem:[%s1 + $0x4b8] sm:$0xff]
    %v316 = vld [vmem:[%s1 + $0x4c0] sm:$0xff]
    %v317 = vld [vmem:[%s1 + $0x4c8] sm:$0xff]
    %v318 = vld [vmem:[%s1 + $0x4d0] sm:$0xff]
    %v319 = vld [vmem:[%s1 + $0x4d8] sm:$0xff]
    %v320 = vld [vmem:[%s1 + $0x4e0] sm:$0xff]
    %v321 = vld [vmem:[%s1 + $0x4e8] sm:$0xff]
    %v322 = vld [vmem:[%s1 + $0x4f0] sm:$0xff]
    %v323 = vld [vmem:[%s1 + $0x4f8] sm:$0xff]
    %v324 = vld [vmem:[%s1 + $0x500] sm:$0xff]
    %v325 = vld [vmem:[%s1 + $0x508] sm:$0xff]
    %v326 = vld [vmem:[%s1 + $0x510] sm:$0xff]
    %v327 = vld [vmem:[%s1 + $0x518] sm:$0xff]
    %v328 = vld [vmem:[%s1 + $0x520] sm:$0xff]
    %v329 = vld [vmem:[%s1 + $0x528] sm:$0xff]
    %v330 = vld [vmem:[%s1 + $0x530] sm:$0xff]
    %v331 = vld [vmem:[%s1 + $0x538] sm:$0xff]
    %v332 = vld [vmem:[%s1 + $0x540] sm:$0xff]
    %v333 = vld [vmem:[%s1 + $0x548] sm:$0xff]
    %v334 = vld [vmem:[%s1 + $0x550] sm:$0xff]
    %v335 = vld [vmem:[%s1 + $0x558] sm:$0xff]
    %v336 = vld [vmem:[%s1 + $0x560] sm:$0xff]
    %v337 = vld [vmem:[%s1 + $0x568] sm:$0xff]
    %v338 = vld [vmem:[%s1 + $0x570] sm:$0xff]
    %v339 = vld [vmem:[%s1 + $0x578] sm:$0xff]
    %v340 = vld [vmem:[%s1 + $0x580] sm:$0xff]
    %v341 = vld [vmem:[%s1 + $0x588] sm:$0xff]
    %v342 = vld [vmem:[%s1 + $0x590] sm:$0xff]
    %v343 = vld [vmem:[%s1 + $0x598] sm:$0xff]
    %v344 = vld [vmem:[%s1 + $0x5a0] sm:$0xff]
    %v345 = vld [vmem:[%s1 + $0x5a8] sm:$0xff]
    %v346 = vld [vmem:[%s1 + $0x5b0] sm:$0xff]
    %v347 = vld [vmem:[%s1 + $0x5b8] sm:$0xff]
    %v348 = vld [vmem:[%s1 + $0x5c0] sm:$0xff]
    %v349 = vld [vmem:[%s1 + $0x5c8] sm:$0xff]
    %v350 = vld [vmem:[%s1 + $0x5d0] sm:$0xff]
    %v351 = vld [vmem:[%s1 + $0x5d8] sm:$0xff]
    %v352 = vld [vmem:[%s1 + $0x5e0] sm:$0xff]
    %v353 = vld [vmem:[%s1 + $0x5e8] sm:$0xff]
    %v354 = vld [vmem:[%s1 + $0x5f0] sm:$0xff]
    %v355 = vld [vmem:[%s1 + $0x5f8] sm:$0xff]
    %v356 = vld [vmem:[%s1 + $0x600] sm:$0xff]
    %v357 = vld [vmem:[%s1 + $0x608] sm:$0xff]
    %v358 = vld [vmem:[%s1 + $0x610] sm:$0xff]
    %v359 = vld [vmem:[%s1 + $0x618] sm:$0xff]
    %v360 = vld [vmem:[%s1 + $0x620] sm:$0xff]
    %v361 = vld [vmem:[%s1 + $0x628] sm:$0xff]
    %v362 = vld [vmem:[%s1 + $0x630] sm:$0xff]
    %v363 = vld [vmem:[%s1 + $0x638] sm:$0xff]
    %v364 = vld [vmem:[%s1 + $0x640] sm:$0xff]
    %v365 = vld [vmem:[%s1 + $0x648] sm:$0xff]
    %v366 = vld [vmem:[%s1 + $0x650] sm:$0xff]
    %v367 = vld [vmem:[%s1 + $0x658] sm:$0xff]
    %v368 = vld [vmem:[%s1 + $0x660] sm:$0xff]
    %v369 = vld [vmem:[%s1 + $0x668] sm:$0xff]
    %v370 = vld [vmem:[%s1 + $0x670] sm:$0xff]
    %v371 = vld [vmem:[%s1 + $0x678] sm:$0xff]
    %v372 = vld [vmem:[%s1 + $0x680] sm:$0xff]
    %v373 = vld [vmem:[%s1 + $0x688] sm:$0xff]
    %v374 = vld [vmem:[%s1 + $0x690] sm:$0xff]
    %v375 = vld [vmem:[%s1 + $0x698] sm:$0xff]
    %v376 = vld [vmem:[%s1 + $0x6a0] sm:$0xff]
    %v377 = vld [vmem:[%s1 + $0x6a8] sm:$0xff]
    %v378 = vld [vmem:[%s1 + $0x6b0] sm:$0xff]
    %v379 = vld [vmem:[%s1 + $0x6b8] sm:$0xff]
    %v380 = vld [vmem:[%s1 + $0x6c0] sm:$0xff]
    %v381 = vld [vmem:[%s1 + $0x6c8] sm:$0xff]
    %v382 = vld [vmem:[%s1 + $0x6d0] sm:$0xff]
    %v383 = vld [vmem:[%s1 + $0x6d8] sm:$0xff]
    %v384 = vld [vmem:[%s1 + $0x6e0] sm:$0xff]
    %v385 = vld [vmem:[%s1 + $0x6e8] sm:$0xff]
    %v386 = vld [vmem:[%s1 + $0x6f0] sm:$0xff]
    %v387 = vld [vmem:[%s1 + $0x6f8] sm:$0xff]
    %v388 = vld [vmem:[%s1 + $0x700] sm:$0xff]
    %v389 = vld [vmem:[%s1 + $0x708] sm:$0xff]
    %v390 = vld [vmem:[%s1 + $0x710] sm:$0xff]
    %v391 = vld [vmem:[%s1 + $0x718] sm:$0xff]
    %v392 = vld [vmem:[%s1 + $0x720] sm:$0xff]
    %v393 = vld [vmem:[%s1 + $0x728] sm:$0xff]
    %v394 = vld [vmem:[%s1 + $0x730] sm:$0xff]
    %v395 = vld [vmem:[%s1 + $0x738] sm:$0xff]
    %v396 = vld [vmem:[%s1 + $0x740] sm:$0xff]
    %v397 = vld [vmem:[%s1 + $0x748] sm:$0xff]
    %v398 = vld [vmem:[%s1 + $0x750] sm:$0xff]
    %v399 = vld [vmem:[%s1 + $0x758] sm:$0xff]
    %v400 = vld [vmem:[%s1 + $0x760] sm:$0xff]
    %v401 = vld [vmem:[%s1 + $0x768] sm:$0xff]
    %v402 = vld [vmem:[%s1 + $0x770] sm:$0x11]
    %v403 = vld [vmem:[%s1 + $0x778] sm:$0x11]
    %v404 = vld [vmem:[%s2] sm:$0xf]
    %v406 = vlaneseq
    %v407 = vshrl.u32 %v406, 7
    %v408 = vsub.s32 0, %v407
    %v409 = vrot.slane %v404, %v408
    %v410 = vlaneseq
    %v411 = vshrl.u32 %v410, 7
    %v412 = vsub.s32 1, %v411
    %v413 = vrot.slane %v404, %v412
    %v414 = vlaneseq
    %v415 = vshrl.u32 %v414, 7
    %v416 = vsub.s32 2, %v415
    %v417 = vrot.slane %v404, %v416
    %v418 = vlaneseq
    %v419 = vshrl.u32 %v418, 7
    %v420 = vsub.s32 3, %v419
    %v421 = vrot.slane %v404, %v420
    %v554 = vunpack.c.l.b16 %v36
    %v555 = vunpack.c.h.b16 %v36
    %v556 = vunpack.c.l.b16 %v37
    %v557 = vunpack.c.h.b16 %v37
    %v558 = vunpack.c.l.b16 %v38
    %v559 = vunpack.c.h.b16 %v38
    %v560 = vunpack.c.l.b16 %v39
    %v561 = vunpack.c.h.b16 %v39
    %v562 = vunpack.c.l.b16 %v40
    %v563 = vunpack.c.h.b16 %v40
    %v564 = vunpack.c.l.b16 %v41
    %v565 = vunpack.c.h.b16 %v41
    %v566 = vunpack.c.l.b16 %v42
    %v567 = vunpack.c.h.b16 %v42
    %v568 = vunpack.c.l.b16 %v43
    %v569 = vunpack.c.h.b16 %v43
    %v570 = vunpack.c.l.b16 %v44
    %v571 = vunpack.c.h.b16 %v44
    %v572 = vunpack.c.l.b16 %v45
    %v573 = vunpack.c.h.b16 %v45
    %v574 = vunpack.c.l.b16 %v46
    %v575 = vunpack.c.h.b16 %v46
    %v576 = vunpack.c.l.b16 %v47
    %v577 = vunpack.c.h.b16 %v47
    %v578 = vunpack.c.l.b16 %v48
    %v579 = vunpack.c.h.b16 %v48
    %v580 = vunpack.c.l.b16 %v49
    %v581 = vunpack.c.h.b16 %v49
    %v582 = vunpack.c.l.b16 %v50
    %v583 = vunpack.c.h.b16 %v50
    %v584 = vunpack.c.l.b16 %v51
    %v585 = vunpack.c.h.b16 %v51
    %v586 = vunpack.c.l.b16 %v52
    %v587 = vunpack.c.h.b16 %v52
    %v588 = vunpack.c.l.b16 %v53
    %v589 = vunpack.c.h.b16 %v53
    %v590 = vunpack.c.l.b16 %v54
    %v591 = vunpack.c.h.b16 %v54
    %v592 = vunpack.c.l.b16 %v55
    %v593 = vunpack.c.h.b16 %v55
    %v594 = vunpack.c.l.b16 %v56
    %v595 = vunpack.c.h.b16 %v56
    %v596 = vunpack.c.l.b16 %v57
    %v597 = vunpack.c.h.b16 %v57
    %v598 = vunpack.c.l.b16 %v58
    %v599 = vunpack.c.h.b16 %v58
    %v600 = vunpack.c.l.b16 %v59
    %v601 = vunpack.c.h.b16 %v59
    %v602 = vunpack.c.l.b16 %v60
    %v603 = vunpack.c.h.b16 %v60
    %v604 = vunpack.c.l.b16 %v61
    %v605 = vunpack.c.h.b16 %v61
    %v606 = vunpack.c.l.b16 %v62
    %v607 = vunpack.c.h.b16 %v62
    %v608 = vunpack.c.l.b16 %v63
    %v609 = vunpack.c.h.b16 %v63
    %v610 = vunpack.c.l.b16 %v64
    %v611 = vunpack.c.h.b16 %v64
    %v612 = vunpack.c.l.b16 %v65
    %v613 = vunpack.c.h.b16 %v65
    %v614 = vunpack.c.l.b16 %v66
    %v615 = vunpack.c.h.b16 %v66
    %v616 = vunpack.c.l.b16 %v67
    %v617 = vunpack.c.h.b16 %v67
    %v618 = vunpack.c.l.b16 %v68
    %v619 = vunpack.c.h.b16 %v68
    %v620 = vunpack.c.l.b16 %v69
    %v621 = vunpack.c.h.b16 %v69
    %v622 = vunpack.c.l.b16 %v70
    %v623 = vunpack.c.h.b16 %v70
    %v624 = vunpack.c.l.b16 %v71
    %v625 = vunpack.c.h.b16 %v71
    %v626 = vunpack.c.l.b16 %v72
    %v627 = vunpack.c.h.b16 %v72
    %v628 = vunpack.c.l.b16 %v73
    %v629 = vunpack.c.h.b16 %v73
    %v630 = vunpack.c.l.b16 %v74
    %v631 = vunpack.c.h.b16 %v74
    %v632 = vunpack.c.l.b16 %v75
    %v633 = vunpack.c.h.b16 %v75
    %v634 = vunpack.c.l.b16 %v76
    %v635 = vunpack.c.h.b16 %v76
    %v636 = vunpack.c.l.b16 %v77
    %v637 = vunpack.c.h.b16 %v77
    %v638 = vunpack.c.l.b16 %v78
    %v639 = vunpack.c.h.b16 %v78
    %v640 = vunpack.c.l.b16 %v79
    %v641 = vunpack.c.h.b16 %v79
    %v642 = vunpack.c.l.b16 %v80
    %v643 = vunpack.c.h.b16 %v80
    %v644 = vunpack.c.l.b16 %v81
    %v645 = vunpack.c.h.b16 %v81
    %v646 = vunpack.c.l.b16 %v82
    %v647 = vunpack.c.h.b16 %v82
    %v648 = vunpack.c.l.b16 %v83
    %v649 = vunpack.c.h.b16 %v83
    %v650 = vunpack.c.l.b16 %v84
    %v651 = vunpack.c.h.b16 %v84
    %v652 = vunpack.c.l.b16 %v85
    %v653 = vunpack.c.h.b16 %v85
    %v654 = vunpack.c.l.b16 %v86
    %v655 = vunpack.c.h.b16 %v86
    %v656 = vunpack.c.l.b16 %v87
    %v657 = vunpack.c.h.b16 %v87
    %v658 = vunpack.c.l.b16 %v88
    %v659 = vunpack.c.h.b16 %v88
    %v660 = vunpack.c.l.b16 %v89
    %v661 = vunpack.c.h.b16 %v89
    %v662 = vunpack.c.l.b16 %v90
    %v663 = vunpack.c.h.b16 %v90
    %v664 = vunpack.c.l.b16 %v91
    %v665 = vunpack.c.h.b16 %v91
    %v666 = vunpack.c.l.b16 %v92
    %v667 = vunpack.c.h.b16 %v92
    %v668 = vunpack.c.l.b16 %v93
    %v669 = vunpack.c.h.b16 %v93
    %v670 = vunpack.c.l.b16 %v94
    %v671 = vunpack.c.h.b16 %v94
    %v672 = vunpack.c.l.b16 %v95
    %v673 = vunpack.c.h.b16 %v95
    %v674 = vunpack.c.l.b16 %v96
    %v675 = vunpack.c.h.b16 %v96
    %v676 = vunpack.c.l.b16 %v97
    %v677 = vunpack.c.h.b16 %v97
    %v678 = vunpack.c.l.b16 %v98
    %v679 = vunpack.c.h.b16 %v98
    %v680 = vunpack.c.l.b16 %v99
    %v681 = vunpack.c.h.b16 %v99
    %v682 = vunpack.c.l.b16 %v100
    %v683 = vunpack.c.h.b16 %v100
    %v684 = vunpack.c.l.b16 %v101
    %v685 = vunpack.c.h.b16 %v101
    %v686 = vunpack.c.l.b16 %v102
    %v687 = vunpack.c.h.b16 %v102
    %v688 = vunpack.c.l.b16 %v103
    %v689 = vunpack.c.h.b16 %v103
    %v690 = vunpack.c.l.b16 %v104
    %v691 = vunpack.c.h.b16 %v104
    %v692 = vunpack.c.l.b16 %v105
    %v693 = vunpack.c.h.b16 %v105
    %v694 = vunpack.c.l.b16 %v106
    %v695 = vunpack.c.h.b16 %v106
    %v696 = vunpack.c.l.b16 %v107
    %v697 = vunpack.c.h.b16 %v107
    %v698 = vunpack.c.l.b16 %v108
    %v699 = vunpack.c.h.b16 %v108
    %v700 = vunpack.c.l.b16 %v109
    %v701 = vunpack.c.h.b16 %v109
    %v702 = vunpack.c.l.b16 %v110
    %v703 = vunpack.c.h.b16 %v110
    %v704 = vunpack.c.l.b16 %v111
    %v705 = vunpack.c.h.b16 %v111
    %v706 = vunpack.c.l.b16 %v112
    %v707 = vunpack.c.h.b16 %v112
    %v708 = vunpack.c.l.b16 %v113
    %v709 = vunpack.c.h.b16 %v113
    %v710 = vunpack.c.l.b16 %v114
    %v711 = vunpack.c.h.b16 %v114
    %v712 = vunpack.c.l.b16 %v115
    %v713 = vunpack.c.h.b16 %v115
    %v714 = vunpack.c.l.b16 %v116
    %v715 = vunpack.c.h.b16 %v116
    %v716 = vunpack.c.l.b16 %v117
    %v717 = vunpack.c.h.b16 %v117
    %v718 = vunpack.c.l.b16 %v118
    %v719 = vunpack.c.h.b16 %v118
    %v720 = vunpack.c.l.b16 %v119
    %v721 = vunpack.c.h.b16 %v119
    %v722 = vunpack.c.l.b16 %v120
    %v723 = vunpack.c.h.b16 %v120
    %v724 = vunpack.c.l.b16 %v121
    %v725 = vunpack.c.h.b16 %v121
    %v726 = vunpack.c.l.b16 %v122
    %v727 = vunpack.c.h.b16 %v122
    %v728 = vunpack.c.l.b16 %v123
    %v729 = vunpack.c.h.b16 %v123
    %v730 = vunpack.c.l.b16 %v124
    %v731 = vunpack.c.h.b16 %v124
    %v732 = vunpack.c.l.b16 %v125
    %v733 = vunpack.c.h.b16 %v125
    %v734 = vunpack.c.l.b16 %v126
    %v735 = vunpack.c.h.b16 %v126
    %v736 = vunpack.c.l.b16 %v127
    %v737 = vunpack.c.h.b16 %v127
    %v738 = vunpack.c.l.b16 %v128
    %v739 = vunpack.c.h.b16 %v128
    %v740 = vunpack.c.l.b16 %v129
    %v741 = vunpack.c.h.b16 %v129
    %v742 = vunpack.c.l.b16 %v130
    %v743 = vunpack.c.h.b16 %v130
    %v744 = vunpack.c.l.b16 %v131
    %v745 = vunpack.c.h.b16 %v131
    %v746 = vunpack.c.l.b16 %v132
    %v747 = vunpack.c.h.b16 %v132
    %v748 = vunpack.c.l.b16 %v133
    %v749 = vunpack.c.h.b16 %v133
    %v750 = vunpack.c.l.b16 %v134
    %v751 = vunpack.c.h.b16 %v134
    %v752 = vunpack.c.l.b16 %v135
    %v753 = vunpack.c.h.b16 %v135
    %v754 = vunpack.c.l.b16 %v136
    %v755 = vunpack.c.h.b16 %v136
    %v756 = vunpack.c.l.b16 %v137
    %v757 = vunpack.c.h.b16 %v137
    %v758 = vunpack.c.l.b16 %v138
    %v759 = vunpack.c.h.b16 %v138
    %v760 = vunpack.c.l.b16 %v139
    %v761 = vunpack.c.h.b16 %v139
    %v762 = vunpack.c.l.b16 %v140
    %v763 = vunpack.c.h.b16 %v140
    %v764 = vunpack.c.l.b16 %v141
    %v765 = vunpack.c.h.b16 %v141
    %v766 = vunpack.c.l.b16 %v142
    %v767 = vunpack.c.h.b16 %v142
    %v768 = vunpack.c.l.b16 %v143
    %v769 = vunpack.c.h.b16 %v143
    %v770 = vunpack.c.l.b16 %v144
    %v771 = vunpack.c.h.b16 %v144
    %v772 = vunpack.c.l.b16 %v145
    %v773 = vunpack.c.h.b16 %v145
    %v774 = vunpack.c.l.b16 %v146
    %v775 = vunpack.c.h.b16 %v146
    %v776 = vunpack.c.l.b16 %v147
    %v777 = vunpack.c.h.b16 %v147
    %v778 = vunpack.c.l.b16 %v148
    %v779 = vunpack.c.h.b16 %v148
    %v780 = vunpack.c.l.b16 %v149
    %v781 = vunpack.c.h.b16 %v149
    %v782 = vunpack.c.l.b16 %v150
    %v783 = vunpack.c.h.b16 %v150
    %v784 = vunpack.c.l.b16 %v151
    %v785 = vunpack.c.h.b16 %v151
    %v786 = vunpack.c.l.b16 %v152
    %v787 = vunpack.c.h.b16 %v152
    %v788 = vunpack.c.l.b16 %v153
    %v789 = vunpack.c.h.b16 %v153
    %v790 = vunpack.c.l.b16 %v154
    %v791 = vunpack.c.h.b16 %v154
    %v792 = vunpack.c.l.b16 %v155
    %v793 = vunpack.c.h.b16 %v155
    %v794 = vunpack.c.l.b16 %v156
    %v795 = vunpack.c.h.b16 %v156
    %v796 = vunpack.c.l.b16 %v157
    %v797 = vunpack.c.h.b16 %v157
    %v798 = vunpack.c.l.b16 %v158
    %v799 = vunpack.c.h.b16 %v158
    %v800 = vunpack.c.l.b16 %v159
    %v801 = vunpack.c.h.b16 %v159
    %v802 = vunpack.c.l.b16 %v160
    %v803 = vunpack.c.h.b16 %v160
    %v804 = vunpack.c.l.b16 %v161
    %v805 = vunpack.c.h.b16 %v161
    %v806 = vunpack.c.l.b16 %v162
    %v807 = vunpack.c.h.b16 %v162
    %v808 = vunpack.c.l.b16 %v163
    %v809 = vunpack.c.h.b16 %v163
    %v810 = vpack.c.b16 %v562, %v554
    %v811 = vpack.c.b16 %v563, %v555
    %v812 = vpack.c.b16 %v564, %v556
    %v813 = vpack.c.b16 %v565, %v557
    %v814 = vpack.c.b16 %v566, %v558
    %v815 = vpack.c.b16 %v567, %v559
    %v816 = vpack.c.b16 %v568, %v560
    %v817 = vpack.c.b16 %v569, %v561
    %v818 = vpack.c.b16 %v578, %v570
    %v819 = vpack.c.b16 %v579, %v571
    %v820 = vpack.c.b16 %v580, %v572
    %v821 = vpack.c.b16 %v581, %v573
    %v822 = vpack.c.b16 %v582, %v574
    %v823 = vpack.c.b16 %v583, %v575
    %v824 = vpack.c.b16 %v584, %v576
    %v825 = vpack.c.b16 %v585, %v577
    %v826 = vpack.c.b16 %v594, %v586
    %v827 = vpack.c.b16 %v595, %v587
    %v828 = vpack.c.b16 %v596, %v588
    %v829 = vpack.c.b16 %v597, %v589
    %v830 = vpack.c.b16 %v598, %v590
    %v831 = vpack.c.b16 %v599, %v591
    %v832 = vpack.c.b16 %v600, %v592
    %v833 = vpack.c.b16 %v601, %v593
    %v834 = vpack.c.b16 %v610, %v602
    %v835 = vpack.c.b16 %v611, %v603
    %v836 = vpack.c.b16 %v612, %v604
    %v837 = vpack.c.b16 %v613, %v605
    %v838 = vpack.c.b16 %v614, %v606
    %v839 = vpack.c.b16 %v615, %v607
    %v840 = vpack.c.b16 %v616, %v608
    %v841 = vpack.c.b16 %v617, %v609
    %v842 = vpack.c.b16 %v626, %v618
    %v843 = vpack.c.b16 %v627, %v619
    %v844 = vpack.c.b16 %v628, %v620
    %v845 = vpack.c.b16 %v629, %v621
    %v846 = vpack.c.b16 %v630, %v622
    %v847 = vpack.c.b16 %v631, %v623
    %v848 = vpack.c.b16 %v632, %v624
    %v849 = vpack.c.b16 %v633, %v625
    %v850 = vpack.c.b16 %v642, %v634
    %v851 = vpack.c.b16 %v643, %v635
    %v852 = vpack.c.b16 %v644, %v636
    %v853 = vpack.c.b16 %v645, %v637
    %v854 = vpack.c.b16 %v646, %v638
    %v855 = vpack.c.b16 %v647, %v639
    %v856 = vpack.c.b16 %v648, %v640
    %v857 = vpack.c.b16 %v649, %v641
    %v858 = vpack.c.b16 %v658, %v650
    %v859 = vpack.c.b16 %v659, %v651
    %v860 = vpack.c.b16 %v660, %v652
    %v861 = vpack.c.b16 %v661, %v653
    %v862 = vpack.c.b16 %v662, %v654
    %v863 = vpack.c.b16 %v663, %v655
    %v864 = vpack.c.b16 %v664, %v656
    %v865 = vpack.c.b16 %v665, %v657
    %v866 = vpack.c.b16 %v674, %v666
    %v867 = vpack.c.b16 %v675, %v667
    %v868 = vpack.c.b16 %v676, %v668
    %v869 = vpack.c.b16 %v677, %v669
    %v870 = vpack.c.b16 %v678, %v670
    %v871 = vpack.c.b16 %v679, %v671
    %v872 = vpack.c.b16 %v680, %v672
    %v873 = vpack.c.b16 %v681, %v673
    %v874 = vpack.c.b16 %v690, %v682
    %v875 = vpack.c.b16 %v691, %v683
    %v876 = vpack.c.b16 %v692, %v684
    %v877 = vpack.c.b16 %v693, %v685
    %v878 = vpack.c.b16 %v694, %v686
    %v879 = vpack.c.b16 %v695, %v687
    %v880 = vpack.c.b16 %v696, %v688
    %v881 = vpack.c.b16 %v697, %v689
    %v882 = vpack.c.b16 %v706, %v698
    %v883 = vpack.c.b16 %v707, %v699
    %v884 = vpack.c.b16 %v708, %v700
    %v885 = vpack.c.b16 %v709, %v701
    %v886 = vpack.c.b16 %v710, %v702
    %v887 = vpack.c.b16 %v711, %v703
    %v888 = vpack.c.b16 %v712, %v704
    %v889 = vpack.c.b16 %v713, %v705
    %v890 = vpack.c.b16 %v722, %v714
    %v891 = vpack.c.b16 %v723, %v715
    %v892 = vpack.c.b16 %v724, %v716
    %v893 = vpack.c.b16 %v725, %v717
    %v894 = vpack.c.b16 %v726, %v718
    %v895 = vpack.c.b16 %v727, %v719
    %v896 = vpack.c.b16 %v728, %v720
    %v897 = vpack.c.b16 %v729, %v721
    %v898 = vpack.c.b16 %v738, %v730
    %v899 = vpack.c.b16 %v739, %v731
    %v900 = vpack.c.b16 %v740, %v732
    %v901 = vpack.c.b16 %v741, %v733
    %v902 = vpack.c.b16 %v742, %v734
    %v903 = vpack.c.b16 %v743, %v735
    %v904 = vpack.c.b16 %v744, %v736
    %v905 = vpack.c.b16 %v745, %v737
    %v906 = vpack.c.b16 %v754, %v746
    %v907 = vpack.c.b16 %v755, %v747
    %v908 = vpack.c.b16 %v756, %v748
    %v909 = vpack.c.b16 %v757, %v749
    %v910 = vpack.c.b16 %v758, %v750
    %v911 = vpack.c.b16 %v759, %v751
    %v912 = vpack.c.b16 %v760, %v752
    %v913 = vpack.c.b16 %v761, %v753
    %v914 = vpack.c.b16 %v770, %v762
    %v915 = vpack.c.b16 %v771, %v763
    %v916 = vpack.c.b16 %v772, %v764
    %v917 = vpack.c.b16 %v773, %v765
    %v918 = vpack.c.b16 %v774, %v766
    %v919 = vpack.c.b16 %v775, %v767
    %v920 = vpack.c.b16 %v776, %v768
    %v921 = vpack.c.b16 %v777, %v769
    %v922 = vpack.c.b16 %v786, %v778
    %v923 = vpack.c.b16 %v787, %v779
    %v924 = vpack.c.b16 %v788, %v780
    %v925 = vpack.c.b16 %v789, %v781
    %v926 = vpack.c.b16 %v790, %v782
    %v927 = vpack.c.b16 %v791, %v783
    %v928 = vpack.c.b16 %v792, %v784
    %v929 = vpack.c.b16 %v793, %v785
    %v930 = vpack.c.b16 %v802, %v794
    %v931 = vpack.c.b16 %v803, %v795
    %v932 = vpack.c.b16 %v804, %v796
    %v933 = vpack.c.b16 %v805, %v797
    %v934 = vpack.c.b16 %v806, %v798
    %v935 = vpack.c.b16 %v807, %v799
    %v936 = vpack.c.b16 %v808, %v800
    %v937 = vpack.c.b16 %v809, %v801
    %v1290 = vunpack.c.l.b16 %v164
    %v1291 = vunpack.c.h.b16 %v164
    %v1292 = vunpack.c.l.b16 %v165
    %v1293 = vunpack.c.h.b16 %v165
    %v1294 = vunpack.c.l.b16 %v166
    %v1295 = vunpack.c.h.b16 %v166
    %v1296 = vunpack.c.l.b16 %v167
    %v1297 = vunpack.c.h.b16 %v167
    %v1298 = vunpack.c.l.b16 %v168
    %v1299 = vunpack.c.h.b16 %v168
    %v1300 = vunpack.c.l.b16 %v169
    %v1301 = vunpack.c.h.b16 %v169
    %v1302 = vunpack.c.l.b16 %v170
    %v1303 = vunpack.c.h.b16 %v170
    %v1304 = vunpack.c.l.b16 %v171
    %v1305 = vunpack.c.h.b16 %v171
    %v1306 = vunpack.c.l.b16 %v172
    %v1307 = vunpack.c.h.b16 %v172
    %v1308 = vunpack.c.l.b16 %v173
    %v1309 = vunpack.c.h.b16 %v173
    %v1310 = vunpack.c.l.b16 %v174
    %v1311 = vunpack.c.h.b16 %v174
    %v1312 = vunpack.c.l.b16 %v175
    %v1313 = vunpack.c.h.b16 %v175
    %v1314 = vunpack.c.l.b16 %v176
    %v1315 = vunpack.c.h.b16 %v176
    %v1316 = vunpack.c.l.b16 %v177
    %v1317 = vunpack.c.h.b16 %v177
    %v1318 = vunpack.c.l.b16 %v178
    %v1319 = vunpack.c.h.b16 %v178
    %v1320 = vunpack.c.l.b16 %v179
    %v1321 = vunpack.c.h.b16 %v179
    %v1322 = vunpack.c.l.b16 %v180
    %v1323 = vunpack.c.h.b16 %v180
    %v1324 = vunpack.c.l.b16 %v181
    %v1325 = vunpack.c.h.b16 %v181
    %v1326 = vunpack.c.l.b16 %v182
    %v1327 = vunpack.c.h.b16 %v182
    %v1328 = vunpack.c.l.b16 %v183
    %v1329 = vunpack.c.h.b16 %v183
    %v1330 = vunpack.c.l.b16 %v184
    %v1331 = vunpack.c.h.b16 %v184
    %v1332 = vunpack.c.l.b16 %v185
    %v1333 = vunpack.c.h.b16 %v185
    %v1334 = vunpack.c.l.b16 %v186
    %v1335 = vunpack.c.h.b16 %v186
    %v1336 = vunpack.c.l.b16 %v187
    %v1337 = vunpack.c.h.b16 %v187
    %v1338 = vunpack.c.l.b16 %v188
    %v1339 = vunpack.c.h.b16 %v188
    %v1340 = vunpack.c.l.b16 %v189
    %v1341 = vunpack.c.h.b16 %v189
    %v1342 = vunpack.c.l.b16 %v190
    %v1343 = vunpack.c.h.b16 %v190
    %v1344 = vunpack.c.l.b16 %v191
    %v1345 = vunpack.c.h.b16 %v191
    %v1346 = vunpack.c.l.b16 %v192
    %v1347 = vunpack.c.h.b16 %v192
    %v1348 = vunpack.c.l.b16 %v193
    %v1349 = vunpack.c.h.b16 %v193
    %v1350 = vunpack.c.l.b16 %v194
    %v1351 = vunpack.c.h.b16 %v194
    %v1352 = vunpack.c.l.b16 %v195
    %v1353 = vunpack.c.h.b16 %v195
    %v1354 = vunpack.c.l.b16 %v196
    %v1355 = vunpack.c.h.b16 %v196
    %v1356 = vunpack.c.l.b16 %v197
    %v1357 = vunpack.c.h.b16 %v197
    %v1358 = vunpack.c.l.b16 %v198
    %v1359 = vunpack.c.h.b16 %v198
    %v1360 = vunpack.c.l.b16 %v199
    %v1361 = vunpack.c.h.b16 %v199
    %v1362 = vunpack.c.l.b16 %v200
    %v1363 = vunpack.c.h.b16 %v200
    %v1364 = vunpack.c.l.b16 %v201
    %v1365 = vunpack.c.h.b16 %v201
    %v1366 = vunpack.c.l.b16 %v202
    %v1367 = vunpack.c.h.b16 %v202
    %v1368 = vunpack.c.l.b16 %v203
    %v1369 = vunpack.c.h.b16 %v203
    %v1370 = vunpack.c.l.b16 %v204
    %v1371 = vunpack.c.h.b16 %v204
    %v1372 = vunpack.c.l.b16 %v205
    %v1373 = vunpack.c.h.b16 %v205
    %v1374 = vunpack.c.l.b16 %v206
    %v1375 = vunpack.c.h.b16 %v206
    %v1376 = vunpack.c.l.b16 %v207
    %v1377 = vunpack.c.h.b16 %v207
    %v1378 = vunpack.c.l.b16 %v208
    %v1379 = vunpack.c.h.b16 %v208
    %v1380 = vunpack.c.l.b16 %v209
    %v1381 = vunpack.c.h.b16 %v209
    %v1382 = vunpack.c.l.b16 %v210
    %v1383 = vunpack.c.h.b16 %v210
    %v1384 = vunpack.c.l.b16 %v211
    %v1385 = vunpack.c.h.b16 %v211
    %v1386 = vunpack.c.l.b16 %v212
    %v1387 = vunpack.c.h.b16 %v212
    %v1388 = vunpack.c.l.b16 %v213
    %v1389 = vunpack.c.h.b16 %v213
    %v1390 = vunpack.c.l.b16 %v214
    %v1391 = vunpack.c.h.b16 %v214
    %v1392 = vunpack.c.l.b16 %v215
    %v1393 = vunpack.c.h.b16 %v215
    %v1394 = vunpack.c.l.b16 %v216
    %v1395 = vunpack.c.h.b16 %v216
    %v1396 = vunpack.c.l.b16 %v217
    %v1397 = vunpack.c.h.b16 %v217
    %v1398 = vunpack.c.l.b16 %v218
    %v1399 = vunpack.c.h.b16 %v218
    %v1400 = vunpack.c.l.b16 %v219
    %v1401 = vunpack.c.h.b16 %v219
    %v1402 = vunpack.c.l.b16 %v220
    %v1403 = vunpack.c.h.b16 %v220
    %v1404 = vunpack.c.l.b16 %v221
    %v1405 = vunpack.c.h.b16 %v221
    %v1406 = vunpack.c.l.b16 %v222
    %v1407 = vunpack.c.h.b16 %v222
    %v1408 = vunpack.c.l.b16 %v223
    %v1409 = vunpack.c.h.b16 %v223
    %v1410 = vunpack.c.l.b16 %v224
    %v1411 = vunpack.c.h.b16 %v224
    %v1412 = vunpack.c.l.b16 %v225
    %v1413 = vunpack.c.h.b16 %v225
    %v1414 = vunpack.c.l.b16 %v226
    %v1415 = vunpack.c.h.b16 %v226
    %v1416 = vunpack.c.l.b16 %v227
    %v1417 = vunpack.c.h.b16 %v227
    %v1418 = vunpack.c.l.b16 %v228
    %v1419 = vunpack.c.h.b16 %v228
    %v1420 = vunpack.c.l.b16 %v229
    %v1421 = vunpack.c.h.b16 %v229
    %v1422 = vunpack.c.l.b16 %v230
    %v1423 = vunpack.c.h.b16 %v230
    %v1424 = vunpack.c.l.b16 %v231
    %v1425 = vunpack.c.h.b16 %v231
    %v1426 = vunpack.c.l.b16 %v232
    %v1427 = vunpack.c.h.b16 %v232
    %v1428 = vunpack.c.l.b16 %v233
    %v1429 = vunpack.c.h.b16 %v233
    %v1430 = vunpack.c.l.b16 %v234
    %v1431 = vunpack.c.h.b16 %v234
    %v1432 = vunpack.c.l.b16 %v235
    %v1433 = vunpack.c.h.b16 %v235
    %v1434 = vunpack.c.l.b16 %v236
    %v1435 = vunpack.c.h.b16 %v236
    %v1436 = vunpack.c.l.b16 %v237
    %v1437 = vunpack.c.h.b16 %v237
    %v1438 = vunpack.c.l.b16 %v238
    %v1439 = vunpack.c.h.b16 %v238
    %v1440 = vunpack.c.l.b16 %v239
    %v1441 = vunpack.c.h.b16 %v239
    %v1442 = vunpack.c.l.b16 %v240
    %v1443 = vunpack.c.h.b16 %v240
    %v1444 = vunpack.c.l.b16 %v241
    %v1445 = vunpack.c.h.b16 %v241
    %v1446 = vunpack.c.l.b16 %v242
    %v1447 = vunpack.c.h.b16 %v242
    %v1448 = vunpack.c.l.b16 %v243
    %v1449 = vunpack.c.h.b16 %v243
    %v1450 = vunpack.c.l.b16 %v244
    %v1451 = vunpack.c.h.b16 %v244
    %v1452 = vunpack.c.l.b16 %v245
    %v1453 = vunpack.c.h.b16 %v245
    %v1454 = vunpack.c.l.b16 %v246
    %v1455 = vunpack.c.h.b16 %v246
    %v1456 = vunpack.c.l.b16 %v247
    %v1457 = vunpack.c.h.b16 %v247
    %v1458 = vunpack.c.l.b16 %v248
    %v1459 = vunpack.c.h.b16 %v248
    %v1460 = vunpack.c.l.b16 %v249
    %v1461 = vunpack.c.h.b16 %v249
    %v1462 = vunpack.c.l.b16 %v250
    %v1463 = vunpack.c.h.b16 %v250
    %v1464 = vunpack.c.l.b16 %v251
    %v1465 = vunpack.c.h.b16 %v251
    %v1466 = vunpack.c.l.b16 %v252
    %v1467 = vunpack.c.h.b16 %v252
    %v1468 = vunpack.c.l.b16 %v253
    %v1469 = vunpack.c.h.b16 %v253
    %v1470 = vunpack.c.l.b16 %v254
    %v1471 = vunpack.c.h.b16 %v254
    %v1472 = vunpack.c.l.b16 %v255
    %v1473 = vunpack.c.h.b16 %v255
    %v1474 = vunpack.c.l.b16 %v256
    %v1475 = vunpack.c.h.b16 %v256
    %v1476 = vunpack.c.l.b16 %v257
    %v1477 = vunpack.c.h.b16 %v257
    %v1478 = vunpack.c.l.b16 %v258
    %v1479 = vunpack.c.h.b16 %v258
    %v1480 = vunpack.c.l.b16 %v259
    %v1481 = vunpack.c.h.b16 %v259
    %v1482 = vunpack.c.l.b16 %v260
    %v1483 = vunpack.c.h.b16 %v260
    %v1484 = vunpack.c.l.b16 %v261
    %v1485 = vunpack.c.h.b16 %v261
    %v1486 = vunpack.c.l.b16 %v262
    %v1487 = vunpack.c.h.b16 %v262
    %v1488 = vunpack.c.l.b16 %v263
    %v1489 = vunpack.c.h.b16 %v263
    %v1490 = vunpack.c.l.b16 %v264
    %v1491 = vunpack.c.h.b16 %v264
    %v1492 = vunpack.c.l.b16 %v265
    %v1493 = vunpack.c.h.b16 %v265
    %v1494 = vunpack.c.l.b16 %v266
    %v1495 = vunpack.c.h.b16 %v266
    %v1496 = vunpack.c.l.b16 %v267
    %v1497 = vunpack.c.h.b16 %v267
    %v1498 = vunpack.c.l.b16 %v268
    %v1499 = vunpack.c.h.b16 %v268
    %v1500 = vunpack.c.l.b16 %v269
    %v1501 = vunpack.c.h.b16 %v269
    %v1502 = vunpack.c.l.b16 %v270
    %v1503 = vunpack.c.h.b16 %v270
    %v1504 = vunpack.c.l.b16 %v271
    %v1505 = vunpack.c.h.b16 %v271
    %v1506 = vunpack.c.l.b16 %v272
    %v1507 = vunpack.c.h.b16 %v272
    %v1508 = vunpack.c.l.b16 %v273
    %v1509 = vunpack.c.h.b16 %v273
    %v1510 = vunpack.c.l.b16 %v274
    %v1511 = vunpack.c.h.b16 %v274
    %v1512 = vunpack.c.l.b16 %v275
    %v1513 = vunpack.c.h.b16 %v275
    %v1514 = vunpack.c.l.b16 %v276
    %v1515 = vunpack.c.h.b16 %v276
    %v1516 = vunpack.c.l.b16 %v277
    %v1517 = vunpack.c.h.b16 %v277
    %v1518 = vunpack.c.l.b16 %v278
    %v1519 = vunpack.c.h.b16 %v278
    %v1520 = vunpack.c.l.b16 %v279
    %v1521 = vunpack.c.h.b16 %v279
    %v1522 = vunpack.c.l.b16 %v280
    %v1523 = vunpack.c.h.b16 %v280
    %v1524 = vunpack.c.l.b16 %v281
    %v1525 = vunpack.c.h.b16 %v281
    %v1526 = vunpack.c.l.b16 %v282
    %v1527 = vunpack.c.h.b16 %v282
    %v1528 = vunpack.c.l.b16 %v283
    %v1529 = vunpack.c.h.b16 %v283
    %v1530 = vunpack.c.l.b16 %v284
    %v1531 = vunpack.c.h.b16 %v284
    %v1532 = vunpack.c.l.b16 %v285
    %v1533 = vunpack.c.h.b16 %v285
    %v1534 = vunpack.c.l.b16 %v286
    %v1535 = vunpack.c.h.b16 %v286
    %v1536 = vunpack.c.l.b16 %v287
    %v1537 = vunpack.c.h.b16 %v287
    %v1538 = vunpack.c.l.b16 %v288
    %v1539 = vunpack.c.h.b16 %v288
    %v1540 = vunpack.c.l.b16 %v289
    %v1541 = vunpack.c.h.b16 %v289
    %v1542 = vunpack.c.l.b16 %v290
    %v1543 = vunpack.c.h.b16 %v290
    %v1544 = vunpack.c.l.b16 %v291
    %v1545 = vunpack.c.h.b16 %v291
    %v1546 = vunpack.c.l.b16 %v292
    %v1547 = vunpack.c.h.b16 %v292
    %v1548 = vunpack.c.l.b16 %v293
    %v1549 = vunpack.c.h.b16 %v293
    %v1550 = vunpack.c.l.b16 %v294
    %v1551 = vunpack.c.h.b16 %v294
    %v1552 = vunpack.c.l.b16 %v295
    %v1553 = vunpack.c.h.b16 %v295
    %v1554 = vunpack.c.l.b16 %v296
    %v1555 = vunpack.c.h.b16 %v296
    %v1556 = vunpack.c.l.b16 %v297
    %v1557 = vunpack.c.h.b16 %v297
    %v1558 = vunpack.c.l.b16 %v298
    %v1559 = vunpack.c.h.b16 %v298
    %v1560 = vunpack.c.l.b16 %v299
    %v1561 = vunpack.c.h.b16 %v299
    %v1562 = vunpack.c.l.b16 %v300
    %v1563 = vunpack.c.h.b16 %v300
    %v1564 = vunpack.c.l.b16 %v301
    %v1565 = vunpack.c.h.b16 %v301
    %v1566 = vunpack.c.l.b16 %v302
    %v1567 = vunpack.c.h.b16 %v302
    %v1568 = vunpack.c.l.b16 %v303
    %v1569 = vunpack.c.h.b16 %v303
    %v1570 = vunpack.c.l.b16 %v304
    %v1571 = vunpack.c.h.b16 %v304
    %v1572 = vunpack.c.l.b16 %v305
    %v1573 = vunpack.c.h.b16 %v305
    %v1574 = vunpack.c.l.b16 %v306
    %v1575 = vunpack.c.h.b16 %v306
    %v1576 = vunpack.c.l.b16 %v307
    %v1577 = vunpack.c.h.b16 %v307
    %v1578 = vunpack.c.l.b16 %v308
    %v1579 = vunpack.c.h.b16 %v308
    %v1580 = vunpack.c.l.b16 %v309
    %v1581 = vunpack.c.h.b16 %v309
    %v1582 = vunpack.c.l.b16 %v310
    %v1583 = vunpack.c.h.b16 %v310
    %v1584 = vunpack.c.l.b16 %v311
    %v1585 = vunpack.c.h.b16 %v311
    %v1586 = vunpack.c.l.b16 %v312
    %v1587 = vunpack.c.h.b16 %v312
    %v1588 = vunpack.c.l.b16 %v313
    %v1589 = vunpack.c.h.b16 %v313
    %v1590 = vunpack.c.l.b16 %v314
    %v1591 = vunpack.c.h.b16 %v314
    %v1592 = vunpack.c.l.b16 %v315
    %v1593 = vunpack.c.h.b16 %v315
    %v1594 = vunpack.c.l.b16 %v316
    %v1595 = vunpack.c.h.b16 %v316
    %v1596 = vunpack.c.l.b16 %v317
    %v1597 = vunpack.c.h.b16 %v317
    %v1598 = vunpack.c.l.b16 %v318
    %v1599 = vunpack.c.h.b16 %v318
    %v1600 = vunpack.c.l.b16 %v319
    %v1601 = vunpack.c.h.b16 %v319
    %v1602 = vunpack.c.l.b16 %v320
    %v1603 = vunpack.c.h.b16 %v320
    %v1604 = vunpack.c.l.b16 %v321
    %v1605 = vunpack.c.h.b16 %v321
    %v1606 = vunpack.c.l.b16 %v322
    %v1607 = vunpack.c.h.b16 %v322
    %v1608 = vunpack.c.l.b16 %v323
    %v1609 = vunpack.c.h.b16 %v323
    %v1610 = vunpack.c.l.b16 %v324
    %v1611 = vunpack.c.h.b16 %v324
    %v1612 = vunpack.c.l.b16 %v325
    %v1613 = vunpack.c.h.b16 %v325
    %v1614 = vunpack.c.l.b16 %v326
    %v1615 = vunpack.c.h.b16 %v326
    %v1616 = vunpack.c.l.b16 %v327
    %v1617 = vunpack.c.h.b16 %v327
    %v1618 = vunpack.c.l.b16 %v328
    %v1619 = vunpack.c.h.b16 %v328
    %v1620 = vunpack.c.l.b16 %v329
    %v1621 = vunpack.c.h.b16 %v329
    %v1622 = vunpack.c.l.b16 %v330
    %v1623 = vunpack.c.h.b16 %v330
    %v1624 = vunpack.c.l.b16 %v331
    %v1625 = vunpack.c.h.b16 %v331
    %v1626 = vunpack.c.l.b16 %v332
    %v1627 = vunpack.c.h.b16 %v332
    %v1628 = vunpack.c.l.b16 %v333
    %v1629 = vunpack.c.h.b16 %v333
    %v1630 = vunpack.c.l.b16 %v334
    %v1631 = vunpack.c.h.b16 %v334
    %v1632 = vunpack.c.l.b16 %v335
    %v1633 = vunpack.c.h.b16 %v335
    %v1634 = vunpack.c.l.b16 %v336
    %v1635 = vunpack.c.h.b16 %v336
    %v1636 = vunpack.c.l.b16 %v337
    %v1637 = vunpack.c.h.b16 %v337
    %v1638 = vunpack.c.l.b16 %v338
    %v1639 = vunpack.c.h.b16 %v338
    %v1640 = vunpack.c.l.b16 %v339
    %v1641 = vunpack.c.h.b16 %v339
    %v1642 = vunpack.c.l.b16 %v340
    %v1643 = vunpack.c.h.b16 %v340
    %v1644 = vunpack.c.l.b16 %v341
    %v1645 = vunpack.c.h.b16 %v341
    %v1646 = vunpack.c.l.b16 %v342
    %v1647 = vunpack.c.h.b16 %v342
    %v1648 = vunpack.c.l.b16 %v343
    %v1649 = vunpack.c.h.b16 %v343
    %v1650 = vunpack.c.l.b16 %v344
    %v1651 = vunpack.c.h.b16 %v344
    %v1652 = vunpack.c.l.b16 %v345
    %v1653 = vunpack.c.h.b16 %v345
    %v1654 = vunpack.c.l.b16 %v346
    %v1655 = vunpack.c.h.b16 %v346
    %v1656 = vunpack.c.l.b16 %v347
    %v1657 = vunpack.c.h.b16 %v347
    %v1658 = vunpack.c.l.b16 %v348
    %v1659 = vunpack.c.h.b16 %v348
    %v1660 = vunpack.c.l.b16 %v349
    %v1661 = vunpack.c.h.b16 %v349
    %v1662 = vunpack.c.l.b16 %v350
    %v1663 = vunpack.c.h.b16 %v350
    %v1664 = vunpack.c.l.b16 %v351
    %v1665 = vunpack.c.h.b16 %v351
    %v1666 = vunpack.c.l.b16 %v352
    %v1667 = vunpack.c.h.b16 %v352
    %v1668 = vunpack.c.l.b16 %v353
    %v1669 = vunpack.c.h.b16 %v353
    %v1670 = vunpack.c.l.b16 %v354
    %v1671 = vunpack.c.h.b16 %v354
    %v1672 = vunpack.c.l.b16 %v355
    %v1673 = vunpack.c.h.b16 %v355
    %v1674 = vunpack.c.l.b16 %v356
    %v1675 = vunpack.c.h.b16 %v356
    %v1676 = vunpack.c.l.b16 %v357
    %v1677 = vunpack.c.h.b16 %v357
    %v1678 = vunpack.c.l.b16 %v358
    %v1679 = vunpack.c.h.b16 %v358
    %v1680 = vunpack.c.l.b16 %v359
    %v1681 = vunpack.c.h.b16 %v359
    %v1682 = vunpack.c.l.b16 %v360
    %v1683 = vunpack.c.h.b16 %v360
    %v1684 = vunpack.c.l.b16 %v361
    %v1685 = vunpack.c.h.b16 %v361
    %v1686 = vunpack.c.l.b16 %v362
    %v1687 = vunpack.c.h.b16 %v362
    %v1688 = vunpack.c.l.b16 %v363
    %v1689 = vunpack.c.h.b16 %v363
    %v1690 = vunpack.c.l.b16 %v364
    %v1691 = vunpack.c.h.b16 %v364
    %v1692 = vunpack.c.l.b16 %v365
    %v1693 = vunpack.c.h.b16 %v365
    %v1694 = vunpack.c.l.b16 %v366
    %v1695 = vunpack.c.h.b16 %v366
    %v1696 = vunpack.c.l.b16 %v367
    %v1697 = vunpack.c.h.b16 %v367
    %v1698 = vunpack.c.l.b16 %v368
    %v1699 = vunpack.c.h.b16 %v368
    %v1700 = vunpack.c.l.b16 %v369
    %v1701 = vunpack.c.h.b16 %v369
    %v1702 = vunpack.c.l.b16 %v370
    %v1703 = vunpack.c.h.b16 %v370
    %v1704 = vunpack.c.l.b16 %v371
    %v1705 = vunpack.c.h.b16 %v371
    %v1706 = vunpack.c.l.b16 %v372
    %v1707 = vunpack.c.h.b16 %v372
    %v1708 = vunpack.c.l.b16 %v373
    %v1709 = vunpack.c.h.b16 %v373
    %v1710 = vunpack.c.l.b16 %v374
    %v1711 = vunpack.c.h.b16 %v374
    %v1712 = vunpack.c.l.b16 %v375
    %v1713 = vunpack.c.h.b16 %v375
    %v1714 = vunpack.c.l.b16 %v376
    %v1715 = vunpack.c.h.b16 %v376
    %v1716 = vunpack.c.l.b16 %v377
    %v1717 = vunpack.c.h.b16 %v377
    %v1718 = vunpack.c.l.b16 %v378
    %v1719 = vunpack.c.h.b16 %v378
    %v1720 = vunpack.c.l.b16 %v379
    %v1721 = vunpack.c.h.b16 %v379
    %v1722 = vunpack.c.l.b16 %v380
    %v1723 = vunpack.c.h.b16 %v380
    %v1724 = vunpack.c.l.b16 %v381
    %v1725 = vunpack.c.h.b16 %v381
    %v1726 = vunpack.c.l.b16 %v382
    %v1727 = vunpack.c.h.b16 %v382
    %v1728 = vunpack.c.l.b16 %v383
    %v1729 = vunpack.c.h.b16 %v383
    %v1730 = vunpack.c.l.b16 %v384
    %v1731 = vunpack.c.h.b16 %v384
    %v1732 = vunpack.c.l.b16 %v385
    %v1733 = vunpack.c.h.b16 %v385
    %v1734 = vunpack.c.l.b16 %v386
    %v1735 = vunpack.c.h.b16 %v386
    %v1736 = vunpack.c.l.b16 %v387
    %v1737 = vunpack.c.h.b16 %v387
    %v1738 = vunpack.c.l.b16 %v388
    %v1739 = vunpack.c.h.b16 %v388
    %v1740 = vunpack.c.l.b16 %v389
    %v1741 = vunpack.c.h.b16 %v389
    %v1742 = vunpack.c.l.b16 %v390
    %v1743 = vunpack.c.h.b16 %v390
    %v1744 = vunpack.c.l.b16 %v391
    %v1745 = vunpack.c.h.b16 %v391
    %v1746 = vunpack.c.l.b16 %v392
    %v1747 = vunpack.c.h.b16 %v392
    %v1748 = vunpack.c.l.b16 %v393
    %v1749 = vunpack.c.h.b16 %v393
    %v1750 = vunpack.c.l.b16 %v394
    %v1751 = vunpack.c.h.b16 %v394
    %v1752 = vunpack.c.l.b16 %v395
    %v1753 = vunpack.c.h.b16 %v395
    %v1754 = vunpack.c.l.b16 %v396
    %v1755 = vunpack.c.h.b16 %v396
    %v1756 = vunpack.c.l.b16 %v397
    %v1757 = vunpack.c.h.b16 %v397
    %v1758 = vunpack.c.l.b16 %v398
    %v1759 = vunpack.c.h.b16 %v398
    %v1760 = vunpack.c.l.b16 %v399
    %v1761 = vunpack.c.h.b16 %v399
    %v1762 = vunpack.c.l.b16 %v400
    %v1763 = vunpack.c.h.b16 %v400
    %v1764 = vunpack.c.l.b16 %v401
    %v1765 = vunpack.c.h.b16 %v401
    %v1766 = vunpack.c.l.b16 %v402
    %v1767 = vunpack.c.h.b16 %v402
    %v1768 = vunpack.c.l.b16 %v403
    %v1769 = vunpack.c.h.b16 %v403
    %v1770 = vpack.c.b16 %v1294, %v1290
    %v1771 = vpack.c.b16 %v1295, %v1291
    %v1772 = vpack.c.b16 %v1296, %v1292
    %v1773 = vpack.c.b16 %v1297, %v1293
    %v1774 = vpack.c.b16 %v1302, %v1298
    %v1775 = vpack.c.b16 %v1303, %v1299
    %v1776 = vpack.c.b16 %v1304, %v1300
    %v1777 = vpack.c.b16 %v1305, %v1301
    %v1778 = vpack.c.b16 %v1310, %v1306
    %v1779 = vpack.c.b16 %v1311, %v1307
    %v1780 = vpack.c.b16 %v1312, %v1308
    %v1781 = vpack.c.b16 %v1313, %v1309
    %v1782 = vpack.c.b16 %v1318, %v1314
    %v1783 = vpack.c.b16 %v1319, %v1315
    %v1784 = vpack.c.b16 %v1320, %v1316
    %v1785 = vpack.c.b16 %v1321, %v1317
    %v1786 = vpack.c.b16 %v1326, %v1322
    %v1787 = vpack.c.b16 %v1327, %v1323
    %v1788 = vpack.c.b16 %v1328, %v1324
    %v1789 = vpack.c.b16 %v1329, %v1325
    %v1790 = vpack.c.b16 %v1334, %v1330
    %v1791 = vpack.c.b16 %v1335, %v1331
    %v1792 = vpack.c.b16 %v1336, %v1332
    %v1793 = vpack.c.b16 %v1337, %v1333
    %v1794 = vpack.c.b16 %v1342, %v1338
    %v1795 = vpack.c.b16 %v1343, %v1339
    %v1796 = vpack.c.b16 %v1344, %v1340
    %v1797 = vpack.c.b16 %v1345, %v1341
    %v1798 = vpack.c.b16 %v1350, %v1346
    %v1799 = vpack.c.b16 %v1351, %v1347
    %v1800 = vpack.c.b16 %v1352, %v1348
    %v1801 = vpack.c.b16 %v1353, %v1349
    %v1802 = vpack.c.b16 %v1358, %v1354
    %v1803 = vpack.c.b16 %v1359, %v1355
    %v1804 = vpack.c.b16 %v1360, %v1356
    %v1805 = vpack.c.b16 %v1361, %v1357
    %v1806 = vpack.c.b16 %v1366, %v1362
    %v1807 = vpack.c.b16 %v1367, %v1363
    %v1808 = vpack.c.b16 %v1368, %v1364
    %v1809 = vpack.c.b16 %v1369, %v1365
    %v1810 = vpack.c.b16 %v1374, %v1370
    %v1811 = vpack.c.b16 %v1375, %v1371
    %v1812 = vpack.c.b16 %v1376, %v1372
    %v1813 = vpack.c.b16 %v1377, %v1373
    %v1814 = vpack.c.b16 %v1382, %v1378
    %v1815 = vpack.c.b16 %v1383, %v1379
    %v1816 = vpack.c.b16 %v1384, %v1380
    %v1817 = vpack.c.b16 %v1385, %v1381
    %v1818 = vpack.c.b16 %v1390, %v1386
    %v1819 = vpack.c.b16 %v1391, %v1387
    %v1820 = vpack.c.b16 %v1392, %v1388
    %v1821 = vpack.c.b16 %v1393, %v1389
    %v1822 = vpack.c.b16 %v1398, %v1394
    %v1823 = vpack.c.b16 %v1399, %v1395
    %v1824 = vpack.c.b16 %v1400, %v1396
    %v1825 = vpack.c.b16 %v1401, %v1397
    %v1826 = vpack.c.b16 %v1406, %v1402
    %v1827 = vpack.c.b16 %v1407, %v1403
    %v1828 = vpack.c.b16 %v1408, %v1404
    %v1829 = vpack.c.b16 %v1409, %v1405
    %v1830 = vpack.c.b16 %v1414, %v1410
    %v1831 = vpack.c.b16 %v1415, %v1411
    %v1832 = vpack.c.b16 %v1416, %v1412
    %v1833 = vpack.c.b16 %v1417, %v1413
    %v1834 = vpack.c.b16 %v1422, %v1418
    %v1835 = vpack.c.b16 %v1423, %v1419
    %v1836 = vpack.c.b16 %v1424, %v1420
    %v1837 = vpack.c.b16 %v1425, %v1421
    %v1838 = vpack.c.b16 %v1430, %v1426
    %v1839 = vpack.c.b16 %v1431, %v1427
    %v1840 = vpack.c.b16 %v1432, %v1428
    %v1841 = vpack.c.b16 %v1433, %v1429
    %v1842 = vpack.c.b16 %v1438, %v1434
    %v1843 = vpack.c.b16 %v1439, %v1435
    %v1844 = vpack.c.b16 %v1440, %v1436
    %v1845 = vpack.c.b16 %v1441, %v1437
    %v1846 = vpack.c.b16 %v1446, %v1442
    %v1847 = vpack.c.b16 %v1447, %v1443
    %v1848 = vpack.c.b16 %v1448, %v1444
    %v1849 = vpack.c.b16 %v1449, %v1445
    %v1850 = vpack.c.b16 %v1454, %v1450
    %v1851 = vpack.c.b16 %v1455, %v1451
    %v1852 = vpack.c.b16 %v1456, %v1452
    %v1853 = vpack.c.b16 %v1457, %v1453
    %v1854 = vpack.c.b16 %v1462, %v1458
    %v1855 = vpack.c.b16 %v1463, %v1459
    %v1856 = vpack.c.b16 %v1464, %v1460
    %v1857 = vpack.c.b16 %v1465, %v1461
    %v1858 = vpack.c.b16 %v1470, %v1466
    %v1859 = vpack.c.b16 %v1471, %v1467
    %v1860 = vpack.c.b16 %v1472, %v1468
    %v1861 = vpack.c.b16 %v1473, %v1469
    %v1862 = vpack.c.b16 %v1478, %v1474
    %v1863 = vpack.c.b16 %v1479, %v1475
    %v1864 = vpack.c.b16 %v1480, %v1476
    %v1865 = vpack.c.b16 %v1481, %v1477
    %v1866 = vpack.c.b16 %v1486, %v1482
    %v1867 = vpack.c.b16 %v1487, %v1483
    %v1868 = vpack.c.b16 %v1488, %v1484
    %v1869 = vpack.c.b16 %v1489, %v1485
    %v1870 = vpack.c.b16 %v1494, %v1490
    %v1871 = vpack.c.b16 %v1495, %v1491
    %v1872 = vpack.c.b16 %v1496, %v1492
    %v1873 = vpack.c.b16 %v1497, %v1493
    %v1874 = vpack.c.b16 %v1502, %v1498
    %v1875 = vpack.c.b16 %v1503, %v1499
    %v1876 = vpack.c.b16 %v1504, %v1500
    %v1877 = vpack.c.b16 %v1505, %v1501
    %v1878 = vpack.c.b16 %v1510, %v1506
    %v1879 = vpack.c.b16 %v1511, %v1507
    %v1880 = vpack.c.b16 %v1512, %v1508
    %v1881 = vpack.c.b16 %v1513, %v1509
    %v1882 = vpack.c.b16 %v1518, %v1514
    %v1883 = vpack.c.b16 %v1519, %v1515
    %v1884 = vpack.c.b16 %v1520, %v1516
    %v1885 = vpack.c.b16 %v1521, %v1517
    %v1886 = vpack.c.b16 %v1526, %v1522
    %v1887 = vpack.c.b16 %v1527, %v1523
    %v1888 = vpack.c.b16 %v1528, %v1524
    %v1889 = vpack.c.b16 %v1529, %v1525
    %v1890 = vpack.c.b16 %v1534, %v1530
    %v1891 = vpack.c.b16 %v1535, %v1531
    %v1892 = vpack.c.b16 %v1536, %v1532
    %v1893 = vpack.c.b16 %v1537, %v1533
    %v1894 = vpack.c.b16 %v1542, %v1538
    %v1895 = vpack.c.b16 %v1543, %v1539
    %v1896 = vpack.c.b16 %v1544, %v1540
    %v1897 = vpack.c.b16 %v1545, %v1541
    %v1898 = vpack.c.b16 %v1550, %v1546
    %v1899 = vpack.c.b16 %v1551, %v1547
    %v1900 = vpack.c.b16 %v1552, %v1548
    %v1901 = vpack.c.b16 %v1553, %v1549
    %v1902 = vpack.c.b16 %v1558, %v1554
    %v1903 = vpack.c.b16 %v1559, %v1555
    %v1904 = vpack.c.b16 %v1560, %v1556
    %v1905 = vpack.c.b16 %v1561, %v1557
    %v1906 = vpack.c.b16 %v1566, %v1562
    %v1907 = vpack.c.b16 %v1567, %v1563
    %v1908 = vpack.c.b16 %v1568, %v1564
    %v1909 = vpack.c.b16 %v1569, %v1565
    %v1910 = vpack.c.b16 %v1574, %v1570
    %v1911 = vpack.c.b16 %v1575, %v1571
    %v1912 = vpack.c.b16 %v1576, %v1572
    %v1913 = vpack.c.b16 %v1577, %v1573
    %v1914 = vpack.c.b16 %v1582, %v1578
    %v1915 = vpack.c.b16 %v1583, %v1579
    %v1916 = vpack.c.b16 %v1584, %v1580
    %v1917 = vpack.c.b16 %v1585, %v1581
    %v1918 = vpack.c.b16 %v1590, %v1586
    %v1919 = vpack.c.b16 %v1591, %v1587
    %v1920 = vpack.c.b16 %v1592, %v1588
    %v1921 = vpack.c.b16 %v1593, %v1589
    %v1922 = vpack.c.b16 %v1598, %v1594
    %v1923 = vpack.c.b16 %v1599, %v1595
    %v1924 = vpack.c.b16 %v1600, %v1596
    %v1925 = vpack.c.b16 %v1601, %v1597
    %v1926 = vpack.c.b16 %v1606, %v1602
    %v1927 = vpack.c.b16 %v1607, %v1603
    %v1928 = vpack.c.b16 %v1608, %v1604
    %v1929 = vpack.c.b16 %v1609, %v1605
    %v1930 = vpack.c.b16 %v1614, %v1610
    %v1931 = vpack.c.b16 %v1615, %v1611
    %v1932 = vpack.c.b16 %v1616, %v1612
    %v1933 = vpack.c.b16 %v1617, %v1613
    %v1934 = vpack.c.b16 %v1622, %v1618
    %v1935 = vpack.c.b16 %v1623, %v1619
    %v1936 = vpack.c.b16 %v1624, %v1620
    %v1937 = vpack.c.b16 %v1625, %v1621
    %v1938 = vpack.c.b16 %v1630, %v1626
    %v1939 = vpack.c.b16 %v1631, %v1627
    %v1940 = vpack.c.b16 %v1632, %v1628
    %v1941 = vpack.c.b16 %v1633, %v1629
    %v1942 = vpack.c.b16 %v1638, %v1634
    %v1943 = vpack.c.b16 %v1639, %v1635
    %v1944 = vpack.c.b16 %v1640, %v1636
    %v1945 = vpack.c.b16 %v1641, %v1637
    %v1946 = vpack.c.b16 %v1646, %v1642
    %v1947 = vpack.c.b16 %v1647, %v1643
    %v1948 = vpack.c.b16 %v1648, %v1644
    %v1949 = vpack.c.b16 %v1649, %v1645
    %v1950 = vpack.c.b16 %v1654, %v1650
    %v1951 = vpack.c.b16 %v1655, %v1651
    %v1952 = vpack.c.b16 %v1656, %v1652
    %v1953 = vpack.c.b16 %v1657, %v1653
    %v1954 = vpack.c.b16 %v1662, %v1658
    %v1955 = vpack.c.b16 %v1663, %v1659
    %v1956 = vpack.c.b16 %v1664, %v1660
    %v1957 = vpack.c.b16 %v1665, %v1661
    %v1958 = vpack.c.b16 %v1670, %v1666
    %v1959 = vpack.c.b16 %v1671, %v1667
    %v1960 = vpack.c.b16 %v1672, %v1668
    %v1961 = vpack.c.b16 %v1673, %v1669
    %v1962 = vpack.c.b16 %v1678, %v1674
    %v1963 = vpack.c.b16 %v1679, %v1675
    %v1964 = vpack.c.b16 %v1680, %v1676
    %v1965 = vpack.c.b16 %v1681, %v1677
    %v1966 = vpack.c.b16 %v1686, %v1682
    %v1967 = vpack.c.b16 %v1687, %v1683
    %v1968 = vpack.c.b16 %v1688, %v1684
    %v1969 = vpack.c.b16 %v1689, %v1685
    %v1970 = vpack.c.b16 %v1694, %v1690
    %v1971 = vpack.c.b16 %v1695, %v1691
    %v1972 = vpack.c.b16 %v1696, %v1692
    %v1973 = vpack.c.b16 %v1697, %v1693
    %v1974 = vpack.c.b16 %v1702, %v1698
    %v1975 = vpack.c.b16 %v1703, %v1699
    %v1976 = vpack.c.b16 %v1704, %v1700
    %v1977 = vpack.c.b16 %v1705, %v1701
    %v1978 = vpack.c.b16 %v1710, %v1706
    %v1979 = vpack.c.b16 %v1711, %v1707
    %v1980 = vpack.c.b16 %v1712, %v1708
    %v1981 = vpack.c.b16 %v1713, %v1709
    %v1982 = vpack.c.b16 %v1718, %v1714
    %v1983 = vpack.c.b16 %v1719, %v1715
    %v1984 = vpack.c.b16 %v1720, %v1716
    %v1985 = vpack.c.b16 %v1721, %v1717
    %v1986 = vpack.c.b16 %v1726, %v1722
    %v1987 = vpack.c.b16 %v1727, %v1723
    %v1988 = vpack.c.b16 %v1728, %v1724
    %v1989 = vpack.c.b16 %v1729, %v1725
    %v1990 = vpack.c.b16 %v1734, %v1730
    %v1991 = vpack.c.b16 %v1735, %v1731
    %v1992 = vpack.c.b16 %v1736, %v1732
    %v1993 = vpack.c.b16 %v1737, %v1733
    %v1994 = vpack.c.b16 %v1742, %v1738
    %v1995 = vpack.c.b16 %v1743, %v1739
    %v1996 = vpack.c.b16 %v1744, %v1740
    %v1997 = vpack.c.b16 %v1745, %v1741
    %v1998 = vpack.c.b16 %v1750, %v1746
    %v1999 = vpack.c.b16 %v1751, %v1747
    %v2000 = vpack.c.b16 %v1752, %v1748
    %v2001 = vpack.c.b16 %v1753, %v1749
    %v2002 = vpack.c.b16 %v1758, %v1754
    %v2003 = vpack.c.b16 %v1759, %v1755
    %v2004 = vpack.c.b16 %v1760, %v1756
    %v2005 = vpack.c.b16 %v1761, %v1757
    %v2006 = vpack.c.b16 %v1766, %v1762
    %v2007 = vpack.c.b16 %v1767, %v1763
    %v2008 = vpack.c.b16 %v1768, %v1764
    %v2009 = vpack.c.b16 %v1769, %v1765
    %vm2246 = vcmask 474112
    %v2248 = vsel %vm2246, %v817, 0
    %v2251 = vsel %vm2246, %v825, 0
    %v2254 = vsel %vm2246, %v833, 0
    %v2257 = vsel %vm2246, %v841, 0
    %v2260 = vsel %vm2246, %v849, 0
    %v2263 = vsel %vm2246, %v857, 0
    %v2266 = vsel %vm2246, %v865, 0
    %v2269 = vsel %vm2246, %v873, 0
    %v2272 = vsel %vm2246, %v881, 0
    %v2275 = vsel %vm2246, %v889, 0
    %v2278 = vsel %vm2246, %v897, 0
    %v2281 = vsel %vm2246, %v905, 0
    %v2284 = vsel %vm2246, %v913, 0
    %v2287 = vsel %vm2246, %v921, 0
    %v2290 = vsel %vm2246, %v929, 0
    %v2293 = vsel %vm2246, %v937, 0
    %vm2295 = vcmask 1044480
    %v2297 = vsel %vm2295, %v2006, 0
    %v2300 = vsel %vm2295, %v2007, 0
    %v2303 = vsel %vm2295, %v2008, 0
    %v2306 = vsel %vm2295, %v2009, 0
    %2308 = vmatprep.subr.bf16.mxu0 %v1771
    %2309 = vmatpush1.bf16.msra.mxu0 %v1770
    %2310 = vmatprep.subr.bf16.mxu0 %v1775
    %2311 = vmatpush1.bf16.msra.mxu0 %v1774
    %2312 = vmatprep.subr.bf16.mxu0 %v1779
    %2313 = vmatpush1.bf16.msra.mxu0 %v1778
    %2314 = vmatprep.subr.bf16.mxu0 %v1783
    %2315 = vmatpush1.bf16.msra.mxu0 %v1782
    %2316 = vmatprep.subr.bf16.mxu0 %v1787
    %2317 = vmatpush1.bf16.msra.mxu0 %v1786
    %2318 = vmatprep.subr.bf16.mxu0 %v1791
    %2319 = vmatpush1.bf16.msra.mxu0 %v1790
    %2320 = vmatprep.subr.bf16.mxu0 %v1795
    %2321 = vmatpush1.bf16.msra.mxu0 %v1794
    %2322 = vmatprep.subr.bf16.mxu0 %v1799
    %2323 = vmatpush1.bf16.msra.mxu0 %v1798
    %2324 = vmatprep.subr.bf16.mxu0 %v1803
    %2325 = vmatpush1.bf16.msra.mxu0 %v1802
    %2326 = vmatprep.subr.bf16.mxu0 %v1807
    %2327 = vmatpush1.bf16.msra.mxu0 %v1806
    %2328 = vmatprep.subr.bf16.mxu0 %v1811
    %2329 = vmatpush1.bf16.msra.mxu0 %v1810
    %2330 = vmatprep.subr.bf16.mxu0 %v1815
    %2331 = vmatpush1.bf16.msra.mxu0 %v1814
    %2332 = vmatprep.subr.bf16.mxu0 %v1819
    %2333 = vmatpush1.bf16.msra.mxu0 %v1818
    %2334 = vmatprep.subr.bf16.mxu0 %v1823
    %2335 = vmatpush1.bf16.msra.mxu0 %v1822
    %2336 = vmatprep.subr.bf16.mxu0 %v1827
    %2337 = vmatpush1.bf16.msra.mxu0 %v1826
    %2338 = vmatprep.subr.bf16.mxu0 %v1831
    %2339 = vmatpush1.bf16.msra.mxu0 %v1830
    %2340 = vmatprep.mubr.bf16.mxu0 %v811
    %2341 = vmatmul.mubr.bf16.gmra.mrb[0].mxu0 %v810
    %v2342 = vpop.f32.mrb[0].mxu0
    %v2343 = vadd.f32 %v409, %v2342
    %v2344 = vpop.f32.mrb[0].mxu0
    %v2345 = vadd.f32 %v413, %v2344
    %v2346 = vpop.f32.mrb[0].mxu0
    %v2347 = vadd.f32 %v409, %v2346
    %v2348 = vpop.f32.mrb[0].mxu0
    %v2349 = vadd.f32 %v413, %v2348
    %2350 = vmatprep.mubr.bf16.mxu0 %v819
    %2351 = vmatmul.mubr.bf16.gmra.mrb[0].mxu0 %v818
    %v2352 = vpop.f32.mrb[0].mxu0
    %v2353 = vadd.f32 %v409, %v2352
    %v2354 = vpop.f32.mrb[0].mxu0
    %v2355 = vadd.f32 %v413, %v2354
    %v2356 = vpop.f32.mrb[0].mxu0
    %v2357 = vadd.f32 %v409, %v2356
    %v2358 = vpop.f32.mrb[0].mxu0
    %v2359 = vadd.f32 %v413, %v2358
    %2360 = vmatprep.mubr.bf16.mxu0 %v827
    %2361 = vmatmul.mubr.bf16.gmra.mrb[0].mxu0 %v826
    %v2362 = vpop.f32.mrb[0].mxu0
    %v2363 = vadd.f32 %v409, %v2362
    %v2364 = vpop.f32.mrb[0].mxu0
    %v2365 = vadd.f32 %v413, %v2364
    %v2366 = vpop.f32.mrb[0].mxu0
    %v2367 = vadd.f32 %v409, %v2366
    %v2368 = vpop.f32.mrb[0].mxu0
    %v2369 = vadd.f32 %v413, %v2368
    %2370 = vmatprep.mubr.bf16.mxu0 %v835
    %2371 = vmatmul.mubr.bf16.gmra.mrb[0].mxu0 %v834
    %v2372 = vpop.f32.mrb[0].mxu0
    %v2373 = vadd.f32 %v409, %v2372
    %v2374 = vpop.f32.mrb[0].mxu0
    %v2375 = vadd.f32 %v413, %v2374
    %v2376 = vpop.f32.mrb[0].mxu0
    %v2377 = vadd.f32 %v409, %v2376
    %v2378 = vpop.f32.mrb[0].mxu0
    %v2379 = vadd.f32 %v413, %v2378
    %2380 = vmatprep.mubr.bf16.mxu0 %v843
    %2381 = vmatmul.mubr.bf16.gmra.mrb[0].mxu0 %v842
    %v2382 = vpop.f32.mrb[0].mxu0
    %v2383 = vadd.f32 %v409, %v2382
    %v2384 = vpop.f32.mrb[0].mxu0
    %v2385 = vadd.f32 %v413, %v2384
    %v2386 = vpop.f32.mrb[0].mxu0
    %v2387 = vadd.f32 %v409, %v2386
    %v2388 = vpop.f32.mrb[0].mxu0
    %v2389 = vadd.f32 %v413, %v2388
    %2390 = vmatprep.mubr.bf16.mxu0 %v851
    %2391 = vmatmul.mubr.bf16.gmra.mrb[0].mxu0 %v850
    %v2392 = vpop.f32.mrb[0].mxu0
    %v2393 = vadd.f32 %v409, %v2392
    %v2394 = vpop.f32.mrb[0].mxu0
    %v2395 = vadd.f32 %v413, %v2394
    %v2396 = vpop.f32.mrb[0].mxu0
    %v2397 = vadd.f32 %v409, %v2396
    %v2398 = vpop.f32.mrb[0].mxu0
    %v2399 = vadd.f32 %v413, %v2398
    %2400 = vmatprep.mubr.bf16.mxu0 %v859
    %2401 = vmatmul.mubr.bf16.gmra.mrb[0].mxu0 %v858
    %v2402 = vpop.f32.mrb[0].mxu0
    %v2403 = vadd.f32 %v409, %v2402
    %v2404 = vpop.f32.mrb[0].mxu0
    %v2405 = vadd.f32 %v413, %v2404
    %v2406 = vpop.f32.mrb[0].mxu0
    %v2407 = vadd.f32 %v409, %v2406
    %v2408 = vpop.f32.mrb[0].mxu0
    %v2409 = vadd.f32 %v413, %v2408
    %2410 = vmatprep.mubr.bf16.mxu0 %v867
    %2411 = vmatmul.mubr.bf16.gmra.mrb[0].mxu0 %v866
    %v2412 = vpop.f32.mrb[0].mxu0
    %v2413 = vadd.f32 %v409, %v2412
    %v2414 = vpop.f32.mrb[0].mxu0
    %v2415 = vadd.f32 %v413, %v2414
    %v2416 = vpop.f32.mrb[0].mxu0
    %v2417 = vadd.f32 %v409, %v2416
    %v2418 = vpop.f32.mrb[0].mxu0
    %v2419 = vadd.f32 %v413, %v2418
    %2420 = vmatprep.mubr.bf16.mxu0 %v875
    %2421 = vmatmul.mubr.bf16.gmra.mrb[0].mxu0 %v874
    %v2422 = vpop.f32.mrb[0].mxu0
    %v2423 = vadd.f32 %v409, %v2422
    %v2424 = vpop.f32.mrb[0].mxu0
    %v2425 = vadd.f32 %v413, %v2424
    %v2426 = vpop.f32.mrb[0].mxu0
    %v2427 = vadd.f32 %v409, %v2426
    %v2428 = vpop.f32.mrb[0].mxu0
    %v2429 = vadd.f32 %v413, %v2428
    %2430 = vmatprep.mubr.bf16.mxu0 %v883
    %2431 = vmatmul.mubr.bf16.gmra.mrb[0].mxu0 %v882
    %v2432 = vpop.f32.mrb[0].mxu0
    %v2433 = vadd.f32 %v409, %v2432
    %v2434 = vpop.f32.mrb[0].mxu0
    %v2435 = vadd.f32 %v413, %v2434
    %v2436 = vpop.f32.mrb[0].mxu0
    %v2437 = vadd.f32 %v409, %v2436
    %v2438 = vpop.f32.mrb[0].mxu0
    %v2439 = vadd.f32 %v413, %v2438
    %2440 = vmatprep.mubr.bf16.mxu0 %v891
    %2441 = vmatmul.mubr.bf16.gmra.mrb[0].mxu0 %v890
    %v2442 = vpop.f32.mrb[0].mxu0
    %v2443 = vadd.f32 %v409, %v2442
    %v2444 = vpop.f32.mrb[0].mxu0
    %v2445 = vadd.f32 %v413, %v2444
    %v2446 = vpop.f32.mrb[0].mxu0
    %v2447 = vadd.f32 %v409, %v2446
    %v2448 = vpop.f32.mrb[0].mxu0
    %v2449 = vadd.f32 %v413, %v2448
    %2450 = vmatprep.mubr.bf16.mxu0 %v899
    %2451 = vmatmul.mubr.bf16.gmra.mrb[0].mxu0 %v898
    %v2452 = vpop.f32.mrb[0].mxu0
    %v2453 = vadd.f32 %v409, %v2452
    %v2454 = vpop.f32.mrb[0].mxu0
    %v2455 = vadd.f32 %v413, %v2454
    %v2456 = vpop.f32.mrb[0].mxu0
    %v2457 = vadd.f32 %v409, %v2456
    %v2458 = vpop.f32.mrb[0].mxu0
    %v2459 = vadd.f32 %v413, %v2458
    %2460 = vmatprep.mubr.bf16.mxu0 %v907
    %2461 = vmatmul.mubr.bf16.gmra.mrb[0].mxu0 %v906
    %v2462 = vpop.f32.mrb[0].mxu0
    %v2463 = vadd.f32 %v409, %v2462
    %v2464 = vpop.f32.mrb[0].mxu0
    %v2465 = vadd.f32 %v413, %v2464
    %v2466 = vpop.f32.mrb[0].mxu0
    %v2467 = vadd.f32 %v409, %v2466
    %v2468 = vpop.f32.mrb[0].mxu0
    %v2469 = vadd.f32 %v413, %v2468
    %2470 = vmatprep.mubr.bf16.mxu0 %v915
    %2471 = vmatmul.mubr.bf16.gmra.mrb[0].mxu0 %v914
    %v2472 = vpop.f32.mrb[0].mxu0
    %v2473 = vadd.f32 %v409, %v2472
    %v2474 = vpop.f32.mrb[0].mxu0
    %v2475 = vadd.f32 %v413, %v2474
    %v2476 = vpop.f32.mrb[0].mxu0
    %v2477 = vadd.f32 %v409, %v2476
    %v2478 = vpop.f32.mrb[0].mxu0
    %v2479 = vadd.f32 %v413, %v2478
    %2480 = vmatprep.mubr.bf16.mxu0 %v923
    %2481 = vmatmul.mubr.bf16.gmra.mrb[0].mxu0 %v922
    %v2482 = vpop.f32.mrb[0].mxu0
    %v2483 = vadd.f32 %v409, %v2482
    %v2484 = vpop.f32.mrb[0].mxu0
    %v2485 = vadd.f32 %v413, %v2484
    %v2486 = vpop.f32.mrb[0].mxu0
    %v2487 = vadd.f32 %v409, %v2486
    %v2488 = vpop.f32.mrb[0].mxu0
    %v2489 = vadd.f32 %v413, %v2488
    %2490 = vmatprep.mubr.bf16.mxu0 %v931
    %2491 = vmatmul.mubr.bf16.gmra.mrb[0].mxu0 %v930
    %v2492 = vpop.f32.mrb[0].mxu0
    %v2493 = vadd.f32 %v409, %v2492
    %v2494 = vpop.f32.mrb[0].mxu0
    %v2495 = vadd.f32 %v413, %v2494
    %v2496 = vpop.f32.mrb[0].mxu0
    %v2497 = vadd.f32 %v409, %v2496
    %v2498 = vpop.f32.mrb[0].mxu0
    %v2499 = vadd.f32 %v413, %v2498
    %2500 = vdwg.mxu0
    %2501 = vmatprep.subr.bf16.mxu0 %v1835
    %2502 = vmatpush1.bf16.msra.mxu0 %v1834
    %2503 = vmatprep.subr.bf16.mxu0 %v1839
    %2504 = vmatpush1.bf16.msra.mxu0 %v1838
    %2505 = vmatprep.subr.bf16.mxu0 %v1843
    %2506 = vmatpush1.bf16.msra.mxu0 %v1842
    %2507 = vmatprep.subr.bf16.mxu0 %v1847
    %2508 = vmatpush1.bf16.msra.mxu0 %v1846
    %2509 = vmatprep.subr.bf16.mxu0 %v1851
    %2510 = vmatpush1.bf16.msra.mxu0 %v1850
    %2511 = vmatprep.subr.bf16.mxu0 %v1855
    %2512 = vmatpush1.bf16.msra.mxu0 %v1854
    %2513 = vmatprep.subr.bf16.mxu0 %v1859
    %2514 = vmatpush1.bf16.msra.mxu0 %v1858
    %2515 = vmatprep.subr.bf16.mxu0 %v1863
    %2516 = vmatpush1.bf16.msra.mxu0 %v1862
    %2517 = vmatprep.subr.bf16.mxu0 %v1867
    %2518 = vmatpush1.bf16.msra.mxu0 %v1866
    %2519 = vmatprep.subr.bf16.mxu0 %v1871
    %2520 = vmatpush1.bf16.msra.mxu0 %v1870
    %2521 = vmatprep.subr.bf16.mxu0 %v1875
    %2522 = vmatpush1.bf16.msra.mxu0 %v1874
    %2523 = vmatprep.subr.bf16.mxu0 %v1879
    %2524 = vmatpush1.bf16.msra.mxu0 %v1878
    %2525 = vmatprep.subr.bf16.mxu0 %v1883
    %2526 = vmatpush1.bf16.msra.mxu0 %v1882
    %2527 = vmatprep.subr.bf16.mxu0 %v1887
    %2528 = vmatpush1.bf16.msra.mxu0 %v1886
    %2529 = vmatprep.subr.bf16.mxu0 %v1891
    %2530 = vmatpush1.bf16.msra.mxu0 %v1890
    %2531 = vmatprep.subr.bf16.mxu0 %v1895
    %2532 = vmatpush1.bf16.msra.mxu0 %v1894
    %2533 = vmatprep.mubr.bf16.mxu0 %v813
    %2534 = vmatmul.mubr.bf16.gmra.mrb[0].mxu0 %v812
    %v2535 = vpop.f32.mrb[0].mxu0
    %v2536 = vadd.f32 %v2343, %v2535
    %v2537 = vpop.f32.mrb[0].mxu0
    %v2538 = vadd.f32 %v2345, %v2537
    %v2539 = vpop.f32.mrb[0].mxu0
    %v2540 = vadd.f32 %v2347, %v2539
    %v2541 = vpop.f32.mrb[0].mxu0
    %v2542 = vadd.f32 %v2349, %v2541
    %2543 = vmatprep.mubr.bf16.mxu0 %v821
    %2544 = vmatmul.mubr.bf16.gmra.mrb[0].mxu0 %v820
    %v2545 = vpop.f32.mrb[0].mxu0
    %v2546 = vadd.f32 %v2353, %v2545
    %v2547 = vpop.f32.mrb[0].mxu0
    %v2548 = vadd.f32 %v2355, %v2547
    %v2549 = vpop.f32.mrb[0].mxu0
    %v2550 = vadd.f32 %v2357, %v2549
    %v2551 = vpop.f32.mrb[0].mxu0
    %v2552 = vadd.f32 %v2359, %v2551
    %2553 = vmatprep.mubr.bf16.mxu0 %v829
    %2554 = vmatmul.mubr.bf16.gmra.mrb[0].mxu0 %v828
    %v2555 = vpop.f32.mrb[0].mxu0
    %v2556 = vadd.f32 %v2363, %v2555
    %v2557 = vpop.f32.mrb[0].mxu0
    %v2558 = vadd.f32 %v2365, %v2557
    %v2559 = vpop.f32.mrb[0].mxu0
    %v2560 = vadd.f32 %v2367, %v2559
    %v2561 = vpop.f32.mrb[0].mxu0
    %v2562 = vadd.f32 %v2369, %v2561
    %2563 = vmatprep.mubr.bf16.mxu0 %v837
    %2564 = vmatmul.mubr.bf16.gmra.mrb[0].mxu0 %v836
    %v2565 = vpop.f32.mrb[0].mxu0
    %v2566 = vadd.f32 %v2373, %v2565
    %v2567 = vpop.f32.mrb[0].mxu0
    %v2568 = vadd.f32 %v2375, %v2567
    %v2569 = vpop.f32.mrb[0].mxu0
    %v2570 = vadd.f32 %v2377, %v2569
    %v2571 = vpop.f32.mrb[0].mxu0
    %v2572 = vadd.f32 %v2379, %v2571
    %2573 = vmatprep.mubr.bf16.mxu0 %v845
    %2574 = vmatmul.mubr.bf16.gmra.mrb[0].mxu0 %v844
    %v2575 = vpop.f32.mrb[0].mxu0
    %v2576 = vadd.f32 %v2383, %v2575
    %v2577 = vpop.f32.mrb[0].mxu0
    %v2578 = vadd.f32 %v2385, %v2577
    %v2579 = vpop.f32.mrb[0].mxu0
    %v2580 = vadd.f32 %v2387, %v2579
    %v2581 = vpop.f32.mrb[0].mxu0
    %v2582 = vadd.f32 %v2389, %v2581
    %2583 = vmatprep.mubr.bf16.mxu0 %v853
    %2584 = vmatmul.mubr.bf16.gmra.mrb[0].mxu0 %v852
    %v2585 = vpop.f32.mrb[0].mxu0
    %v2586 = vadd.f32 %v2393, %v2585
    %v2587 = vpop.f32.mrb[0].mxu0
    %v2588 = vadd.f32 %v2395, %v2587
    %v2589 = vpop.f32.mrb[0].mxu0
    %v2590 = vadd.f32 %v2397, %v2589
    %v2591 = vpop.f32.mrb[0].mxu0
    %v2592 = vadd.f32 %v2399, %v2591
    %2593 = vmatprep.mubr.bf16.mxu0 %v861
    %2594 = vmatmul.mubr.bf16.gmra.mrb[0].mxu0 %v860
    %v2595 = vpop.f32.mrb[0].mxu0
    %v2596 = vadd.f32 %v2403, %v2595
    %v2597 = vpop.f32.mrb[0].mxu0
    %v2598 = vadd.f32 %v2405, %v2597
    %v2599 = vpop.f32.mrb[0].mxu0
    %v2600 = vadd.f32 %v2407, %v2599
    %v2601 = vpop.f32.mrb[0].mxu0
    %v2602 = vadd.f32 %v2409, %v2601
    %2603 = vmatprep.mubr.bf16.mxu0 %v869
    %2604 = vmatmul.mubr.bf16.gmra.mrb[0].mxu0 %v868
    %v2605 = vpop.f32.mrb[0].mxu0
    %v2606 = vadd.f32 %v2413, %v2605
    %v2607 = vpop.f32.mrb[0].mxu0
    %v2608 = vadd.f32 %v2415, %v2607
    %v2609 = vpop.f32.mrb[0].mxu0
    %v2610 = vadd.f32 %v2417, %v2609
    %v2611 = vpop.f32.mrb[0].mxu0
    %v2612 = vadd.f32 %v2419, %v2611
    %2613 = vmatprep.mubr.bf16.mxu0 %v877
    %2614 = vmatmul.mubr.bf16.gmra.mrb[0].mxu0 %v876
    %v2615 = vpop.f32.mrb[0].mxu0
    %v2616 = vadd.f32 %v2423, %v2615
    %v2617 = vpop.f32.mrb[0].mxu0
    %v2618 = vadd.f32 %v2425, %v2617
    %v2619 = vpop.f32.mrb[0].mxu0
    %v2620 = vadd.f32 %v2427, %v2619
    %v2621 = vpop.f32.mrb[0].mxu0
    %v2622 = vadd.f32 %v2429, %v2621
    %2623 = vmatprep.mubr.bf16.mxu0 %v885
    %2624 = vmatmul.mubr.bf16.gmra.mrb[0].mxu0 %v884
    %v2625 = vpop.f32.mrb[0].mxu0
    %v2626 = vadd.f32 %v2433, %v2625
    %v2627 = vpop.f32.mrb[0].mxu0
    %v2628 = vadd.f32 %v2435, %v2627
    %v2629 = vpop.f32.mrb[0].mxu0
    %v2630 = vadd.f32 %v2437, %v2629
    %v2631 = vpop.f32.mrb[0].mxu0
    %v2632 = vadd.f32 %v2439, %v2631
    %2633 = vmatprep.mubr.bf16.mxu0 %v893
    %2634 = vmatmul.mubr.bf16.gmra.mrb[0].mxu0 %v892
    %v2635 = vpop.f32.mrb[0].mxu0
    %v2636 = vadd.f32 %v2443, %v2635
    %v2637 = vpop.f32.mrb[0].mxu0
    %v2638 = vadd.f32 %v2445, %v2637
    %v2639 = vpop.f32.mrb[0].mxu0
    %v2640 = vadd.f32 %v2447, %v2639
    %v2641 = vpop.f32.mrb[0].mxu0
    %v2642 = vadd.f32 %v2449, %v2641
    %2643 = vmatprep.mubr.bf16.mxu0 %v901
    %2644 = vmatmul.mubr.bf16.gmra.mrb[0].mxu0 %v900
    %v2645 = vpop.f32.mrb[0].mxu0
    %v2646 = vadd.f32 %v2453, %v2645
    %v2647 = vpop.f32.mrb[0].mxu0
    %v2648 = vadd.f32 %v2455, %v2647
    %v2649 = vpop.f32.mrb[0].mxu0
    %v2650 = vadd.f32 %v2457, %v2649
    %v2651 = vpop.f32.mrb[0].mxu0
    %v2652 = vadd.f32 %v2459, %v2651
    %2653 = vmatprep.mubr.bf16.mxu0 %v909
    %2654 = vmatmul.mubr.bf16.gmra.mrb[0].mxu0 %v908
    %v2655 = vpop.f32.mrb[0].mxu0
    %v2656 = vadd.f32 %v2463, %v2655
    %v2657 = vpop.f32.mrb[0].mxu0
    %v2658 = vadd.f32 %v2465, %v2657
    %v2659 = vpop.f32.mrb[0].mxu0
    %v2660 = vadd.f32 %v2467, %v2659
    %v2661 = vpop.f32.mrb[0].mxu0
    %v2662 = vadd.f32 %v2469, %v2661
    %2663 = vmatprep.mubr.bf16.mxu0 %v917
    %2664 = vmatmul.mubr.bf16.gmra.mrb[0].mxu0 %v916
    %v2665 = vpop.f32.mrb[0].mxu0
    %v2666 = vadd.f32 %v2473, %v2665
    %v2667 = vpop.f32.mrb[0].mxu0
    %v2668 = vadd.f32 %v2475, %v2667
    %v2669 = vpop.f32.mrb[0].mxu0
    %v2670 = vadd.f32 %v2477, %v2669
    %v2671 = vpop.f32.mrb[0].mxu0
    %v2672 = vadd.f32 %v2479, %v2671
    %2673 = vmatprep.mubr.bf16.mxu0 %v925
    %2674 = vmatmul.mubr.bf16.gmra.mrb[0].mxu0 %v924
    %v2675 = vpop.f32.mrb[0].mxu0
    %v2676 = vadd.f32 %v2483, %v2675
    %v2677 = vpop.f32.mrb[0].mxu0
    %v2678 = vadd.f32 %v2485, %v2677
    %v2679 = vpop.f32.mrb[0].mxu0
    %v2680 = vadd.f32 %v2487, %v2679
    %v2681 = vpop.f32.mrb[0].mxu0
    %v2682 = vadd.f32 %v2489, %v2681
    %2683 = vmatprep.mubr.bf16.mxu0 %v933
    %2684 = vmatmul.mubr.bf16.gmra.mrb[0].mxu0 %v932
    %v2685 = vpop.f32.mrb[0].mxu0
    %v2686 = vadd.f32 %v2493, %v2685
    %v2687 = vpop.f32.mrb[0].mxu0
    %v2688 = vadd.f32 %v2495, %v2687
    %v2689 = vpop.f32.mrb[0].mxu0
    %v2690 = vadd.f32 %v2497, %v2689
    %v2691 = vpop.f32.mrb[0].mxu0
    %v2692 = vadd.f32 %v2499, %v2691
    %2693 = vdwg.mxu0
    %2694 = vmatprep.subr.bf16.mxu0 %v1899
    %2695 = vmatpush1.bf16.msra.mxu0 %v1898
    %2696 = vmatprep.subr.bf16.mxu0 %v1903
    %2697 = vmatpush1.bf16.msra.mxu0 %v1902
    %2698 = vmatprep.subr.bf16.mxu0 %v1907
    %2699 = vmatpush1.bf16.msra.mxu0 %v1906
    %2700 = vmatprep.subr.bf16.mxu0 %v1911
    %2701 = vmatpush1.bf16.msra.mxu0 %v1910
    %2702 = vmatprep.subr.bf16.mxu0 %v1915
    %2703 = vmatpush1.bf16.msra.mxu0 %v1914
    %2704 = vmatprep.subr.bf16.mxu0 %v1919
    %2705 = vmatpush1.bf16.msra.mxu0 %v1918
    %2706 = vmatprep.subr.bf16.mxu0 %v1923
    %2707 = vmatpush1.bf16.msra.mxu0 %v1922
    %2708 = vmatprep.subr.bf16.mxu0 %v1927
    %2709 = vmatpush1.bf16.msra.mxu0 %v1926
    %2710 = vmatprep.subr.bf16.mxu0 %v1931
    %2711 = vmatpush1.bf16.msra.mxu0 %v1930
    %2712 = vmatprep.subr.bf16.mxu0 %v1935
    %2713 = vmatpush1.bf16.msra.mxu0 %v1934
    %2714 = vmatprep.subr.bf16.mxu0 %v1939
    %2715 = vmatpush1.bf16.msra.mxu0 %v1938
    %2716 = vmatprep.subr.bf16.mxu0 %v1943
    %2717 = vmatpush1.bf16.msra.mxu0 %v1942
    %2718 = vmatprep.subr.bf16.mxu0 %v1947
    %2719 = vmatpush1.bf16.msra.mxu0 %v1946
    %2720 = vmatprep.subr.bf16.mxu0 %v1951
    %2721 = vmatpush1.bf16.msra.mxu0 %v1950
    %2722 = vmatprep.subr.bf16.mxu0 %v1955
    %2723 = vmatpush1.bf16.msra.mxu0 %v1954
    %2724 = vmatprep.subr.bf16.mxu0 %v1959
    %2725 = vmatpush1.bf16.msra.mxu0 %v1958
    %2726 = vmatprep.mubr.bf16.mxu0 %v815
    %2727 = vmatmul.mubr.bf16.gmra.mrb[0].mxu0 %v814
    %v2728 = vpop.f32.mrb[0].mxu0
    %v2729 = vadd.f32 %v2536, %v2728
    %v2730 = vpop.f32.mrb[0].mxu0
    %v2731 = vadd.f32 %v2538, %v2730
    %v2732 = vpop.f32.mrb[0].mxu0
    %v2733 = vadd.f32 %v2540, %v2732
    %v2734 = vpop.f32.mrb[0].mxu0
    %v2735 = vadd.f32 %v2542, %v2734
    %2736 = vmatprep.mubr.bf16.mxu0 %v823
    %2737 = vmatmul.mubr.bf16.gmra.mrb[0].mxu0 %v822
    %v2738 = vpop.f32.mrb[0].mxu0
    %v2739 = vadd.f32 %v2546, %v2738
    %v2740 = vpop.f32.mrb[0].mxu0
    %v2741 = vadd.f32 %v2548, %v2740
    %v2742 = vpop.f32.mrb[0].mxu0
    %v2743 = vadd.f32 %v2550, %v2742
    %v2744 = vpop.f32.mrb[0].mxu0
    %v2745 = vadd.f32 %v2552, %v2744
    %2746 = vmatprep.mubr.bf16.mxu0 %v831
    %2747 = vmatmul.mubr.bf16.gmra.mrb[0].mxu0 %v830
    %v2748 = vpop.f32.mrb[0].mxu0
    %v2749 = vadd.f32 %v2556, %v2748
    %v2750 = vpop.f32.mrb[0].mxu0
    %v2751 = vadd.f32 %v2558, %v2750
    %v2752 = vpop.f32.mrb[0].mxu0
    %v2753 = vadd.f32 %v2560, %v2752
    %v2754 = vpop.f32.mrb[0].mxu0
    %v2755 = vadd.f32 %v2562, %v2754
    %2756 = vmatprep.mubr.bf16.mxu0 %v839
    %2757 = vmatmul.mubr.bf16.gmra.mrb[0].mxu0 %v838
    %v2758 = vpop.f32.mrb[0].mxu0
    %v2759 = vadd.f32 %v2566, %v2758
    %v2760 = vpop.f32.mrb[0].mxu0
    %v2761 = vadd.f32 %v2568, %v2760
    %v2762 = vpop.f32.mrb[0].mxu0
    %v2763 = vadd.f32 %v2570, %v2762
    %v2764 = vpop.f32.mrb[0].mxu0
    %v2765 = vadd.f32 %v2572, %v2764
    %2766 = vmatprep.mubr.bf16.mxu0 %v847
    %2767 = vmatmul.mubr.bf16.gmra.mrb[0].mxu0 %v846
    %v2768 = vpop.f32.mrb[0].mxu0
    %v2769 = vadd.f32 %v2576, %v2768
    %v2770 = vpop.f32.mrb[0].mxu0
    %v2771 = vadd.f32 %v2578, %v2770
    %v2772 = vpop.f32.mrb[0].mxu0
    %v2773 = vadd.f32 %v2580, %v2772
    %v2774 = vpop.f32.mrb[0].mxu0
    %v2775 = vadd.f32 %v2582, %v2774
    %2776 = vmatprep.mubr.bf16.mxu0 %v855
    %2777 = vmatmul.mubr.bf16.gmra.mrb[0].mxu0 %v854
    %v2778 = vpop.f32.mrb[0].mxu0
    %v2779 = vadd.f32 %v2586, %v2778
    %v2780 = vpop.f32.mrb[0].mxu0
    %v2781 = vadd.f32 %v2588, %v2780
    %v2782 = vpop.f32.mrb[0].mxu0
    %v2783 = vadd.f32 %v2590, %v2782
    %v2784 = vpop.f32.mrb[0].mxu0
    %v2785 = vadd.f32 %v2592, %v2784
    %2786 = vmatprep.mubr.bf16.mxu0 %v863
    %2787 = vmatmul.mubr.bf16.gmra.mrb[0].mxu0 %v862
    %v2788 = vpop.f32.mrb[0].mxu0
    %v2789 = vadd.f32 %v2596, %v2788
    %v2790 = vpop.f32.mrb[0].mxu0
    %v2791 = vadd.f32 %v2598, %v2790
    %v2792 = vpop.f32.mrb[0].mxu0
    %v2793 = vadd.f32 %v2600, %v2792
    %v2794 = vpop.f32.mrb[0].mxu0
    %v2795 = vadd.f32 %v2602, %v2794
    %2796 = vmatprep.mubr.bf16.mxu0 %v871
    %2797 = vmatmul.mubr.bf16.gmra.mrb[0].mxu0 %v870
    %v2798 = vpop.f32.mrb[0].mxu0
    %v2799 = vadd.f32 %v2606, %v2798
    %v2800 = vpop.f32.mrb[0].mxu0
    %v2801 = vadd.f32 %v2608, %v2800
    %v2802 = vpop.f32.mrb[0].mxu0
    %v2803 = vadd.f32 %v2610, %v2802
    %v2804 = vpop.f32.mrb[0].mxu0
    %v2805 = vadd.f32 %v2612, %v2804
    %2806 = vmatprep.mubr.bf16.mxu0 %v879
    %2807 = vmatmul.mubr.bf16.gmra.mrb[0].mxu0 %v878
    %v2808 = vpop.f32.mrb[0].mxu0
    %v2809 = vadd.f32 %v2616, %v2808
    %v2810 = vpop.f32.mrb[0].mxu0
    %v2811 = vadd.f32 %v2618, %v2810
    %v2812 = vpop.f32.mrb[0].mxu0
    %v2813 = vadd.f32 %v2620, %v2812
    %v2814 = vpop.f32.mrb[0].mxu0
    %v2815 = vadd.f32 %v2622, %v2814
    %2816 = vmatprep.mubr.bf16.mxu0 %v887
    %2817 = vmatmul.mubr.bf16.gmra.mrb[0].mxu0 %v886
    %v2818 = vpop.f32.mrb[0].mxu0
    %v2819 = vadd.f32 %v2626, %v2818
    %v2820 = vpop.f32.mrb[0].mxu0
    %v2821 = vadd.f32 %v2628, %v2820
    %v2822 = vpop.f32.mrb[0].mxu0
    %v2823 = vadd.f32 %v2630, %v2822
    %v2824 = vpop.f32.mrb[0].mxu0
    %v2825 = vadd.f32 %v2632, %v2824
    %2826 = vmatprep.mubr.bf16.mxu0 %v895
    %2827 = vmatmul.mubr.bf16.gmra.mrb[0].mxu0 %v894
    %v2828 = vpop.f32.mrb[0].mxu0
    %v2829 = vadd.f32 %v2636, %v2828
    %v2830 = vpop.f32.mrb[0].mxu0
    %v2831 = vadd.f32 %v2638, %v2830
    %v2832 = vpop.f32.mrb[0].mxu0
    %v2833 = vadd.f32 %v2640, %v2832
    %v2834 = vpop.f32.mrb[0].mxu0
    %v2835 = vadd.f32 %v2642, %v2834
    %2836 = vmatprep.mubr.bf16.mxu0 %v903
    %2837 = vmatmul.mubr.bf16.gmra.mrb[0].mxu0 %v902
    %v2838 = vpop.f32.mrb[0].mxu0
    %v2839 = vadd.f32 %v2646, %v2838
    %v2840 = vpop.f32.mrb[0].mxu0
    %v2841 = vadd.f32 %v2648, %v2840
    %v2842 = vpop.f32.mrb[0].mxu0
    %v2843 = vadd.f32 %v2650, %v2842
    %v2844 = vpop.f32.mrb[0].mxu0
    %v2845 = vadd.f32 %v2652, %v2844
    %2846 = vmatprep.mubr.bf16.mxu0 %v911
    %2847 = vmatmul.mubr.bf16.gmra.mrb[0].mxu0 %v910
    %v2848 = vpop.f32.mrb[0].mxu0
    %v2849 = vadd.f32 %v2656, %v2848
    %v2850 = vpop.f32.mrb[0].mxu0
    %v2851 = vadd.f32 %v2658, %v2850
    %v2852 = vpop.f32.mrb[0].mxu0
    %v2853 = vadd.f32 %v2660, %v2852
    %v2854 = vpop.f32.mrb[0].mxu0
    %v2855 = vadd.f32 %v2662, %v2854
    %2856 = vmatprep.mubr.bf16.mxu0 %v919
    %2857 = vmatmul.mubr.bf16.gmra.mrb[0].mxu0 %v918
    %v2858 = vpop.f32.mrb[0].mxu0
    %v2859 = vadd.f32 %v2666, %v2858
    %v2860 = vpop.f32.mrb[0].mxu0
    %v2861 = vadd.f32 %v2668, %v2860
    %v2862 = vpop.f32.mrb[0].mxu0
    %v2863 = vadd.f32 %v2670, %v2862
    %v2864 = vpop.f32.mrb[0].mxu0
    %v2865 = vadd.f32 %v2672, %v2864
    %2866 = vmatprep.mubr.bf16.mxu0 %v927
    %2867 = vmatmul.mubr.bf16.gmra.mrb[0].mxu0 %v926
    %v2868 = vpop.f32.mrb[0].mxu0
    %v2869 = vadd.f32 %v2676, %v2868
    %v2870 = vpop.f32.mrb[0].mxu0
    %v2871 = vadd.f32 %v2678, %v2870
    %v2872 = vpop.f32.mrb[0].mxu0
    %v2873 = vadd.f32 %v2680, %v2872
    %v2874 = vpop.f32.mrb[0].mxu0
    %v2875 = vadd.f32 %v2682, %v2874
    %2876 = vmatprep.mubr.bf16.mxu0 %v935
    %2877 = vmatmul.mubr.bf16.gmra.mrb[0].mxu0 %v934
    %v2878 = vpop.f32.mrb[0].mxu0
    %v2879 = vadd.f32 %v2686, %v2878
    %v2880 = vpop.f32.mrb[0].mxu0
    %v2881 = vadd.f32 %v2688, %v2880
    %v2882 = vpop.f32.mrb[0].mxu0
    %v2883 = vadd.f32 %v2690, %v2882
    %v2884 = vpop.f32.mrb[0].mxu0
    %v2885 = vadd.f32 %v2692, %v2884
    %2886 = vdwg.mxu0
    %2887 = vmatprep.subr.bf16.mxu0 %v1963
    %2888 = vmatpush1.bf16.msra.mxu0 %v1962
    %2889 = vmatprep.subr.bf16.mxu0 %v1967
    %2890 = vmatpush1.bf16.msra.mxu0 %v1966
    %2891 = vmatprep.subr.bf16.mxu0 %v1971
    %2892 = vmatpush1.bf16.msra.mxu0 %v1970
    %2893 = vmatprep.subr.bf16.mxu0 %v1975
    %2894 = vmatpush1.bf16.msra.mxu0 %v1974
    %2895 = vmatprep.subr.bf16.mxu0 %v1979
    %2896 = vmatpush1.bf16.msra.mxu0 %v1978
    %2897 = vmatprep.subr.bf16.mxu0 %v1983
    %2898 = vmatpush1.bf16.msra.mxu0 %v1982
    %2899 = vmatprep.subr.bf16.mxu0 %v1987
    %2900 = vmatpush1.bf16.msra.mxu0 %v1986
    %2901 = vmatprep.subr.bf16.mxu0 %v1991
    %2902 = vmatpush1.bf16.msra.mxu0 %v1990
    %2903 = vmatprep.subr.bf16.mxu0 %v1995
    %2904 = vmatpush1.bf16.msra.mxu0 %v1994
    %2905 = vmatprep.subr.bf16.mxu0 %v1999
    %2906 = vmatpush1.bf16.msra.mxu0 %v1998
    %2907 = vmatprep.subr.bf16.mxu0 %v2003
    %2908 = vmatpush1.bf16.msra.mxu0 %v2002
    %2909 = vmatprep.subr.bf16.mxu0 %v2300
    %2910 = vmatpush1.bf16.msra.mxu0 %v2297
    %2911 = vmatprep.subr.bf16.mxu0 0
    %2912 = vmatpush1.bf16.msra.mxu0 0
    %2913 = vmatprep.subr.bf16.mxu0 0
    %2914 = vmatpush1.bf16.msra.mxu0 0
    %2915 = vmatprep.subr.bf16.mxu0 0
    %2916 = vmatpush1.bf16.msra.mxu0 0
    %2917 = vmatprep.subr.bf16.mxu0 0
    %2918 = vmatpush1.bf16.msra.mxu0 0
    %2919 = vmatprep.mubr.bf16.mxu0 %v2248
    %2920 = vmatmul.mubr.bf16.gmra.mrb[0].mxu0 %v816
    %v2921 = vpop.f32.mrb[0].mxu0
    %v2922 = vadd.f32 %v2729, %v2921
    %v2923 = vpop.f32.mrb[0].mxu0
    %v2924 = vadd.f32 %v2731, %v2923
    %v2925 = vpop.f32.mrb[0].mxu0
    %v2926 = vadd.f32 %v2733, %v2925
    %v2927 = vpop.f32.mrb[0].mxu0
    %v2928 = vadd.f32 %v2735, %v2927
    %2929 = vmatprep.mubr.bf16.mxu0 %v2251
    %2930 = vmatmul.mubr.bf16.gmra.mrb[0].mxu0 %v824
    %v2931 = vpop.f32.mrb[0].mxu0
    %v2932 = vadd.f32 %v2739, %v2931
    %v2933 = vpop.f32.mrb[0].mxu0
    %v2934 = vadd.f32 %v2741, %v2933
    %v2935 = vpop.f32.mrb[0].mxu0
    %v2936 = vadd.f32 %v2743, %v2935
    %v2937 = vpop.f32.mrb[0].mxu0
    %v2938 = vadd.f32 %v2745, %v2937
    %2939 = vmatprep.mubr.bf16.mxu0 %v2254
    %2940 = vmatmul.mubr.bf16.gmra.mrb[0].mxu0 %v832
    %v2941 = vpop.f32.mrb[0].mxu0
    %v2942 = vadd.f32 %v2749, %v2941
    %v2943 = vpop.f32.mrb[0].mxu0
    %v2944 = vadd.f32 %v2751, %v2943
    %v2945 = vpop.f32.mrb[0].mxu0
    %v2946 = vadd.f32 %v2753, %v2945
    %v2947 = vpop.f32.mrb[0].mxu0
    %v2948 = vadd.f32 %v2755, %v2947
    %2949 = vmatprep.mubr.bf16.mxu0 %v2257
    %2950 = vmatmul.mubr.bf16.gmra.mrb[0].mxu0 %v840
    %v2951 = vpop.f32.mrb[0].mxu0
    %v2952 = vadd.f32 %v2759, %v2951
    %v2953 = vpop.f32.mrb[0].mxu0
    %v2954 = vadd.f32 %v2761, %v2953
    %v2955 = vpop.f32.mrb[0].mxu0
    %v2956 = vadd.f32 %v2763, %v2955
    %v2957 = vpop.f32.mrb[0].mxu0
    %v2958 = vadd.f32 %v2765, %v2957
    %2959 = vmatprep.mubr.bf16.mxu0 %v2260
    %2960 = vmatmul.mubr.bf16.gmra.mrb[0].mxu0 %v848
    %v2961 = vpop.f32.mrb[0].mxu0
    %v2962 = vadd.f32 %v2769, %v2961
    %v2963 = vpop.f32.mrb[0].mxu0
    %v2964 = vadd.f32 %v2771, %v2963
    %v2965 = vpop.f32.mrb[0].mxu0
    %v2966 = vadd.f32 %v2773, %v2965
    %v2967 = vpop.f32.mrb[0].mxu0
    %v2968 = vadd.f32 %v2775, %v2967
    %2969 = vmatprep.mubr.bf16.mxu0 %v2263
    %2970 = vmatmul.mubr.bf16.gmra.mrb[0].mxu0 %v856
    %v2971 = vpop.f32.mrb[0].mxu0
    %v2972 = vadd.f32 %v2779, %v2971
    %v2973 = vpop.f32.mrb[0].mxu0
    %v2974 = vadd.f32 %v2781, %v2973
    %v2975 = vpop.f32.mrb[0].mxu0
    %v2976 = vadd.f32 %v2783, %v2975
    %v2977 = vpop.f32.mrb[0].mxu0
    %v2978 = vadd.f32 %v2785, %v2977
    %2979 = vmatprep.mubr.bf16.mxu0 %v2266
    %2980 = vmatmul.mubr.bf16.gmra.mrb[0].mxu0 %v864
    %v2981 = vpop.f32.mrb[0].mxu0
    %v2982 = vadd.f32 %v2789, %v2981
    %v2983 = vpop.f32.mrb[0].mxu0
    %v2984 = vadd.f32 %v2791, %v2983
    %v2985 = vpop.f32.mrb[0].mxu0
    %v2986 = vadd.f32 %v2793, %v2985
    %v2987 = vpop.f32.mrb[0].mxu0
    %v2988 = vadd.f32 %v2795, %v2987
    %2989 = vmatprep.mubr.bf16.mxu0 %v2269
    %2990 = vmatmul.mubr.bf16.gmra.mrb[0].mxu0 %v872
    %v2991 = vpop.f32.mrb[0].mxu0
    %v2992 = vadd.f32 %v2799, %v2991
    %v2993 = vpop.f32.mrb[0].mxu0
    %v2994 = vadd.f32 %v2801, %v2993
    %v2995 = vpop.f32.mrb[0].mxu0
    %v2996 = vadd.f32 %v2803, %v2995
    %v2997 = vpop.f32.mrb[0].mxu0
    %v2998 = vadd.f32 %v2805, %v2997
    %2999 = vmatprep.mubr.bf16.mxu0 %v2272
    %3000 = vmatmul.mubr.bf16.gmra.mrb[0].mxu0 %v880
    %v3001 = vpop.f32.mrb[0].mxu0
    %v3002 = vadd.f32 %v2809, %v3001
    %v3003 = vpop.f32.mrb[0].mxu0
    %v3004 = vadd.f32 %v2811, %v3003
    %v3005 = vpop.f32.mrb[0].mxu0
    %v3006 = vadd.f32 %v2813, %v3005
    %v3007 = vpop.f32.mrb[0].mxu0
    %v3008 = vadd.f32 %v2815, %v3007
    %3009 = vmatprep.mubr.bf16.mxu0 %v2275
    %3010 = vmatmul.mubr.bf16.gmra.mrb[0].mxu0 %v888
    %v3011 = vpop.f32.mrb[0].mxu0
    %v3012 = vadd.f32 %v2819, %v3011
    %v3013 = vpop.f32.mrb[0].mxu0
    %v3014 = vadd.f32 %v2821, %v3013
    %v3015 = vpop.f32.mrb[0].mxu0
    %v3016 = vadd.f32 %v2823, %v3015
    %v3017 = vpop.f32.mrb[0].mxu0
    %v3018 = vadd.f32 %v2825, %v3017
    %3019 = vmatprep.mubr.bf16.mxu0 %v2278
    %3020 = vmatmul.mubr.bf16.gmra.mrb[0].mxu0 %v896
    %v3021 = vpop.f32.mrb[0].mxu0
    %v3022 = vadd.f32 %v2829, %v3021
    %v3023 = vpop.f32.mrb[0].mxu0
    %v3024 = vadd.f32 %v2831, %v3023
    %v3025 = vpop.f32.mrb[0].mxu0
    %v3026 = vadd.f32 %v2833, %v3025
    %v3027 = vpop.f32.mrb[0].mxu0
    %v3028 = vadd.f32 %v2835, %v3027
    %3029 = vmatprep.mubr.bf16.mxu0 %v2281
    %3030 = vmatmul.mubr.bf16.gmra.mrb[0].mxu0 %v904
    %v3031 = vpop.f32.mrb[0].mxu0
    %v3032 = vadd.f32 %v2839, %v3031
    %v3033 = vpop.f32.mrb[0].mxu0
    %v3034 = vadd.f32 %v2841, %v3033
    %v3035 = vpop.f32.mrb[0].mxu0
    %v3036 = vadd.f32 %v2843, %v3035
    %v3037 = vpop.f32.mrb[0].mxu0
    %v3038 = vadd.f32 %v2845, %v3037
    %3039 = vmatprep.mubr.bf16.mxu0 %v2284
    %3040 = vmatmul.mubr.bf16.gmra.mrb[0].mxu0 %v912
    %v3041 = vpop.f32.mrb[0].mxu0
    %v3042 = vadd.f32 %v2849, %v3041
    %v3043 = vpop.f32.mrb[0].mxu0
    %v3044 = vadd.f32 %v2851, %v3043
    %v3045 = vpop.f32.mrb[0].mxu0
    %v3046 = vadd.f32 %v2853, %v3045
    %v3047 = vpop.f32.mrb[0].mxu0
    %v3048 = vadd.f32 %v2855, %v3047
    %3049 = vmatprep.mubr.bf16.mxu0 %v2287
    %3050 = vmatmul.mubr.bf16.gmra.mrb[0].mxu0 %v920
    %v3051 = vpop.f32.mrb[0].mxu0
    %v3052 = vadd.f32 %v2859, %v3051
    %v3053 = vpop.f32.mrb[0].mxu0
    %v3054 = vadd.f32 %v2861, %v3053
    %v3055 = vpop.f32.mrb[0].mxu0
    %v3056 = vadd.f32 %v2863, %v3055
    %v3057 = vpop.f32.mrb[0].mxu0
    %v3058 = vadd.f32 %v2865, %v3057
    %3059 = vmatprep.mubr.bf16.mxu0 %v2290
    %3060 = vmatmul.mubr.bf16.gmra.mrb[0].mxu0 %v928
    %v3061 = vpop.f32.mrb[0].mxu0
    %v3062 = vadd.f32 %v2869, %v3061
    %v3063 = vpop.f32.mrb[0].mxu0
    %v3064 = vadd.f32 %v2871, %v3063
    %v3065 = vpop.f32.mrb[0].mxu0
    %v3066 = vadd.f32 %v2873, %v3065
    %v3067 = vpop.f32.mrb[0].mxu0
    %v3068 = vadd.f32 %v2875, %v3067
    %3069 = vmatprep.mubr.bf16.mxu0 %v2293
    %3070 = vmatmul.mubr.bf16.gmra.mrb[0].mxu0 %v936
    %v3071 = vpop.f32.mrb[0].mxu0
    %v3072 = vadd.f32 %v2879, %v3071
    %v3073 = vpop.f32.mrb[0].mxu0
    %v3074 = vadd.f32 %v2881, %v3073
    %v3075 = vpop.f32.mrb[0].mxu0
    %v3076 = vadd.f32 %v2883, %v3075
    %v3077 = vpop.f32.mrb[0].mxu0
    %v3078 = vadd.f32 %v2885, %v3077
    %3079 = vdwg.mxu0
    %3080 = vmatprep.subr.bf16.mxu0 %v1773
    %3081 = vmatpush1.bf16.msra.mxu0 %v1772
    %3082 = vmatprep.subr.bf16.mxu0 %v1777
    %3083 = vmatpush1.bf16.msra.mxu0 %v1776
    %3084 = vmatprep.subr.bf16.mxu0 %v1781
    %3085 = vmatpush1.bf16.msra.mxu0 %v1780
    %3086 = vmatprep.subr.bf16.mxu0 %v1785
    %3087 = vmatpush1.bf16.msra.mxu0 %v1784
    %3088 = vmatprep.subr.bf16.mxu0 %v1789
    %3089 = vmatpush1.bf16.msra.mxu0 %v1788
    %3090 = vmatprep.subr.bf16.mxu0 %v1793
    %3091 = vmatpush1.bf16.msra.mxu0 %v1792
    %3092 = vmatprep.subr.bf16.mxu0 %v1797
    %3093 = vmatpush1.bf16.msra.mxu0 %v1796
    %3094 = vmatprep.subr.bf16.mxu0 %v1801
    %3095 = vmatpush1.bf16.msra.mxu0 %v1800
    %3096 = vmatprep.subr.bf16.mxu0 %v1805
    %3097 = vmatpush1.bf16.msra.mxu0 %v1804
    %3098 = vmatprep.subr.bf16.mxu0 %v1809
    %3099 = vmatpush1.bf16.msra.mxu0 %v1808
    %3100 = vmatprep.subr.bf16.mxu0 %v1813
    %3101 = vmatpush1.bf16.msra.mxu0 %v1812
    %3102 = vmatprep.subr.bf16.mxu0 %v1817
    %3103 = vmatpush1.bf16.msra.mxu0 %v1816
    %3104 = vmatprep.subr.bf16.mxu0 %v1821
    %3105 = vmatpush1.bf16.msra.mxu0 %v1820
    %3106 = vmatprep.subr.bf16.mxu0 %v1825
    %3107 = vmatpush1.bf16.msra.mxu0 %v1824
    %3108 = vmatprep.subr.bf16.mxu0 %v1829
    %3109 = vmatpush1.bf16.msra.mxu0 %v1828
    %3110 = vmatprep.subr.bf16.mxu0 %v1833
    %3111 = vmatpush1.bf16.msra.mxu0 %v1832
    %3112 = vmatprep.mubr.bf16.mxu0 %v811
    %3113 = vmatmul.mubr.bf16.gmra.mrb[0].mxu0 %v810
    %v3114 = vpop.f32.mrb[0].mxu0
    %v3115 = vadd.f32 %v417, %v3114
    %v3116 = vpop.f32.mrb[0].mxu0
    %v3117 = vadd.f32 %v421, %v3116
    %v3118 = vpop.f32.mrb[0].mxu0
    %v3119 = vadd.f32 %v417, %v3118
    %v3120 = vpop.f32.mrb[0].mxu0
    %v3121 = vadd.f32 %v421, %v3120
    %3122 = vmatprep.mubr.bf16.mxu0 %v819
    %3123 = vmatmul.mubr.bf16.gmra.mrb[0].mxu0 %v818
    %v3124 = vpop.f32.mrb[0].mxu0
    %v3125 = vadd.f32 %v417, %v3124
    %v3126 = vpop.f32.mrb[0].mxu0
    %v3127 = vadd.f32 %v421, %v3126
    %v3128 = vpop.f32.mrb[0].mxu0
    %v3129 = vadd.f32 %v417, %v3128
    %v3130 = vpop.f32.mrb[0].mxu0
    %v3131 = vadd.f32 %v421, %v3130
    %3132 = vmatprep.mubr.bf16.mxu0 %v827
    %3133 = vmatmul.mubr.bf16.gmra.mrb[0].mxu0 %v826
    %v3134 = vpop.f32.mrb[0].mxu0
    %v3135 = vadd.f32 %v417, %v3134
    %v3136 = vpop.f32.mrb[0].mxu0
    %v3137 = vadd.f32 %v421, %v3136
    %v3138 = vpop.f32.mrb[0].mxu0
    %v3139 = vadd.f32 %v417, %v3138
    %v3140 = vpop.f32.mrb[0].mxu0
    %v3141 = vadd.f32 %v421, %v3140
    %3142 = vmatprep.mubr.bf16.mxu0 %v835
    %3143 = vmatmul.mubr.bf16.gmra.mrb[0].mxu0 %v834
    %v3144 = vpop.f32.mrb[0].mxu0
    %v3145 = vadd.f32 %v417, %v3144
    %v3146 = vpop.f32.mrb[0].mxu0
    %v3147 = vadd.f32 %v421, %v3146
    %v3148 = vpop.f32.mrb[0].mxu0
    %v3149 = vadd.f32 %v417, %v3148
    %v3150 = vpop.f32.mrb[0].mxu0
    %v3151 = vadd.f32 %v421, %v3150
    %3152 = vmatprep.mubr.bf16.mxu0 %v843
    %3153 = vmatmul.mubr.bf16.gmra.mrb[0].mxu0 %v842
    %v3154 = vpop.f32.mrb[0].mxu0
    %v3155 = vadd.f32 %v417, %v3154
    %v3156 = vpop.f32.mrb[0].mxu0
    %v3157 = vadd.f32 %v421, %v3156
    %v3158 = vpop.f32.mrb[0].mxu0
    %v3159 = vadd.f32 %v417, %v3158
    %v3160 = vpop.f32.mrb[0].mxu0
    %v3161 = vadd.f32 %v421, %v3160
    %3162 = vmatprep.mubr.bf16.mxu0 %v851
    %3163 = vmatmul.mubr.bf16.gmra.mrb[0].mxu0 %v850
    %v3164 = vpop.f32.mrb[0].mxu0
    %v3165 = vadd.f32 %v417, %v3164
    %v3166 = vpop.f32.mrb[0].mxu0
    %v3167 = vadd.f32 %v421, %v3166
    %v3168 = vpop.f32.mrb[0].mxu0
    %v3169 = vadd.f32 %v417, %v3168
    %v3170 = vpop.f32.mrb[0].mxu0
    %v3171 = vadd.f32 %v421, %v3170
    %3172 = vmatprep.mubr.bf16.mxu0 %v859
    %3173 = vmatmul.mubr.bf16.gmra.mrb[0].mxu0 %v858
    %v3174 = vpop.f32.mrb[0].mxu0
    %v3175 = vadd.f32 %v417, %v3174
    %v3176 = vpop.f32.mrb[0].mxu0
    %v3177 = vadd.f32 %v421, %v3176
    %v3178 = vpop.f32.mrb[0].mxu0
    %v3179 = vadd.f32 %v417, %v3178
    %v3180 = vpop.f32.mrb[0].mxu0
    %v3181 = vadd.f32 %v421, %v3180
    %3182 = vmatprep.mubr.bf16.mxu0 %v867
    %3183 = vmatmul.mubr.bf16.gmra.mrb[0].mxu0 %v866
    %v3184 = vpop.f32.mrb[0].mxu0
    %v3185 = vadd.f32 %v417, %v3184
    %v3186 = vpop.f32.mrb[0].mxu0
    %v3187 = vadd.f32 %v421, %v3186
    %v3188 = vpop.f32.mrb[0].mxu0
    %v3189 = vadd.f32 %v417, %v3188
    %v3190 = vpop.f32.mrb[0].mxu0
    %v3191 = vadd.f32 %v421, %v3190
    %3192 = vmatprep.mubr.bf16.mxu0 %v875
    %3193 = vmatmul.mubr.bf16.gmra.mrb[0].mxu0 %v874
    %v3194 = vpop.f32.mrb[0].mxu0
    %v3195 = vadd.f32 %v417, %v3194
    %v3196 = vpop.f32.mrb[0].mxu0
    %v3197 = vadd.f32 %v421, %v3196
    %v3198 = vpop.f32.mrb[0].mxu0
    %v3199 = vadd.f32 %v417, %v3198
    %v3200 = vpop.f32.mrb[0].mxu0
    %v3201 = vadd.f32 %v421, %v3200
    %3202 = vmatprep.mubr.bf16.mxu0 %v883
    %3203 = vmatmul.mubr.bf16.gmra.mrb[0].mxu0 %v882
    %v3204 = vpop.f32.mrb[0].mxu0
    %v3205 = vadd.f32 %v417, %v3204
    %v3206 = vpop.f32.mrb[0].mxu0
    %v3207 = vadd.f32 %v421, %v3206
    %v3208 = vpop.f32.mrb[0].mxu0
    %v3209 = vadd.f32 %v417, %v3208
    %v3210 = vpop.f32.mrb[0].mxu0
    %v3211 = vadd.f32 %v421, %v3210
    %3212 = vmatprep.mubr.bf16.mxu0 %v891
    %3213 = vmatmul.mubr.bf16.gmra.mrb[0].mxu0 %v890
    %v3214 = vpop.f32.mrb[0].mxu0
    %v3215 = vadd.f32 %v417, %v3214
    %v3216 = vpop.f32.mrb[0].mxu0
    %v3217 = vadd.f32 %v421, %v3216
    %v3218 = vpop.f32.mrb[0].mxu0
    %v3219 = vadd.f32 %v417, %v3218
    %v3220 = vpop.f32.mrb[0].mxu0
    %v3221 = vadd.f32 %v421, %v3220
    %3222 = vmatprep.mubr.bf16.mxu0 %v899
    %3223 = vmatmul.mubr.bf16.gmra.mrb[0].mxu0 %v898
    %v3224 = vpop.f32.mrb[0].mxu0
    %v3225 = vadd.f32 %v417, %v3224
    %v3226 = vpop.f32.mrb[0].mxu0
    %v3227 = vadd.f32 %v421, %v3226
    %v3228 = vpop.f32.mrb[0].mxu0
    %v3229 = vadd.f32 %v417, %v3228
    %v3230 = vpop.f32.mrb[0].mxu0
    %v3231 = vadd.f32 %v421, %v3230
    %3232 = vmatprep.mubr.bf16.mxu0 %v907
    %3233 = vmatmul.mubr.bf16.gmra.mrb[0].mxu0 %v906
    %v3234 = vpop.f32.mrb[0].mxu0
    %v3235 = vadd.f32 %v417, %v3234
    %v3236 = vpop.f32.mrb[0].mxu0
    %v3237 = vadd.f32 %v421, %v3236
    %v3238 = vpop.f32.mrb[0].mxu0
    %v3239 = vadd.f32 %v417, %v3238
    %v3240 = vpop.f32.mrb[0].mxu0
    %v3241 = vadd.f32 %v421, %v3240
    %3242 = vmatprep.mubr.bf16.mxu0 %v915
    %3243 = vmatmul.mubr.bf16.gmra.mrb[0].mxu0 %v914
    %v3244 = vpop.f32.mrb[0].mxu0
    %v3245 = vadd.f32 %v417, %v3244
    %v3246 = vpop.f32.mrb[0].mxu0
    %v3247 = vadd.f32 %v421, %v3246
    %v3248 = vpop.f32.mrb[0].mxu0
    %v3249 = vadd.f32 %v417, %v3248
    %v3250 = vpop.f32.mrb[0].mxu0
    %v3251 = vadd.f32 %v421, %v3250
    %3252 = vmatprep.mubr.bf16.mxu0 %v923
    %3253 = vmatmul.mubr.bf16.gmra.mrb[0].mxu0 %v922
    %v3254 = vpop.f32.mrb[0].mxu0
    %v3255 = vadd.f32 %v417, %v3254
    %v3256 = vpop.f32.mrb[0].mxu0
    %v3257 = vadd.f32 %v421, %v3256
    %v3258 = vpop.f32.mrb[0].mxu0
    %v3259 = vadd.f32 %v417, %v3258
    %v3260 = vpop.f32.mrb[0].mxu0
    %v3261 = vadd.f32 %v421, %v3260
    %3262 = vmatprep.mubr.bf16.mxu0 %v931
    %3263 = vmatmul.mubr.bf16.gmra.mrb[0].mxu0 %v930
    %v3264 = vpop.f32.mrb[0].mxu0
    %v3265 = vadd.f32 %v417, %v3264
    %v3266 = vpop.f32.mrb[0].mxu0
    %v3267 = vadd.f32 %v421, %v3266
    %v3268 = vpop.f32.mrb[0].mxu0
    %v3269 = vadd.f32 %v417, %v3268
    %v3270 = vpop.f32.mrb[0].mxu0
    %v3271 = vadd.f32 %v421, %v3270
    %3272 = vdwg.mxu0
    %3273 = vmatprep.subr.bf16.mxu0 %v1837
    %3274 = vmatpush1.bf16.msra.mxu0 %v1836
    %3275 = vmatprep.subr.bf16.mxu0 %v1841
    %3276 = vmatpush1.bf16.msra.mxu0 %v1840
    %3277 = vmatprep.subr.bf16.mxu0 %v1845
    %3278 = vmatpush1.bf16.msra.mxu0 %v1844
    %3279 = vmatprep.subr.bf16.mxu0 %v1849
    %3280 = vmatpush1.bf16.msra.mxu0 %v1848
    %3281 = vmatprep.subr.bf16.mxu0 %v1853
    %3282 = vmatpush1.bf16.msra.mxu0 %v1852
    %3283 = vmatprep.subr.bf16.mxu0 %v1857
    %3284 = vmatpush1.bf16.msra.mxu0 %v1856
    %3285 = vmatprep.subr.bf16.mxu0 %v1861
    %3286 = vmatpush1.bf16.msra.mxu0 %v1860
    %3287 = vmatprep.subr.bf16.mxu0 %v1865
    %3288 = vmatpush1.bf16.msra.mxu0 %v1864
    %3289 = vmatprep.subr.bf16.mxu0 %v1869
    %3290 = vmatpush1.bf16.msra.mxu0 %v1868
    %3291 = vmatprep.subr.bf16.mxu0 %v1873
    %3292 = vmatpush1.bf16.msra.mxu0 %v1872
    %3293 = vmatprep.subr.bf16.mxu0 %v1877
    %3294 = vmatpush1.bf16.msra.mxu0 %v1876
    %3295 = vmatprep.subr.bf16.mxu0 %v1881
    %3296 = vmatpush1.bf16.msra.mxu0 %v1880
    %3297 = vmatprep.subr.bf16.mxu0 %v1885
    %3298 = vmatpush1.bf16.msra.mxu0 %v1884
    %3299 = vmatprep.subr.bf16.mxu0 %v1889
    %3300 = vmatpush1.bf16.msra.mxu0 %v1888
    %3301 = vmatprep.subr.bf16.mxu0 %v1893
    %3302 = vmatpush1.bf16.msra.mxu0 %v1892
    %3303 = vmatprep.subr.bf16.mxu0 %v1897
    %3304 = vmatpush1.bf16.msra.mxu0 %v1896
    %3305 = vmatprep.mubr.bf16.mxu0 %v813
    %3306 = vmatmul.mubr.bf16.gmra.mrb[0].mxu0 %v812
    %v3307 = vpop.f32.mrb[0].mxu0
    %v3308 = vadd.f32 %v3115, %v3307
    %v3309 = vpop.f32.mrb[0].mxu0
    %v3310 = vadd.f32 %v3117, %v3309
    %v3311 = vpop.f32.mrb[0].mxu0
    %v3312 = vadd.f32 %v3119, %v3311
    %v3313 = vpop.f32.mrb[0].mxu0
    %v3314 = vadd.f32 %v3121, %v3313
    %3315 = vmatprep.mubr.bf16.mxu0 %v821
    %3316 = vmatmul.mubr.bf16.gmra.mrb[0].mxu0 %v820
    %v3317 = vpop.f32.mrb[0].mxu0
    %v3318 = vadd.f32 %v3125, %v3317
    %v3319 = vpop.f32.mrb[0].mxu0
    %v3320 = vadd.f32 %v3127, %v3319
    %v3321 = vpop.f32.mrb[0].mxu0
    %v3322 = vadd.f32 %v3129, %v3321
    %v3323 = vpop.f32.mrb[0].mxu0
    %v3324 = vadd.f32 %v3131, %v3323
    %3325 = vmatprep.mubr.bf16.mxu0 %v829
    %3326 = vmatmul.mubr.bf16.gmra.mrb[0].mxu0 %v828
    %v3327 = vpop.f32.mrb[0].mxu0
    %v3328 = vadd.f32 %v3135, %v3327
    %v3329 = vpop.f32.mrb[0].mxu0
    %v3330 = vadd.f32 %v3137, %v3329
    %v3331 = vpop.f32.mrb[0].mxu0
    %v3332 = vadd.f32 %v3139, %v3331
    %v3333 = vpop.f32.mrb[0].mxu0
    %v3334 = vadd.f32 %v3141, %v3333
    %3335 = vmatprep.mubr.bf16.mxu0 %v837
    %3336 = vmatmul.mubr.bf16.gmra.mrb[0].mxu0 %v836
    %v3337 = vpop.f32.mrb[0].mxu0
    %v3338 = vadd.f32 %v3145, %v3337
    %v3339 = vpop.f32.mrb[0].mxu0
    %v3340 = vadd.f32 %v3147, %v3339
    %v3341 = vpop.f32.mrb[0].mxu0
    %v3342 = vadd.f32 %v3149, %v3341
    %v3343 = vpop.f32.mrb[0].mxu0
    %v3344 = vadd.f32 %v3151, %v3343
    %3345 = vmatprep.mubr.bf16.mxu0 %v845
    %3346 = vmatmul.mubr.bf16.gmra.mrb[0].mxu0 %v844
    %v3347 = vpop.f32.mrb[0].mxu0
    %v3348 = vadd.f32 %v3155, %v3347
    %v3349 = vpop.f32.mrb[0].mxu0
    %v3350 = vadd.f32 %v3157, %v3349
    %v3351 = vpop.f32.mrb[0].mxu0
    %v3352 = vadd.f32 %v3159, %v3351
    %v3353 = vpop.f32.mrb[0].mxu0
    %v3354 = vadd.f32 %v3161, %v3353
    %3355 = vmatprep.mubr.bf16.mxu0 %v853
    %3356 = vmatmul.mubr.bf16.gmra.mrb[0].mxu0 %v852
    %v3357 = vpop.f32.mrb[0].mxu0
    %v3358 = vadd.f32 %v3165, %v3357
    %v3359 = vpop.f32.mrb[0].mxu0
    %v3360 = vadd.f32 %v3167, %v3359
    %v3361 = vpop.f32.mrb[0].mxu0
    %v3362 = vadd.f32 %v3169, %v3361
    %v3363 = vpop.f32.mrb[0].mxu0
    %v3364 = vadd.f32 %v3171, %v3363
    %3365 = vmatprep.mubr.bf16.mxu0 %v861
    %3366 = vmatmul.mubr.bf16.gmra.mrb[0].mxu0 %v860
    %v3367 = vpop.f32.mrb[0].mxu0
    %v3368 = vadd.f32 %v3175, %v3367
    %v3369 = vpop.f32.mrb[0].mxu0
    %v3370 = vadd.f32 %v3177, %v3369
    %v3371 = vpop.f32.mrb[0].mxu0
    %v3372 = vadd.f32 %v3179, %v3371
    %v3373 = vpop.f32.mrb[0].mxu0
    %v3374 = vadd.f32 %v3181, %v3373
    %3375 = vmatprep.mubr.bf16.mxu0 %v869
    %3376 = vmatmul.mubr.bf16.gmra.mrb[0].mxu0 %v868
    %v3377 = vpop.f32.mrb[0].mxu0
    %v3378 = vadd.f32 %v3185, %v3377
    %v3379 = vpop.f32.mrb[0].mxu0
    %v3380 = vadd.f32 %v3187, %v3379
    %v3381 = vpop.f32.mrb[0].mxu0
    %v3382 = vadd.f32 %v3189, %v3381
    %v3383 = vpop.f32.mrb[0].mxu0
    %v3384 = vadd.f32 %v3191, %v3383
    %3385 = vmatprep.mubr.bf16.mxu0 %v877
    %3386 = vmatmul.mubr.bf16.gmra.mrb[0].mxu0 %v876
    %v3387 = vpop.f32.mrb[0].mxu0
    %v3388 = vadd.f32 %v3195, %v3387
    %v3389 = vpop.f32.mrb[0].mxu0
    %v3390 = vadd.f32 %v3197, %v3389
    %v3391 = vpop.f32.mrb[0].mxu0
    %v3392 = vadd.f32 %v3199, %v3391
    %v3393 = vpop.f32.mrb[0].mxu0
    %v3394 = vadd.f32 %v3201, %v3393
    %3395 = vmatprep.mubr.bf16.mxu0 %v885
    %3396 = vmatmul.mubr.bf16.gmra.mrb[0].mxu0 %v884
    %v3397 = vpop.f32.mrb[0].mxu0
    %v3398 = vadd.f32 %v3205, %v3397
    %v3399 = vpop.f32.mrb[0].mxu0
    %v3400 = vadd.f32 %v3207, %v3399
    %v3401 = vpop.f32.mrb[0].mxu0
    %v3402 = vadd.f32 %v3209, %v3401
    %v3403 = vpop.f32.mrb[0].mxu0
    %v3404 = vadd.f32 %v3211, %v3403
    %3405 = vmatprep.mubr.bf16.mxu0 %v893
    %3406 = vmatmul.mubr.bf16.gmra.mrb[0].mxu0 %v892
    %v3407 = vpop.f32.mrb[0].mxu0
    %v3408 = vadd.f32 %v3215, %v3407
    %v3409 = vpop.f32.mrb[0].mxu0
    %v3410 = vadd.f32 %v3217, %v3409
    %v3411 = vpop.f32.mrb[0].mxu0
    %v3412 = vadd.f32 %v3219, %v3411
    %v3413 = vpop.f32.mrb[0].mxu0
    %v3414 = vadd.f32 %v3221, %v3413
    %3415 = vmatprep.mubr.bf16.mxu0 %v901
    %3416 = vmatmul.mubr.bf16.gmra.mrb[0].mxu0 %v900
    %v3417 = vpop.f32.mrb[0].mxu0
    %v3418 = vadd.f32 %v3225, %v3417
    %v3419 = vpop.f32.mrb[0].mxu0
    %v3420 = vadd.f32 %v3227, %v3419
    %v3421 = vpop.f32.mrb[0].mxu0
    %v3422 = vadd.f32 %v3229, %v3421
    %v3423 = vpop.f32.mrb[0].mxu0
    %v3424 = vadd.f32 %v3231, %v3423
    %3425 = vmatprep.mubr.bf16.mxu0 %v909
    %3426 = vmatmul.mubr.bf16.gmra.mrb[0].mxu0 %v908
    %v3427 = vpop.f32.mrb[0].mxu0
    %v3428 = vadd.f32 %v3235, %v3427
    %v3429 = vpop.f32.mrb[0].mxu0
    %v3430 = vadd.f32 %v3237, %v3429
    %v3431 = vpop.f32.mrb[0].mxu0
    %v3432 = vadd.f32 %v3239, %v3431
    %v3433 = vpop.f32.mrb[0].mxu0
    %v3434 = vadd.f32 %v3241, %v3433
    %3435 = vmatprep.mubr.bf16.mxu0 %v917
    %3436 = vmatmul.mubr.bf16.gmra.mrb[0].mxu0 %v916
    %v3437 = vpop.f32.mrb[0].mxu0
    %v3438 = vadd.f32 %v3245, %v3437
    %v3439 = vpop.f32.mrb[0].mxu0
    %v3440 = vadd.f32 %v3247, %v3439
    %v3441 = vpop.f32.mrb[0].mxu0
    %v3442 = vadd.f32 %v3249, %v3441
    %v3443 = vpop.f32.mrb[0].mxu0
    %v3444 = vadd.f32 %v3251, %v3443
    %3445 = vmatprep.mubr.bf16.mxu0 %v925
    %3446 = vmatmul.mubr.bf16.gmra.mrb[0].mxu0 %v924
    %v3447 = vpop.f32.mrb[0].mxu0
    %v3448 = vadd.f32 %v3255, %v3447
    %v3449 = vpop.f32.mrb[0].mxu0
    %v3450 = vadd.f32 %v3257, %v3449
    %v3451 = vpop.f32.mrb[0].mxu0
    %v3452 = vadd.f32 %v3259, %v3451
    %v3453 = vpop.f32.mrb[0].mxu0
    %v3454 = vadd.f32 %v3261, %v3453
    %3455 = vmatprep.mubr.bf16.mxu0 %v933
    %3456 = vmatmul.mubr.bf16.gmra.mrb[0].mxu0 %v932
    %v3457 = vpop.f32.mrb[0].mxu0
    %v3458 = vadd.f32 %v3265, %v3457
    %v3459 = vpop.f32.mrb[0].mxu0
    %v3460 = vadd.f32 %v3267, %v3459
    %v3461 = vpop.f32.mrb[0].mxu0
    %v3462 = vadd.f32 %v3269, %v3461
    %v3463 = vpop.f32.mrb[0].mxu0
    %v3464 = vadd.f32 %v3271, %v3463
    %3465 = vdwg.mxu0
    %3466 = vmatprep.subr.bf16.mxu0 %v1901
    %3467 = vmatpush1.bf16.msra.mxu0 %v1900
    %3468 = vmatprep.subr.bf16.mxu0 %v1905
    %3469 = vmatpush1.bf16.msra.mxu0 %v1904
    %3470 = vmatprep.subr.bf16.mxu0 %v1909
    %3471 = vmatpush1.bf16.msra.mxu0 %v1908
    %3472 = vmatprep.subr.bf16.mxu0 %v1913
    %3473 = vmatpush1.bf16.msra.mxu0 %v1912
    %3474 = vmatprep.subr.bf16.mxu0 %v1917
    %3475 = vmatpush1.bf16.msra.mxu0 %v1916
    %3476 = vmatprep.subr.bf16.mxu0 %v1921
    %3477 = vmatpush1.bf16.msra.mxu0 %v1920
    %3478 = vmatprep.subr.bf16.mxu0 %v1925
    %3479 = vmatpush1.bf16.msra.mxu0 %v1924
    %3480 = vmatprep.subr.bf16.mxu0 %v1929
    %3481 = vmatpush1.bf16.msra.mxu0 %v1928
    %3482 = vmatprep.subr.bf16.mxu0 %v1933
    %3483 = vmatpush1.bf16.msra.mxu0 %v1932
    %3484 = vmatprep.subr.bf16.mxu0 %v1937
    %3485 = vmatpush1.bf16.msra.mxu0 %v1936
    %3486 = vmatprep.subr.bf16.mxu0 %v1941
    %3487 = vmatpush1.bf16.msra.mxu0 %v1940
    %3488 = vmatprep.subr.bf16.mxu0 %v1945
    %3489 = vmatpush1.bf16.msra.mxu0 %v1944
    %3490 = vmatprep.subr.bf16.mxu0 %v1949
    %3491 = vmatpush1.bf16.msra.mxu0 %v1948
    %3492 = vmatprep.subr.bf16.mxu0 %v1953
    %3493 = vmatpush1.bf16.msra.mxu0 %v1952
    %3494 = vmatprep.subr.bf16.mxu0 %v1957
    %3495 = vmatpush1.bf16.msra.mxu0 %v1956
    %3496 = vmatprep.subr.bf16.mxu0 %v1961
    %3497 = vmatpush1.bf16.msra.mxu0 %v1960
    %3498 = vmatprep.mubr.bf16.mxu0 %v815
    %3499 = vmatmul.mubr.bf16.gmra.mrb[0].mxu0 %v814
    %v3500 = vpop.f32.mrb[0].mxu0
    %v3501 = vadd.f32 %v3308, %v3500
    %v3502 = vpop.f32.mrb[0].mxu0
    %v3503 = vadd.f32 %v3310, %v3502
    %v3504 = vpop.f32.mrb[0].mxu0
    %v3505 = vadd.f32 %v3312, %v3504
    %v3506 = vpop.f32.mrb[0].mxu0
    %v3507 = vadd.f32 %v3314, %v3506
    %3508 = vmatprep.mubr.bf16.mxu0 %v823
    %3509 = vmatmul.mubr.bf16.gmra.mrb[0].mxu0 %v822
    %v3510 = vpop.f32.mrb[0].mxu0
    %v3511 = vadd.f32 %v3318, %v3510
    %v3512 = vpop.f32.mrb[0].mxu0
    %v3513 = vadd.f32 %v3320, %v3512
    %v3514 = vpop.f32.mrb[0].mxu0
    %v3515 = vadd.f32 %v3322, %v3514
    %v3516 = vpop.f32.mrb[0].mxu0
    %v3517 = vadd.f32 %v3324, %v3516
    %3518 = vmatprep.mubr.bf16.mxu0 %v831
    %3519 = vmatmul.mubr.bf16.gmra.mrb[0].mxu0 %v830
    %v3520 = vpop.f32.mrb[0].mxu0
    %v3521 = vadd.f32 %v3328, %v3520
    %v3522 = vpop.f32.mrb[0].mxu0
    %v3523 = vadd.f32 %v3330, %v3522
    %v3524 = vpop.f32.mrb[0].mxu0
    %v3525 = vadd.f32 %v3332, %v3524
    %v3526 = vpop.f32.mrb[0].mxu0
    %v3527 = vadd.f32 %v3334, %v3526
    %3528 = vmatprep.mubr.bf16.mxu0 %v839
    %3529 = vmatmul.mubr.bf16.gmra.mrb[0].mxu0 %v838
    %v3530 = vpop.f32.mrb[0].mxu0
    %v3531 = vadd.f32 %v3338, %v3530
    %v3532 = vpop.f32.mrb[0].mxu0
    %v3533 = vadd.f32 %v3340, %v3532
    %v3534 = vpop.f32.mrb[0].mxu0
    %v3535 = vadd.f32 %v3342, %v3534
    %v3536 = vpop.f32.mrb[0].mxu0
    %v3537 = vadd.f32 %v3344, %v3536
    %3538 = vmatprep.mubr.bf16.mxu0 %v847
    %3539 = vmatmul.mubr.bf16.gmra.mrb[0].mxu0 %v846
    %v3540 = vpop.f32.mrb[0].mxu0
    %v3541 = vadd.f32 %v3348, %v3540
    %v3542 = vpop.f32.mrb[0].mxu0
    %v3543 = vadd.f32 %v3350, %v3542
    %v3544 = vpop.f32.mrb[0].mxu0
    %v3545 = vadd.f32 %v3352, %v3544
    %v3546 = vpop.f32.mrb[0].mxu0
    %v3547 = vadd.f32 %v3354, %v3546
    %3548 = vmatprep.mubr.bf16.mxu0 %v855
    %3549 = vmatmul.mubr.bf16.gmra.mrb[0].mxu0 %v854
    %v3550 = vpop.f32.mrb[0].mxu0
    %v3551 = vadd.f32 %v3358, %v3550
    %v3552 = vpop.f32.mrb[0].mxu0
    %v3553 = vadd.f32 %v3360, %v3552
    %v3554 = vpop.f32.mrb[0].mxu0
    %v3555 = vadd.f32 %v3362, %v3554
    %v3556 = vpop.f32.mrb[0].mxu0
    %v3557 = vadd.f32 %v3364, %v3556
    %3558 = vmatprep.mubr.bf16.mxu0 %v863
    %3559 = vmatmul.mubr.bf16.gmra.mrb[0].mxu0 %v862
    %v3560 = vpop.f32.mrb[0].mxu0
    %v3561 = vadd.f32 %v3368, %v3560
    %v3562 = vpop.f32.mrb[0].mxu0
    %v3563 = vadd.f32 %v3370, %v3562
    %v3564 = vpop.f32.mrb[0].mxu0
    %v3565 = vadd.f32 %v3372, %v3564
    %v3566 = vpop.f32.mrb[0].mxu0
    %v3567 = vadd.f32 %v3374, %v3566
    %3568 = vmatprep.mubr.bf16.mxu0 %v871
    %3569 = vmatmul.mubr.bf16.gmra.mrb[0].mxu0 %v870
    %v3570 = vpop.f32.mrb[0].mxu0
    %v3571 = vadd.f32 %v3378, %v3570
    %v3572 = vpop.f32.mrb[0].mxu0
    %v3573 = vadd.f32 %v3380, %v3572
    %v3574 = vpop.f32.mrb[0].mxu0
    %v3575 = vadd.f32 %v3382, %v3574
    %v3576 = vpop.f32.mrb[0].mxu0
    %v3577 = vadd.f32 %v3384, %v3576
    %3578 = vmatprep.mubr.bf16.mxu0 %v879
    %3579 = vmatmul.mubr.bf16.gmra.mrb[0].mxu0 %v878
    %v3580 = vpop.f32.mrb[0].mxu0
    %v3581 = vadd.f32 %v3388, %v3580
    %v3582 = vpop.f32.mrb[0].mxu0
    %v3583 = vadd.f32 %v3390, %v3582
    %v3584 = vpop.f32.mrb[0].mxu0
    %v3585 = vadd.f32 %v3392, %v3584
    %v3586 = vpop.f32.mrb[0].mxu0
    %v3587 = vadd.f32 %v3394, %v3586
    %3588 = vmatprep.mubr.bf16.mxu0 %v887
    %3589 = vmatmul.mubr.bf16.gmra.mrb[0].mxu0 %v886
    %v3590 = vpop.f32.mrb[0].mxu0
    %v3591 = vadd.f32 %v3398, %v3590
    %v3592 = vpop.f32.mrb[0].mxu0
    %v3593 = vadd.f32 %v3400, %v3592
    %v3594 = vpop.f32.mrb[0].mxu0
    %v3595 = vadd.f32 %v3402, %v3594
    %v3596 = vpop.f32.mrb[0].mxu0
    %v3597 = vadd.f32 %v3404, %v3596
    %3598 = vmatprep.mubr.bf16.mxu0 %v895
    %3599 = vmatmul.mubr.bf16.gmra.mrb[0].mxu0 %v894
    %v3600 = vpop.f32.mrb[0].mxu0
    %v3601 = vadd.f32 %v3408, %v3600
    %v3602 = vpop.f32.mrb[0].mxu0
    %v3603 = vadd.f32 %v3410, %v3602
    %v3604 = vpop.f32.mrb[0].mxu0
    %v3605 = vadd.f32 %v3412, %v3604
    %v3606 = vpop.f32.mrb[0].mxu0
    %v3607 = vadd.f32 %v3414, %v3606
    %3608 = vmatprep.mubr.bf16.mxu0 %v903
    %3609 = vmatmul.mubr.bf16.gmra.mrb[0].mxu0 %v902
    %v3610 = vpop.f32.mrb[0].mxu0
    %v3611 = vadd.f32 %v3418, %v3610
    %v3612 = vpop.f32.mrb[0].mxu0
    %v3613 = vadd.f32 %v3420, %v3612
    %v3614 = vpop.f32.mrb[0].mxu0
    %v3615 = vadd.f32 %v3422, %v3614
    %v3616 = vpop.f32.mrb[0].mxu0
    %v3617 = vadd.f32 %v3424, %v3616
    %3618 = vmatprep.mubr.bf16.mxu0 %v911
    %3619 = vmatmul.mubr.bf16.gmra.mrb[0].mxu0 %v910
    %v3620 = vpop.f32.mrb[0].mxu0
    %v3621 = vadd.f32 %v3428, %v3620
    %v3622 = vpop.f32.mrb[0].mxu0
    %v3623 = vadd.f32 %v3430, %v3622
    %v3624 = vpop.f32.mrb[0].mxu0
    %v3625 = vadd.f32 %v3432, %v3624
    %v3626 = vpop.f32.mrb[0].mxu0
    %v3627 = vadd.f32 %v3434, %v3626
    %3628 = vmatprep.mubr.bf16.mxu0 %v919
    %3629 = vmatmul.mubr.bf16.gmra.mrb[0].mxu0 %v918
    %v3630 = vpop.f32.mrb[0].mxu0
    %v3631 = vadd.f32 %v3438, %v3630
    %v3632 = vpop.f32.mrb[0].mxu0
    %v3633 = vadd.f32 %v3440, %v3632
    %v3634 = vpop.f32.mrb[0].mxu0
    %v3635 = vadd.f32 %v3442, %v3634
    %v3636 = vpop.f32.mrb[0].mxu0
    %v3637 = vadd.f32 %v3444, %v3636
    %3638 = vmatprep.mubr.bf16.mxu0 %v927
    %3639 = vmatmul.mubr.bf16.gmra.mrb[0].mxu0 %v926
    %v3640 = vpop.f32.mrb[0].mxu0
    %v3641 = vadd.f32 %v3448, %v3640
    %v3642 = vpop.f32.mrb[0].mxu0
    %v3643 = vadd.f32 %v3450, %v3642
    %v3644 = vpop.f32.mrb[0].mxu0
    %v3645 = vadd.f32 %v3452, %v3644
    %v3646 = vpop.f32.mrb[0].mxu0
    %v3647 = vadd.f32 %v3454, %v3646
    %3648 = vmatprep.mubr.bf16.mxu0 %v935
    %3649 = vmatmul.mubr.bf16.gmra.mrb[0].mxu0 %v934
    %v3650 = vpop.f32.mrb[0].mxu0
    %v3651 = vadd.f32 %v3458, %v3650
    %v3652 = vpop.f32.mrb[0].mxu0
    %v3653 = vadd.f32 %v3460, %v3652
    %v3654 = vpop.f32.mrb[0].mxu0
    %v3655 = vadd.f32 %v3462, %v3654
    %v3656 = vpop.f32.mrb[0].mxu0
    %v3657 = vadd.f32 %v3464, %v3656
    %3658 = vdwg.mxu0
    %3659 = vmatprep.subr.bf16.mxu0 %v1965
    %3660 = vmatpush1.bf16.msra.mxu0 %v1964
    %3661 = vmatprep.subr.bf16.mxu0 %v1969
    %3662 = vmatpush1.bf16.msra.mxu0 %v1968
    %3663 = vmatprep.subr.bf16.mxu0 %v1973
    %3664 = vmatpush1.bf16.msra.mxu0 %v1972
    %3665 = vmatprep.subr.bf16.mxu0 %v1977
    %3666 = vmatpush1.bf16.msra.mxu0 %v1976
    %3667 = vmatprep.subr.bf16.mxu0 %v1981
    %3668 = vmatpush1.bf16.msra.mxu0 %v1980
    %3669 = vmatprep.subr.bf16.mxu0 %v1985
    %3670 = vmatpush1.bf16.msra.mxu0 %v1984
    %3671 = vmatprep.subr.bf16.mxu0 %v1989
    %3672 = vmatpush1.bf16.msra.mxu0 %v1988
    %3673 = vmatprep.subr.bf16.mxu0 %v1993
    %3674 = vmatpush1.bf16.msra.mxu0 %v1992
    %3675 = vmatprep.subr.bf16.mxu0 %v1997
    %3676 = vmatpush1.bf16.msra.mxu0 %v1996
    %3677 = vmatprep.subr.bf16.mxu0 %v2001
    %3678 = vmatpush1.bf16.msra.mxu0 %v2000
    %3679 = vmatprep.subr.bf16.mxu0 %v2005
    %3680 = vmatpush1.bf16.msra.mxu0 %v2004
    %3681 = vmatprep.subr.bf16.mxu0 %v2306
    %3682 = vmatpush1.bf16.msra.mxu0 %v2303
    %3683 = vmatprep.subr.bf16.mxu0 0
    %3684 = vmatpush1.bf16.msra.mxu0 0
    %3685 = vmatprep.subr.bf16.mxu0 0
    %3686 = vmatpush1.bf16.msra.mxu0 0
    %3687 = vmatprep.subr.bf16.mxu0 0
    %3688 = vmatpush1.bf16.msra.mxu0 0
    %3689 = vmatprep.subr.bf16.mxu0 0
    %3690 = vmatpush1.bf16.msra.mxu0 0
    %3691 = vmatprep.mubr.bf16.mxu0 %v2248
    %3692 = vmatmul.mubr.bf16.gmra.mrb[0].mxu0 %v816
    %v3693 = vpop.f32.mrb[0].mxu0
    %v3694 = vadd.f32 %v3501, %v3693
    %v3695 = vpop.f32.mrb[0].mxu0
    %v3696 = vadd.f32 %v3503, %v3695
    %v3697 = vpop.f32.mrb[0].mxu0
    %v3698 = vadd.f32 %v3505, %v3697
    %v3699 = vpop.f32.mrb[0].mxu0
    %v3700 = vadd.f32 %v3507, %v3699
    %3701 = vmatprep.mubr.bf16.mxu0 %v2251
    %3702 = vmatmul.mubr.bf16.gmra.mrb[0].mxu0 %v824
    %v3703 = vpop.f32.mrb[0].mxu0
    %v3704 = vadd.f32 %v3511, %v3703
    %v3705 = vpop.f32.mrb[0].mxu0
    %v3706 = vadd.f32 %v3513, %v3705
    %v3707 = vpop.f32.mrb[0].mxu0
    %v3708 = vadd.f32 %v3515, %v3707
    %v3709 = vpop.f32.mrb[0].mxu0
    %v3710 = vadd.f32 %v3517, %v3709
    %3711 = vmatprep.mubr.bf16.mxu0 %v2254
    %3712 = vmatmul.mubr.bf16.gmra.mrb[0].mxu0 %v832
    %v3713 = vpop.f32.mrb[0].mxu0
    %v3714 = vadd.f32 %v3521, %v3713
    %v3715 = vpop.f32.mrb[0].mxu0
    %v3716 = vadd.f32 %v3523, %v3715
    %v3717 = vpop.f32.mrb[0].mxu0
    %v3718 = vadd.f32 %v3525, %v3717
    %v3719 = vpop.f32.mrb[0].mxu0
    %v3720 = vadd.f32 %v3527, %v3719
    %3721 = vmatprep.mubr.bf16.mxu0 %v2257
    %3722 = vmatmul.mubr.bf16.gmra.mrb[0].mxu0 %v840
    %v3723 = vpop.f32.mrb[0].mxu0
    %v3724 = vadd.f32 %v3531, %v3723
    %v3725 = vpop.f32.mrb[0].mxu0
    %v3726 = vadd.f32 %v3533, %v3725
    %v3727 = vpop.f32.mrb[0].mxu0
    %v3728 = vadd.f32 %v3535, %v3727
    %v3729 = vpop.f32.mrb[0].mxu0
    %v3730 = vadd.f32 %v3537, %v3729
    %3731 = vmatprep.mubr.bf16.mxu0 %v2260
    %3732 = vmatmul.mubr.bf16.gmra.mrb[0].mxu0 %v848
    %v3733 = vpop.f32.mrb[0].mxu0
    %v3734 = vadd.f32 %v3541, %v3733
    %v3735 = vpop.f32.mrb[0].mxu0
    %v3736 = vadd.f32 %v3543, %v3735
    %v3737 = vpop.f32.mrb[0].mxu0
    %v3738 = vadd.f32 %v3545, %v3737
    %v3739 = vpop.f32.mrb[0].mxu0
    %v3740 = vadd.f32 %v3547, %v3739
    %3741 = vmatprep.mubr.bf16.mxu0 %v2263
    %3742 = vmatmul.mubr.bf16.gmra.mrb[0].mxu0 %v856
    %v3743 = vpop.f32.mrb[0].mxu0
    %v3744 = vadd.f32 %v3551, %v3743
    %v3745 = vpop.f32.mrb[0].mxu0
    %v3746 = vadd.f32 %v3553, %v3745
    %v3747 = vpop.f32.mrb[0].mxu0
    %v3748 = vadd.f32 %v3555, %v3747
    %v3749 = vpop.f32.mrb[0].mxu0
    %v3750 = vadd.f32 %v3557, %v3749
    %3751 = vmatprep.mubr.bf16.mxu0 %v2266
    %3752 = vmatmul.mubr.bf16.gmra.mrb[0].mxu0 %v864
    %v3753 = vpop.f32.mrb[0].mxu0
    %v3754 = vadd.f32 %v3561, %v3753
    %v3755 = vpop.f32.mrb[0].mxu0
    %v3756 = vadd.f32 %v3563, %v3755
    %v3757 = vpop.f32.mrb[0].mxu0
    %v3758 = vadd.f32 %v3565, %v3757
    %v3759 = vpop.f32.mrb[0].mxu0
    %v3760 = vadd.f32 %v3567, %v3759
    %3761 = vmatprep.mubr.bf16.mxu0 %v2269
    %3762 = vmatmul.mubr.bf16.gmra.mrb[0].mxu0 %v872
    %v3763 = vpop.f32.mrb[0].mxu0
    %v3764 = vadd.f32 %v3571, %v3763
    %v3765 = vpop.f32.mrb[0].mxu0
    %v3766 = vadd.f32 %v3573, %v3765
    %v3767 = vpop.f32.mrb[0].mxu0
    %v3768 = vadd.f32 %v3575, %v3767
    %v3769 = vpop.f32.mrb[0].mxu0
    %v3770 = vadd.f32 %v3577, %v3769
    %3771 = vmatprep.mubr.bf16.mxu0 %v2272
    %3772 = vmatmul.mubr.bf16.gmra.mrb[0].mxu0 %v880
    %v3773 = vpop.f32.mrb[0].mxu0
    %v3774 = vadd.f32 %v3581, %v3773
    %v3775 = vpop.f32.mrb[0].mxu0
    %v3776 = vadd.f32 %v3583, %v3775
    %v3777 = vpop.f32.mrb[0].mxu0
    %v3778 = vadd.f32 %v3585, %v3777
    %v3779 = vpop.f32.mrb[0].mxu0
    %v3780 = vadd.f32 %v3587, %v3779
    %3781 = vmatprep.mubr.bf16.mxu0 %v2275
    %3782 = vmatmul.mubr.bf16.gmra.mrb[0].mxu0 %v888
    %v3783 = vpop.f32.mrb[0].mxu0
    %v3784 = vadd.f32 %v3591, %v3783
    %v3785 = vpop.f32.mrb[0].mxu0
    %v3786 = vadd.f32 %v3593, %v3785
    %v3787 = vpop.f32.mrb[0].mxu0
    %v3788 = vadd.f32 %v3595, %v3787
    %v3789 = vpop.f32.mrb[0].mxu0
    %v3790 = vadd.f32 %v3597, %v3789
    %3791 = vmatprep.mubr.bf16.mxu0 %v2278
    %3792 = vmatmul.mubr.bf16.gmra.mrb[0].mxu0 %v896
    %v3793 = vpop.f32.mrb[0].mxu0
    %v3794 = vadd.f32 %v3601, %v3793
    %v3795 = vpop.f32.mrb[0].mxu0
    %v3796 = vadd.f32 %v3603, %v3795
    %v3797 = vpop.f32.mrb[0].mxu0
    %v3798 = vadd.f32 %v3605, %v3797
    %v3799 = vpop.f32.mrb[0].mxu0
    %v3800 = vadd.f32 %v3607, %v3799
    %3801 = vmatprep.mubr.bf16.mxu0 %v2281
    %3802 = vmatmul.mubr.bf16.gmra.mrb[0].mxu0 %v904
    %v3803 = vpop.f32.mrb[0].mxu0
    %v3804 = vadd.f32 %v3611, %v3803
    %v3805 = vpop.f32.mrb[0].mxu0
    %v3806 = vadd.f32 %v3613, %v3805
    %v3807 = vpop.f32.mrb[0].mxu0
    %v3808 = vadd.f32 %v3615, %v3807
    %v3809 = vpop.f32.mrb[0].mxu0
    %v3810 = vadd.f32 %v3617, %v3809
    %3811 = vmatprep.mubr.bf16.mxu0 %v2284
    %3812 = vmatmul.mubr.bf16.gmra.mrb[0].mxu0 %v912
    %v3813 = vpop.f32.mrb[0].mxu0
    %v3814 = vadd.f32 %v3621, %v3813
    %v3815 = vpop.f32.mrb[0].mxu0
    %v3816 = vadd.f32 %v3623, %v3815
    %v3817 = vpop.f32.mrb[0].mxu0
    %v3818 = vadd.f32 %v3625, %v3817
    %v3819 = vpop.f32.mrb[0].mxu0
    %v3820 = vadd.f32 %v3627, %v3819
    %3821 = vmatprep.mubr.bf16.mxu0 %v2287
    %3822 = vmatmul.mubr.bf16.gmra.mrb[0].mxu0 %v920
    %v3823 = vpop.f32.mrb[0].mxu0
    %v3824 = vadd.f32 %v3631, %v3823
    %v3825 = vpop.f32.mrb[0].mxu0
    %v3826 = vadd.f32 %v3633, %v3825
    %v3827 = vpop.f32.mrb[0].mxu0
    %v3828 = vadd.f32 %v3635, %v3827
    %v3829 = vpop.f32.mrb[0].mxu0
    %v3830 = vadd.f32 %v3637, %v3829
    %3831 = vmatprep.mubr.bf16.mxu0 %v2290
    %3832 = vmatmul.mubr.bf16.gmra.mrb[0].mxu0 %v928
    %v3833 = vpop.f32.mrb[0].mxu0
    %v3834 = vadd.f32 %v3641, %v3833
    %v3835 = vpop.f32.mrb[0].mxu0
    %v3836 = vadd.f32 %v3643, %v3835
    %v3837 = vpop.f32.mrb[0].mxu0
    %v3838 = vadd.f32 %v3645, %v3837
    %v3839 = vpop.f32.mrb[0].mxu0
    %v3840 = vadd.f32 %v3647, %v3839
    %3841 = vmatprep.mubr.bf16.mxu0 %v2293
    %3842 = vmatmul.mubr.bf16.gmra.mrb[0].mxu0 %v936
    %v3843 = vpop.f32.mrb[0].mxu0
    %v3844 = vadd.f32 %v3651, %v3843
    %v3845 = vpop.f32.mrb[0].mxu0
    %v3846 = vadd.f32 %v3653, %v3845
    %v3847 = vpop.f32.mrb[0].mxu0
    %v3848 = vadd.f32 %v3655, %v3847
    %v3849 = vpop.f32.mrb[0].mxu0
    %v3850 = vadd.f32 %v3657, %v3849
    %3851 = vdwg.mxu0
    %v3852 = vmax.f32 %v2922, 0.0
    %v3853 = vmax.f32 %v2924, 0.0
    %v3854 = vmax.f32 %v3694, 0.0
    %v3855 = vmax.f32 %v3696, 0.0
    %v3856 = vmax.f32 %v2926, 0.0
    %v3857 = vmax.f32 %v2928, 0.0
    %v3858 = vmax.f32 %v3698, 0.0
    %v3859 = vmax.f32 %v3700, 0.0
    %v3860 = vmax.f32 %v2932, 0.0
    %v3861 = vmax.f32 %v2934, 0.0
    %v3862 = vmax.f32 %v3704, 0.0
    %v3863 = vmax.f32 %v3706, 0.0
    %v3864 = vmax.f32 %v2936, 0.0
    %v3865 = vmax.f32 %v2938, 0.0
    %v3866 = vmax.f32 %v3708, 0.0
    %v3867 = vmax.f32 %v3710, 0.0
    %v3868 = vmax.f32 %v2942, 0.0
    %v3869 = vmax.f32 %v2944, 0.0
    %v3870 = vmax.f32 %v3714, 0.0
    %v3871 = vmax.f32 %v3716, 0.0
    %v3872 = vmax.f32 %v2946, 0.0
    %v3873 = vmax.f32 %v2948, 0.0
    %v3874 = vmax.f32 %v3718, 0.0
    %v3875 = vmax.f32 %v3720, 0.0
    %v3876 = vmax.f32 %v2952, 0.0
    %v3877 = vmax.f32 %v2954, 0.0
    %v3878 = vmax.f32 %v3724, 0.0
    %v3879 = vmax.f32 %v3726, 0.0
    %v3880 = vmax.f32 %v2956, 0.0
    %v3881 = vmax.f32 %v2958, 0.0
    %v3882 = vmax.f32 %v3728, 0.0
    %v3883 = vmax.f32 %v3730, 0.0
    %v3884 = vmax.f32 %v2962, 0.0
    %v3885 = vmax.f32 %v2964, 0.0
    %v3886 = vmax.f32 %v3734, 0.0
    %v3887 = vmax.f32 %v3736, 0.0
    %v3888 = vmax.f32 %v2966, 0.0
    %v3889 = vmax.f32 %v2968, 0.0
    %v3890 = vmax.f32 %v3738, 0.0
    %v3891 = vmax.f32 %v3740, 0.0
    %v3892 = vmax.f32 %v2972, 0.0
    %v3893 = vmax.f32 %v2974, 0.0
    %v3894 = vmax.f32 %v3744, 0.0
    %v3895 = vmax.f32 %v3746, 0.0
    %v3896 = vmax.f32 %v2976, 0.0
    %v3897 = vmax.f32 %v2978, 0.0
    %v3898 = vmax.f32 %v3748, 0.0
    %v3899 = vmax.f32 %v3750, 0.0
    %v3900 = vmax.f32 %v2982, 0.0
    %v3901 = vmax.f32 %v2984, 0.0
    %v3902 = vmax.f32 %v3754, 0.0
    %v3903 = vmax.f32 %v3756, 0.0
    %v3904 = vmax.f32 %v2986, 0.0
    %v3905 = vmax.f32 %v2988, 0.0
    %v3906 = vmax.f32 %v3758, 0.0
    %v3907 = vmax.f32 %v3760, 0.0
    %v3908 = vmax.f32 %v2992, 0.0
    %v3909 = vmax.f32 %v2994, 0.0
    %v3910 = vmax.f32 %v3764, 0.0
    %v3911 = vmax.f32 %v3766, 0.0
    %v3912 = vmax.f32 %v2996, 0.0
    %v3913 = vmax.f32 %v2998, 0.0
    %v3914 = vmax.f32 %v3768, 0.0
    %v3915 = vmax.f32 %v3770, 0.0
    %v3916 = vmax.f32 %v3002, 0.0
    %v3917 = vmax.f32 %v3004, 0.0
    %v3918 = vmax.f32 %v3774, 0.0
    %v3919 = vmax.f32 %v3776, 0.0
    %v3920 = vmax.f32 %v3006, 0.0
    %v3921 = vmax.f32 %v3008, 0.0
    %v3922 = vmax.f32 %v3778, 0.0
    %v3923 = vmax.f32 %v3780, 0.0
    %v3924 = vmax.f32 %v3012, 0.0
    %v3925 = vmax.f32 %v3014, 0.0
    %v3926 = vmax.f32 %v3784, 0.0
    %v3927 = vmax.f32 %v3786, 0.0
    %v3928 = vmax.f32 %v3016, 0.0
    %v3929 = vmax.f32 %v3018, 0.0
    %v3930 = vmax.f32 %v3788, 0.0
    %v3931 = vmax.f32 %v3790, 0.0
    %v3932 = vmax.f32 %v3022, 0.0
    %v3933 = vmax.f32 %v3024, 0.0
    %v3934 = vmax.f32 %v3794, 0.0
    %v3935 = vmax.f32 %v3796, 0.0
    %v3936 = vmax.f32 %v3026, 0.0
    %v3937 = vmax.f32 %v3028, 0.0
    %v3938 = vmax.f32 %v3798, 0.0
    %v3939 = vmax.f32 %v3800, 0.0
    %v3940 = vmax.f32 %v3032, 0.0
    %v3941 = vmax.f32 %v3034, 0.0
    %v3942 = vmax.f32 %v3804, 0.0
    %v3943 = vmax.f32 %v3806, 0.0
    %v3944 = vmax.f32 %v3036, 0.0
    %v3945 = vmax.f32 %v3038, 0.0
    %v3946 = vmax.f32 %v3808, 0.0
    %v3947 = vmax.f32 %v3810, 0.0
    %v3948 = vmax.f32 %v3042, 0.0
    %v3949 = vmax.f32 %v3044, 0.0
    %v3950 = vmax.f32 %v3814, 0.0
    %v3951 = vmax.f32 %v3816, 0.0
    %v3952 = vmax.f32 %v3046, 0.0
    %v3953 = vmax.f32 %v3048, 0.0
    %v3954 = vmax.f32 %v3818, 0.0
    %v3955 = vmax.f32 %v3820, 0.0
    %v3956 = vmax.f32 %v3052, 0.0
    %v3957 = vmax.f32 %v3054, 0.0
    %v3958 = vmax.f32 %v3824, 0.0
    %v3959 = vmax.f32 %v3826, 0.0
    %v3960 = vmax.f32 %v3056, 0.0
    %v3961 = vmax.f32 %v3058, 0.0
    %v3962 = vmax.f32 %v3828, 0.0
    %v3963 = vmax.f32 %v3830, 0.0
    %v3964 = vmax.f32 %v3062, 0.0
    %v3965 = vmax.f32 %v3064, 0.0
    %v3966 = vmax.f32 %v3834, 0.0
    %v3967 = vmax.f32 %v3836, 0.0
    %v3968 = vmax.f32 %v3066, 0.0
    %v3969 = vmax.f32 %v3068, 0.0
    %v3970 = vmax.f32 %v3838, 0.0
    %v3971 = vmax.f32 %v3840, 0.0
    %v3972 = vmax.f32 %v3072, 0.0
    %v3973 = vmax.f32 %v3074, 0.0
    %v3974 = vmax.f32 %v3844, 0.0
    %v3975 = vmax.f32 %v3846, 0.0
    %v3976 = vmax.f32 %v3076, 0.0
    %v3977 = vmax.f32 %v3078, 0.0
    %v3978 = vmax.f32 %v3848, 0.0
    %v3979 = vmax.f32 %v3850, 0.0
    %v3980 = vpack.c.bf16 %v3856, %v3852
    %v3981 = vpack.c.bf16 %v3857, %v3853
    %v3982 = vpack.c.bf16 %v3858, %v3854
    %v3983 = vpack.c.bf16 %v3859, %v3855
    %v3984 = vpack.c.bf16 %v3864, %v3860
    %v3985 = vpack.c.bf16 %v3865, %v3861
    %v3986 = vpack.c.bf16 %v3866, %v3862
    %v3987 = vpack.c.bf16 %v3867, %v3863
    %v3988 = vpack.c.bf16 %v3872, %v3868
    %v3989 = vpack.c.bf16 %v3873, %v3869
    %v3990 = vpack.c.bf16 %v3874, %v3870
    %v3991 = vpack.c.bf16 %v3875, %v3871
    %v3992 = vpack.c.bf16 %v3880, %v3876
    %v3993 = vpack.c.bf16 %v3881, %v3877
    %v3994 = vpack.c.bf16 %v3882, %v3878
    %v3995 = vpack.c.bf16 %v3883, %v3879
    %v3996 = vpack.c.bf16 %v3888, %v3884
    %v3997 = vpack.c.bf16 %v3889, %v3885
    %v3998 = vpack.c.bf16 %v3890, %v3886
    %v3999 = vpack.c.bf16 %v3891, %v3887
    %v4000 = vpack.c.bf16 %v3896, %v3892
    %v4001 = vpack.c.bf16 %v3897, %v3893
    %v4002 = vpack.c.bf16 %v3898, %v3894
    %v4003 = vpack.c.bf16 %v3899, %v3895
    %v4004 = vpack.c.bf16 %v3904, %v3900
    %v4005 = vpack.c.bf16 %v3905, %v3901
    %v4006 = vpack.c.bf16 %v3906, %v3902
    %v4007 = vpack.c.bf16 %v3907, %v3903
    %v4008 = vpack.c.bf16 %v3912, %v3908
    %v4009 = vpack.c.bf16 %v3913, %v3909
    %v4010 = vpack.c.bf16 %v3914, %v3910
    %v4011 = vpack.c.bf16 %v3915, %v3911
    %v4012 = vpack.c.bf16 %v3920, %v3916
    %v4013 = vpack.c.bf16 %v3921, %v3917
    %v4014 = vpack.c.bf16 %v3922, %v3918
    %v4015 = vpack.c.bf16 %v3923, %v3919
    %v4016 = vpack.c.bf16 %v3928, %v3924
    %v4017 = vpack.c.bf16 %v3929, %v3925
    %v4018 = vpack.c.bf16 %v3930, %v3926
    %v4019 = vpack.c.bf16 %v3931, %v3927
    %v4020 = vpack.c.bf16 %v3936, %v3932
    %v4021 = vpack.c.bf16 %v3937, %v3933
    %v4022 = vpack.c.bf16 %v3938, %v3934
    %v4023 = vpack.c.bf16 %v3939, %v3935
    %v4024 = vpack.c.bf16 %v3944, %v3940
    %v4025 = vpack.c.bf16 %v3945, %v3941
    %v4026 = vpack.c.bf16 %v3946, %v3942
    %v4027 = vpack.c.bf16 %v3947, %v3943
    %v4028 = vpack.c.bf16 %v3952, %v3948
    %v4029 = vpack.c.bf16 %v3953, %v3949
    %v4030 = vpack.c.bf16 %v3954, %v3950
    %v4031 = vpack.c.bf16 %v3955, %v3951
    %v4032 = vpack.c.bf16 %v3960, %v3956
    %v4033 = vpack.c.bf16 %v3961, %v3957
    %v4034 = vpack.c.bf16 %v3962, %v3958
    %v4035 = vpack.c.bf16 %v3963, %v3959
    %v4036 = vpack.c.bf16 %v3968, %v3964
    %v4037 = vpack.c.bf16 %v3969, %v3965
    %v4038 = vpack.c.bf16 %v3970, %v3966
    %v4039 = vpack.c.bf16 %v3971, %v3967
    %v4040 = vpack.c.bf16 %v3976, %v3972
    %v4041 = vpack.c.bf16 %v3977, %v3973
    %v4042 = vpack.c.bf16 %v3978, %v3974
    %v4043 = vpack.c.bf16 %v3979, %v3975
    %v4044 = vld [vmem:[#allocation2] sm:$0xff]
    %v4045 = vld [vmem:[#allocation2 + $0x8] sm:$0xff]
    %v4046 = vld [vmem:[#allocation2 + $0x10] sm:$0xff]
    %v4047 = vld [vmem:[#allocation2 + $0x18] sm:$0xff]
    %v4048 = vld [vmem:[#allocation2 + $0x20] sm:$0xff]
    %v4049 = vld [vmem:[#allocation2 + $0x28] sm:$0xff]
    %v4050 = vld [vmem:[#allocation2 + $0x30] sm:$0xff]
    %v4051 = vld [vmem:[#allocation2 + $0x38] sm:$0xff]
    %v4052 = vld [vmem:[#allocation2 + $0x40] sm:$0xff]
    %v4053 = vld [vmem:[#allocation2 + $0x48] sm:$0xff]
    %v4054 = vld [vmem:[#allocation2 + $0x50] sm:$0xff]
    %v4055 = vld [vmem:[#allocation2 + $0x58] sm:$0xff]
    %v4056 = vld [vmem:[#allocation2 + $0x60] sm:$0xff]
    %v4057 = vld [vmem:[#allocation2 + $0x68] sm:$0xff]
    %v4058 = vld [vmem:[#allocation2 + $0x70] sm:$0xff]
    %v4059 = vld [vmem:[#allocation2 + $0x78] sm:$0xff]
    %v4060 = vld [vmem:[#allocation2 + $0x80] sm:$0xff]
    %v4061 = vld [vmem:[#allocation2 + $0x88] sm:$0xff]
    %v4062 = vld [vmem:[#allocation2 + $0x90] sm:$0xff]
    %v4063 = vld [vmem:[#allocation2 + $0x98] sm:$0xff]
    %v4064 = vld [vmem:[#allocation2 + $0xa0] sm:$0xff]
    %v4065 = vld [vmem:[#allocation2 + $0xa8] sm:$0xff]
    %v4066 = vld [vmem:[#allocation2 + $0xb0] sm:$0xff]
    %v4067 = vld [vmem:[#allocation2 + $0xb8] sm:$0xff]
    %v4068 = vld [vmem:[#allocation2 + $0xc0] sm:$0xff]
    %v4069 = vld [vmem:[#allocation2 + $0xc8] sm:$0xff]
    %v4070 = vld [vmem:[#allocation2 + $0xd0] sm:$0xff]
    %v4071 = vld [vmem:[#allocation2 + $0xd8] sm:$0xff]
    %v4072 = vld [vmem:[#allocation2 + $0xe0] sm:$0xff]
    %v4073 = vld [vmem:[#allocation2 + $0xe8] sm:$0xff]
    %v4074 = vld [vmem:[#allocation2 + $0xf0] sm:$0xff]
    %v4075 = vld [vmem:[#allocation2 + $0xf8] sm:$0xff]
    %v4076 = vld [vmem:[#allocation2 + $0x100] sm:$0xff]
    %v4077 = vld [vmem:[#allocation2 + $0x108] sm:$0xff]
    %v4078 = vld [vmem:[#allocation2 + $0x110] sm:$0xff]
    %v4079 = vld [vmem:[#allocation2 + $0x118] sm:$0xff]
    %v4080 = vld [vmem:[#allocation2 + $0x120] sm:$0xff]
    %v4081 = vld [vmem:[#allocation2 + $0x128] sm:$0xff]
    %v4082 = vld [vmem:[#allocation2 + $0x130] sm:$0xff]
    %v4083 = vld [vmem:[#allocation2 + $0x138] sm:$0xff]
    %v4084 = vld [vmem:[#allocation2 + $0x140] sm:$0xff]
    %v4085 = vld [vmem:[#allocation2 + $0x148] sm:$0xff]
    %v4086 = vld [vmem:[#allocation2 + $0x150] sm:$0xff]
    %v4087 = vld [vmem:[#allocation2 + $0x158] sm:$0xff]
    %v4088 = vld [vmem:[#allocation2 + $0x160] sm:$0xff]
    %v4089 = vld [vmem:[#allocation2 + $0x168] sm:$0xff]
    %v4090 = vld [vmem:[#allocation2 + $0x170] sm:$0xff]
    %v4091 = vld [vmem:[#allocation2 + $0x178] sm:$0xff]
    %v4092 = vld [vmem:[#allocation2 + $0x180] sm:$0xff]
    %v4093 = vld [vmem:[#allocation2 + $0x188] sm:$0xff]
    %v4094 = vld [vmem:[#allocation2 + $0x190] sm:$0xff]
    %v4095 = vld [vmem:[#allocation2 + $0x198] sm:$0xff]
    %v4096 = vld [vmem:[#allocation2 + $0x1a0] sm:$0xff]
    %v4097 = vld [vmem:[#allocation2 + $0x1a8] sm:$0xff]
    %v4098 = vld [vmem:[#allocation2 + $0x1b0] sm:$0xff]
    %v4099 = vld [vmem:[#allocation2 + $0x1b8] sm:$0xff]
    %v4100 = vld [vmem:[#allocation2 + $0x1c0] sm:$0xff]
    %v4101 = vld [vmem:[#allocation2 + $0x1c8] sm:$0xff]
    %v4102 = vld [vmem:[#allocation2 + $0x1d0] sm:$0xff]
    %v4103 = vld [vmem:[#allocation2 + $0x1d8] sm:$0xff]
    %v4104 = vld [vmem:[#allocation2 + $0x1e0] sm:$0xff]
    %v4105 = vld [vmem:[#allocation2 + $0x1e8] sm:$0xff]
    %v4106 = vld [vmem:[#allocation2 + $0x1f0] sm:$0xff]
    %v4107 = vld [vmem:[#allocation2 + $0x1f8] sm:$0xff]
    %v4108 = vld [vmem:[%s4] sm:$0x3]
    %v4110 = vlaneseq
    %v4111 = vshrl.u32 %v4110, 7
    %v4112 = vsub.s32 0, %v4111
    %v4113 = vrot.slane %v4108, %v4112
    %v4114 = vlaneseq
    %v4115 = vshrl.u32 %v4114, 7
    %v4116 = vsub.s32 1, %v4115
    %v4117 = vrot.slane %v4108, %v4116
    %v4184 = vunpack.c.l.b16 %v4044
    %v4185 = vunpack.c.h.b16 %v4044
    %v4186 = vunpack.c.l.b16 %v4045
    %v4187 = vunpack.c.h.b16 %v4045
    %v4188 = vunpack.c.l.b16 %v4046
    %v4189 = vunpack.c.h.b16 %v4046
    %v4190 = vunpack.c.l.b16 %v4047
    %v4191 = vunpack.c.h.b16 %v4047
    %v4192 = vunpack.c.l.b16 %v4048
    %v4193 = vunpack.c.h.b16 %v4048
    %v4194 = vunpack.c.l.b16 %v4049
    %v4195 = vunpack.c.h.b16 %v4049
    %v4196 = vunpack.c.l.b16 %v4050
    %v4197 = vunpack.c.h.b16 %v4050
    %v4198 = vunpack.c.l.b16 %v4051
    %v4199 = vunpack.c.h.b16 %v4051
    %v4200 = vunpack.c.l.b16 %v4052
    %v4201 = vunpack.c.h.b16 %v4052
    %v4202 = vunpack.c.l.b16 %v4053
    %v4203 = vunpack.c.h.b16 %v4053
    %v4204 = vunpack.c.l.b16 %v4054
    %v4205 = vunpack.c.h.b16 %v4054
    %v4206 = vunpack.c.l.b16 %v4055
    %v4207 = vunpack.c.h.b16 %v4055
    %v4208 = vunpack.c.l.b16 %v4056
    %v4209 = vunpack.c.h.b16 %v4056
    %v4210 = vunpack.c.l.b16 %v4057
    %v4211 = vunpack.c.h.b16 %v4057
    %v4212 = vunpack.c.l.b16 %v4058
    %v4213 = vunpack.c.h.b16 %v4058
    %v4214 = vunpack.c.l.b16 %v4059
    %v4215 = vunpack.c.h.b16 %v4059
    %v4216 = vunpack.c.l.b16 %v4060
    %v4217 = vunpack.c.h.b16 %v4060
    %v4218 = vunpack.c.l.b16 %v4061
    %v4219 = vunpack.c.h.b16 %v4061
    %v4220 = vunpack.c.l.b16 %v4062
    %v4221 = vunpack.c.h.b16 %v4062
    %v4222 = vunpack.c.l.b16 %v4063
    %v4223 = vunpack.c.h.b16 %v4063
    %v4224 = vunpack.c.l.b16 %v4064
    %v4225 = vunpack.c.h.b16 %v4064
    %v4226 = vunpack.c.l.b16 %v4065
    %v4227 = vunpack.c.h.b16 %v4065
    %v4228 = vunpack.c.l.b16 %v4066
    %v4229 = vunpack.c.h.b16 %v4066
    %v4230 = vunpack.c.l.b16 %v4067
    %v4231 = vunpack.c.h.b16 %v4067
    %v4232 = vunpack.c.l.b16 %v4068
    %v4233 = vunpack.c.h.b16 %v4068
    %v4234 = vunpack.c.l.b16 %v4069
    %v4235 = vunpack.c.h.b16 %v4069
    %v4236 = vunpack.c.l.b16 %v4070
    %v4237 = vunpack.c.h.b16 %v4070
    %v4238 = vunpack.c.l.b16 %v4071
    %v4239 = vunpack.c.h.b16 %v4071
    %v4240 = vunpack.c.l.b16 %v4072
    %v4241 = vunpack.c.h.b16 %v4072
    %v4242 = vunpack.c.l.b16 %v4073
    %v4243 = vunpack.c.h.b16 %v4073
    %v4244 = vunpack.c.l.b16 %v4074
    %v4245 = vunpack.c.h.b16 %v4074
    %v4246 = vunpack.c.l.b16 %v4075
    %v4247 = vunpack.c.h.b16 %v4075
    %v4248 = vunpack.c.l.b16 %v4076
    %v4249 = vunpack.c.h.b16 %v4076
    %v4250 = vunpack.c.l.b16 %v4077
    %v4251 = vunpack.c.h.b16 %v4077
    %v4252 = vunpack.c.l.b16 %v4078
    %v4253 = vunpack.c.h.b16 %v4078
    %v4254 = vunpack.c.l.b16 %v4079
    %v4255 = vunpack.c.h.b16 %v4079
    %v4256 = vunpack.c.l.b16 %v4080
    %v4257 = vunpack.c.h.b16 %v4080
    %v4258 = vunpack.c.l.b16 %v4081
    %v4259 = vunpack.c.h.b16 %v4081
    %v4260 = vunpack.c.l.b16 %v4082
    %v4261 = vunpack.c.h.b16 %v4082
    %v4262 = vunpack.c.l.b16 %v4083
    %v4263 = vunpack.c.h.b16 %v4083
    %v4264 = vunpack.c.l.b16 %v4084
    %v4265 = vunpack.c.h.b16 %v4084
    %v4266 = vunpack.c.l.b16 %v4085
    %v4267 = vunpack.c.h.b16 %v4085
    %v4268 = vunpack.c.l.b16 %v4086
    %v4269 = vunpack.c.h.b16 %v4086
    %v4270 = vunpack.c.l.b16 %v4087
    %v4271 = vunpack.c.h.b16 %v4087
    %v4272 = vunpack.c.l.b16 %v4088
    %v4273 = vunpack.c.h.b16 %v4088
    %v4274 = vunpack.c.l.b16 %v4089
    %v4275 = vunpack.c.h.b16 %v4089
    %v4276 = vunpack.c.l.b16 %v4090
    %v4277 = vunpack.c.h.b16 %v4090
    %v4278 = vunpack.c.l.b16 %v4091
    %v4279 = vunpack.c.h.b16 %v4091
    %v4280 = vunpack.c.l.b16 %v4092
    %v4281 = vunpack.c.h.b16 %v4092
    %v4282 = vunpack.c.l.b16 %v4093
    %v4283 = vunpack.c.h.b16 %v4093
    %v4284 = vunpack.c.l.b16 %v4094
    %v4285 = vunpack.c.h.b16 %v4094
    %v4286 = vunpack.c.l.b16 %v4095
    %v4287 = vunpack.c.h.b16 %v4095
    %v4288 = vunpack.c.l.b16 %v4096
    %v4289 = vunpack.c.h.b16 %v4096
    %v4290 = vunpack.c.l.b16 %v4097
    %v4291 = vunpack.c.h.b16 %v4097
    %v4292 = vunpack.c.l.b16 %v4098
    %v4293 = vunpack.c.h.b16 %v4098
    %v4294 = vunpack.c.l.b16 %v4099
    %v4295 = vunpack.c.h.b16 %v4099
    %v4296 = vunpack.c.l.b16 %v4100
    %v4297 = vunpack.c.h.b16 %v4100
    %v4298 = vunpack.c.l.b16 %v4101
    %v4299 = vunpack.c.h.b16 %v4101
    %v4300 = vunpack.c.l.b16 %v4102
    %v4301 = vunpack.c.h.b16 %v4102
    %v4302 = vunpack.c.l.b16 %v4103
    %v4303 = vunpack.c.h.b16 %v4103
    %v4304 = vunpack.c.l.b16 %v4104
    %v4305 = vunpack.c.h.b16 %v4104
    %v4306 = vunpack.c.l.b16 %v4105
    %v4307 = vunpack.c.h.b16 %v4105
    %v4308 = vunpack.c.l.b16 %v4106
    %v4309 = vunpack.c.h.b16 %v4106
    %v4310 = vunpack.c.l.b16 %v4107
    %v4311 = vunpack.c.h.b16 %v4107
    %v4312 = vpack.c.b16 %v4186, %v4184
    %v4313 = vpack.c.b16 %v4187, %v4185
    %v4314 = vpack.c.b16 %v4190, %v4188
    %v4315 = vpack.c.b16 %v4191, %v4189
    %v4316 = vpack.c.b16 %v4194, %v4192
    %v4317 = vpack.c.b16 %v4195, %v4193
    %v4318 = vpack.c.b16 %v4198, %v4196
    %v4319 = vpack.c.b16 %v4199, %v4197
    %v4320 = vpack.c.b16 %v4202, %v4200
    %v4321 = vpack.c.b16 %v4203, %v4201
    %v4322 = vpack.c.b16 %v4206, %v4204
    %v4323 = vpack.c.b16 %v4207, %v4205
    %v4324 = vpack.c.b16 %v4210, %v4208
    %v4325 = vpack.c.b16 %v4211, %v4209
    %v4326 = vpack.c.b16 %v4214, %v4212
    %v4327 = vpack.c.b16 %v4215, %v4213
    %v4328 = vpack.c.b16 %v4218, %v4216
    %v4329 = vpack.c.b16 %v4219, %v4217
    %v4330 = vpack.c.b16 %v4222, %v4220
    %v4331 = vpack.c.b16 %v4223, %v4221
    %v4332 = vpack.c.b16 %v4226, %v4224
    %v4333 = vpack.c.b16 %v4227, %v4225
    %v4334 = vpack.c.b16 %v4230, %v4228
    %v4335 = vpack.c.b16 %v4231, %v4229
    %v4336 = vpack.c.b16 %v4234, %v4232
    %v4337 = vpack.c.b16 %v4235, %v4233
    %v4338 = vpack.c.b16 %v4238, %v4236
    %v4339 = vpack.c.b16 %v4239, %v4237
    %v4340 = vpack.c.b16 %v4242, %v4240
    %v4341 = vpack.c.b16 %v4243, %v4241
    %v4342 = vpack.c.b16 %v4246, %v4244
    %v4343 = vpack.c.b16 %v4247, %v4245
    %v4344 = vpack.c.b16 %v4250, %v4248
    %v4345 = vpack.c.b16 %v4251, %v4249
    %v4346 = vpack.c.b16 %v4254, %v4252
    %v4347 = vpack.c.b16 %v4255, %v4253
    %v4348 = vpack.c.b16 %v4258, %v4256
    %v4349 = vpack.c.b16 %v4259, %v4257
    %v4350 = vpack.c.b16 %v4262, %v4260
    %v4351 = vpack.c.b16 %v4263, %v4261
    %v4352 = vpack.c.b16 %v4266, %v4264
    %v4353 = vpack.c.b16 %v4267, %v4265
    %v4354 = vpack.c.b16 %v4270, %v4268
    %v4355 = vpack.c.b16 %v4271, %v4269
    %v4356 = vpack.c.b16 %v4274, %v4272
    %v4357 = vpack.c.b16 %v4275, %v4273
    %v4358 = vpack.c.b16 %v4278, %v4276
    %v4359 = vpack.c.b16 %v4279, %v4277
    %v4360 = vpack.c.b16 %v4282, %v4280
    %v4361 = vpack.c.b16 %v4283, %v4281
    %v4362 = vpack.c.b16 %v4286, %v4284
    %v4363 = vpack.c.b16 %v4287, %v4285
    %v4364 = vpack.c.b16 %v4290, %v4288
    %v4365 = vpack.c.b16 %v4291, %v4289
    %v4366 = vpack.c.b16 %v4294, %v4292
    %v4367 = vpack.c.b16 %v4295, %v4293
    %v4368 = vpack.c.b16 %v4298, %v4296
    %v4369 = vpack.c.b16 %v4299, %v4297
    %v4370 = vpack.c.b16 %v4302, %v4300
    %v4371 = vpack.c.b16 %v4303, %v4301
    %v4372 = vpack.c.b16 %v4306, %v4304
    %v4373 = vpack.c.b16 %v4307, %v4305
    %v4374 = vpack.c.b16 %v4310, %v4308
    %v4375 = vpack.c.b16 %v4311, %v4309
    %4440 = vmatprep.subr.bf16.mxu0 %v4313
    %4441 = vmatpush1.bf16.msra.mxu0 %v4312
    %4442 = vmatprep.subr.bf16.mxu0 %v4315
    %4443 = vmatpush1.bf16.msra.mxu0 %v4314
    %4444 = vmatprep.subr.bf16.mxu0 %v4317
    %4445 = vmatpush1.bf16.msra.mxu0 %v4316
    %4446 = vmatprep.subr.bf16.mxu0 %v4319
    %4447 = vmatpush1.bf16.msra.mxu0 %v4318
    %4448 = vmatprep.subr.bf16.mxu0 %v4321
    %4449 = vmatpush1.bf16.msra.mxu0 %v4320
    %4450 = vmatprep.subr.bf16.mxu0 %v4323
    %4451 = vmatpush1.bf16.msra.mxu0 %v4322
    %4452 = vmatprep.subr.bf16.mxu0 %v4325
    %4453 = vmatpush1.bf16.msra.mxu0 %v4324
    %4454 = vmatprep.subr.bf16.mxu0 %v4327
    %4455 = vmatpush1.bf16.msra.mxu0 %v4326
    %4456 = vmatprep.subr.bf16.mxu0 %v4329
    %4457 = vmatpush1.bf16.msra.mxu0 %v4328
    %4458 = vmatprep.subr.bf16.mxu0 %v4331
    %4459 = vmatpush1.bf16.msra.mxu0 %v4330
    %4460 = vmatprep.subr.bf16.mxu0 %v4333
    %4461 = vmatpush1.bf16.msra.mxu0 %v4332
    %4462 = vmatprep.subr.bf16.mxu0 %v4335
    %4463 = vmatpush1.bf16.msra.mxu0 %v4334
    %4464 = vmatprep.subr.bf16.mxu0 %v4337
    %4465 = vmatpush1.bf16.msra.mxu0 %v4336
    %4466 = vmatprep.subr.bf16.mxu0 %v4339
    %4467 = vmatpush1.bf16.msra.mxu0 %v4338
    %4468 = vmatprep.subr.bf16.mxu0 %v4341
    %4469 = vmatpush1.bf16.msra.mxu0 %v4340
    %4470 = vmatprep.subr.bf16.mxu0 %v4343
    %4471 = vmatpush1.bf16.msra.mxu0 %v4342
    %4472 = vmatprep.mubr.bf16.mxu0 %v3981
    %4473 = vmatmul.mubr.bf16.gmra.mrb[0].mxu0 %v3980
    %v4474 = vpop.f32.mrb[0].mxu0
    %v4475 = vadd.f32 %v4113, %v4474
    %v4476 = vpop.f32.mrb[0].mxu0
    %v4477 = vadd.f32 %v4117, %v4476
    %v4478 = vpop.f32.mrb[0].mxu0
    %v4479 = vadd.f32 %v4113, %v4478
    %v4480 = vpop.f32.mrb[0].mxu0
    %v4481 = vadd.f32 %v4117, %v4480
    %4482 = vmatprep.mubr.bf16.mxu0 %v3985
    %4483 = vmatmul.mubr.bf16.gmra.mrb[0].mxu0 %v3984
    %v4484 = vpop.f32.mrb[0].mxu0
    %v4485 = vadd.f32 %v4113, %v4484
    %v4486 = vpop.f32.mrb[0].mxu0
    %v4487 = vadd.f32 %v4117, %v4486
    %v4488 = vpop.f32.mrb[0].mxu0
    %v4489 = vadd.f32 %v4113, %v4488
    %v4490 = vpop.f32.mrb[0].mxu0
    %v4491 = vadd.f32 %v4117, %v4490
    %4492 = vmatprep.mubr.bf16.mxu0 %v3989
    %4493 = vmatmul.mubr.bf16.gmra.mrb[0].mxu0 %v3988
    %v4494 = vpop.f32.mrb[0].mxu0
    %v4495 = vadd.f32 %v4113, %v4494
    %v4496 = vpop.f32.mrb[0].mxu0
    %v4497 = vadd.f32 %v4117, %v4496
    %v4498 = vpop.f32.mrb[0].mxu0
    %v4499 = vadd.f32 %v4113, %v4498
    %v4500 = vpop.f32.mrb[0].mxu0
    %v4501 = vadd.f32 %v4117, %v4500
    %4502 = vmatprep.mubr.bf16.mxu0 %v3993
    %4503 = vmatmul.mubr.bf16.gmra.mrb[0].mxu0 %v3992
    %v4504 = vpop.f32.mrb[0].mxu0
    %v4505 = vadd.f32 %v4113, %v4504
    %v4506 = vpop.f32.mrb[0].mxu0
    %v4507 = vadd.f32 %v4117, %v4506
    %v4508 = vpop.f32.mrb[0].mxu0
    %v4509 = vadd.f32 %v4113, %v4508
    %v4510 = vpop.f32.mrb[0].mxu0
    %v4511 = vadd.f32 %v4117, %v4510
    %4512 = vmatprep.mubr.bf16.mxu0 %v3997
    %4513 = vmatmul.mubr.bf16.gmra.mrb[0].mxu0 %v3996
    %v4514 = vpop.f32.mrb[0].mxu0
    %v4515 = vadd.f32 %v4113, %v4514
    %v4516 = vpop.f32.mrb[0].mxu0
    %v4517 = vadd.f32 %v4117, %v4516
    %v4518 = vpop.f32.mrb[0].mxu0
    %v4519 = vadd.f32 %v4113, %v4518
    %v4520 = vpop.f32.mrb[0].mxu0
    %v4521 = vadd.f32 %v4117, %v4520
    %4522 = vmatprep.mubr.bf16.mxu0 %v4001
    %4523 = vmatmul.mubr.bf16.gmra.mrb[0].mxu0 %v4000
    %v4524 = vpop.f32.mrb[0].mxu0
    %v4525 = vadd.f32 %v4113, %v4524
    %v4526 = vpop.f32.mrb[0].mxu0
    %v4527 = vadd.f32 %v4117, %v4526
    %v4528 = vpop.f32.mrb[0].mxu0
    %v4529 = vadd.f32 %v4113, %v4528
    %v4530 = vpop.f32.mrb[0].mxu0
    %v4531 = vadd.f32 %v4117, %v4530
    %4532 = vmatprep.mubr.bf16.mxu0 %v4005
    %4533 = vmatmul.mubr.bf16.gmra.mrb[0].mxu0 %v4004
    %v4534 = vpop.f32.mrb[0].mxu0
    %v4535 = vadd.f32 %v4113, %v4534
    %v4536 = vpop.f32.mrb[0].mxu0
    %v4537 = vadd.f32 %v4117, %v4536
    %v4538 = vpop.f32.mrb[0].mxu0
    %v4539 = vadd.f32 %v4113, %v4538
    %v4540 = vpop.f32.mrb[0].mxu0
    %v4541 = vadd.f32 %v4117, %v4540
    %4542 = vmatprep.mubr.bf16.mxu0 %v4009
    %4543 = vmatmul.mubr.bf16.gmra.mrb[0].mxu0 %v4008
    %v4544 = vpop.f32.mrb[0].mxu0
    %v4545 = vadd.f32 %v4113, %v4544
    %v4546 = vpop.f32.mrb[0].mxu0
    %v4547 = vadd.f32 %v4117, %v4546
    %v4548 = vpop.f32.mrb[0].mxu0
    %v4549 = vadd.f32 %v4113, %v4548
    %v4550 = vpop.f32.mrb[0].mxu0
    %v4551 = vadd.f32 %v4117, %v4550
    %4552 = vmatprep.mubr.bf16.mxu0 %v4013
    %4553 = vmatmul.mubr.bf16.gmra.mrb[0].mxu0 %v4012
    %v4554 = vpop.f32.mrb[0].mxu0
    %v4555 = vadd.f32 %v4113, %v4554
    %v4556 = vpop.f32.mrb[0].mxu0
    %v4557 = vadd.f32 %v4117, %v4556
    %v4558 = vpop.f32.mrb[0].mxu0
    %v4559 = vadd.f32 %v4113, %v4558
    %v4560 = vpop.f32.mrb[0].mxu0
    %v4561 = vadd.f32 %v4117, %v4560
    %4562 = vmatprep.mubr.bf16.mxu0 %v4017
    %4563 = vmatmul.mubr.bf16.gmra.mrb[0].mxu0 %v4016
    %v4564 = vpop.f32.mrb[0].mxu0
    %v4565 = vadd.f32 %v4113, %v4564
    %v4566 = vpop.f32.mrb[0].mxu0
    %v4567 = vadd.f32 %v4117, %v4566
    %v4568 = vpop.f32.mrb[0].mxu0
    %v4569 = vadd.f32 %v4113, %v4568
    %v4570 = vpop.f32.mrb[0].mxu0
    %v4571 = vadd.f32 %v4117, %v4570
    %4572 = vmatprep.mubr.bf16.mxu0 %v4021
    %4573 = vmatmul.mubr.bf16.gmra.mrb[0].mxu0 %v4020
    %v4574 = vpop.f32.mrb[0].mxu0
    %v4575 = vadd.f32 %v4113, %v4574
    %v4576 = vpop.f32.mrb[0].mxu0
    %v4577 = vadd.f32 %v4117, %v4576
    %v4578 = vpop.f32.mrb[0].mxu0
    %v4579 = vadd.f32 %v4113, %v4578
    %v4580 = vpop.f32.mrb[0].mxu0
    %v4581 = vadd.f32 %v4117, %v4580
    %4582 = vmatprep.mubr.bf16.mxu0 %v4025
    %4583 = vmatmul.mubr.bf16.gmra.mrb[0].mxu0 %v4024
    %v4584 = vpop.f32.mrb[0].mxu0
    %v4585 = vadd.f32 %v4113, %v4584
    %v4586 = vpop.f32.mrb[0].mxu0
    %v4587 = vadd.f32 %v4117, %v4586
    %v4588 = vpop.f32.mrb[0].mxu0
    %v4589 = vadd.f32 %v4113, %v4588
    %v4590 = vpop.f32.mrb[0].mxu0
    %v4591 = vadd.f32 %v4117, %v4590
    %4592 = vmatprep.mubr.bf16.mxu0 %v4029
    %4593 = vmatmul.mubr.bf16.gmra.mrb[0].mxu0 %v4028
    %v4594 = vpop.f32.mrb[0].mxu0
    %v4595 = vadd.f32 %v4113, %v4594
    %v4596 = vpop.f32.mrb[0].mxu0
    %v4597 = vadd.f32 %v4117, %v4596
    %v4598 = vpop.f32.mrb[0].mxu0
    %v4599 = vadd.f32 %v4113, %v4598
    %v4600 = vpop.f32.mrb[0].mxu0
    %v4601 = vadd.f32 %v4117, %v4600
    %4602 = vmatprep.mubr.bf16.mxu0 %v4033
    %4603 = vmatmul.mubr.bf16.gmra.mrb[0].mxu0 %v4032
    %v4604 = vpop.f32.mrb[0].mxu0
    %v4605 = vadd.f32 %v4113, %v4604
    %v4606 = vpop.f32.mrb[0].mxu0
    %v4607 = vadd.f32 %v4117, %v4606
    %v4608 = vpop.f32.mrb[0].mxu0
    %v4609 = vadd.f32 %v4113, %v4608
    %v4610 = vpop.f32.mrb[0].mxu0
    %v4611 = vadd.f32 %v4117, %v4610
    %4612 = vmatprep.mubr.bf16.mxu0 %v4037
    %4613 = vmatmul.mubr.bf16.gmra.mrb[0].mxu0 %v4036
    %v4614 = vpop.f32.mrb[0].mxu0
    %v4615 = vadd.f32 %v4113, %v4614
    %v4616 = vpop.f32.mrb[0].mxu0
    %v4617 = vadd.f32 %v4117, %v4616
    %v4618 = vpop.f32.mrb[0].mxu0
    %v4619 = vadd.f32 %v4113, %v4618
    %v4620 = vpop.f32.mrb[0].mxu0
    %v4621 = vadd.f32 %v4117, %v4620
    %4622 = vmatprep.mubr.bf16.mxu0 %v4041
    %4623 = vmatmul.mubr.bf16.gmra.mrb[0].mxu0 %v4040
    %v4624 = vpop.f32.mrb[0].mxu0
    %v4625 = vadd.f32 %v4113, %v4624
    %v4626 = vpop.f32.mrb[0].mxu0
    %v4627 = vadd.f32 %v4117, %v4626
    %v4628 = vpop.f32.mrb[0].mxu0
    %v4629 = vadd.f32 %v4113, %v4628
    %v4630 = vpop.f32.mrb[0].mxu0
    %v4631 = vadd.f32 %v4117, %v4630
    %4632 = vdwg.mxu0
    %4633 = vmatprep.subr.bf16.mxu0 %v4345
    %4634 = vmatpush1.bf16.msra.mxu0 %v4344
    %4635 = vmatprep.subr.bf16.mxu0 %v4347
    %4636 = vmatpush1.bf16.msra.mxu0 %v4346
    %4637 = vmatprep.subr.bf16.mxu0 %v4349
    %4638 = vmatpush1.bf16.msra.mxu0 %v4348
    %4639 = vmatprep.subr.bf16.mxu0 %v4351
    %4640 = vmatpush1.bf16.msra.mxu0 %v4350
    %4641 = vmatprep.subr.bf16.mxu0 %v4353
    %4642 = vmatpush1.bf16.msra.mxu0 %v4352
    %4643 = vmatprep.subr.bf16.mxu0 %v4355
    %4644 = vmatpush1.bf16.msra.mxu0 %v4354
    %4645 = vmatprep.subr.bf16.mxu0 %v4357
    %4646 = vmatpush1.bf16.msra.mxu0 %v4356
    %4647 = vmatprep.subr.bf16.mxu0 %v4359
    %4648 = vmatpush1.bf16.msra.mxu0 %v4358
    %4649 = vmatprep.subr.bf16.mxu0 %v4361
    %4650 = vmatpush1.bf16.msra.mxu0 %v4360
    %4651 = vmatprep.subr.bf16.mxu0 %v4363
    %4652 = vmatpush1.bf16.msra.mxu0 %v4362
    %4653 = vmatprep.subr.bf16.mxu0 %v4365
    %4654 = vmatpush1.bf16.msra.mxu0 %v4364
    %4655 = vmatprep.subr.bf16.mxu0 %v4367
    %4656 = vmatpush1.bf16.msra.mxu0 %v4366
    %4657 = vmatprep.subr.bf16.mxu0 %v4369
    %4658 = vmatpush1.bf16.msra.mxu0 %v4368
    %4659 = vmatprep.subr.bf16.mxu0 %v4371
    %4660 = vmatpush1.bf16.msra.mxu0 %v4370
    %4661 = vmatprep.subr.bf16.mxu0 %v4373
    %4662 = vmatpush1.bf16.msra.mxu0 %v4372
    %4663 = vmatprep.subr.bf16.mxu0 %v4375
    %4664 = vmatpush1.bf16.msra.mxu0 %v4374
    %4665 = vmatprep.mubr.bf16.mxu0 %v3983
    %4666 = vmatmul.mubr.bf16.gmra.mrb[0].mxu0 %v3982
    %v4667 = vpop.f32.mrb[0].mxu0
    %v4668 = vadd.f32 %v4475, %v4667
    %v4669 = vpop.f32.mrb[0].mxu0
    %v4670 = vadd.f32 %v4477, %v4669
    %v4671 = vpop.f32.mrb[0].mxu0
    %v4672 = vadd.f32 %v4479, %v4671
    %v4673 = vpop.f32.mrb[0].mxu0
    %v4674 = vadd.f32 %v4481, %v4673
    %4675 = vmatprep.mubr.bf16.mxu0 %v3987
    %4676 = vmatmul.mubr.bf16.gmra.mrb[0].mxu0 %v3986
    %v4677 = vpop.f32.mrb[0].mxu0
    %v4678 = vadd.f32 %v4485, %v4677
    %v4679 = vpop.f32.mrb[0].mxu0
    %v4680 = vadd.f32 %v4487, %v4679
    %v4681 = vpop.f32.mrb[0].mxu0
    %v4682 = vadd.f32 %v4489, %v4681
    %v4683 = vpop.f32.mrb[0].mxu0
    %v4684 = vadd.f32 %v4491, %v4683
    %4685 = vmatprep.mubr.bf16.mxu0 %v3991
    %4686 = vmatmul.mubr.bf16.gmra.mrb[0].mxu0 %v3990
    %v4687 = vpop.f32.mrb[0].mxu0
    %v4688 = vadd.f32 %v4495, %v4687
    %v4689 = vpop.f32.mrb[0].mxu0
    %v4690 = vadd.f32 %v4497, %v4689
    %v4691 = vpop.f32.mrb[0].mxu0
    %v4692 = vadd.f32 %v4499, %v4691
    %v4693 = vpop.f32.mrb[0].mxu0
    %v4694 = vadd.f32 %v4501, %v4693
    %4695 = vmatprep.mubr.bf16.mxu0 %v3995
    %4696 = vmatmul.mubr.bf16.gmra.mrb[0].mxu0 %v3994
    %v4697 = vpop.f32.mrb[0].mxu0
    %v4698 = vadd.f32 %v4505, %v4697
    %v4699 = vpop.f32.mrb[0].mxu0
    %v4700 = vadd.f32 %v4507, %v4699
    %v4701 = vpop.f32.mrb[0].mxu0
    %v4702 = vadd.f32 %v4509, %v4701
    %v4703 = vpop.f32.mrb[0].mxu0
    %v4704 = vadd.f32 %v4511, %v4703
    %4705 = vmatprep.mubr.bf16.mxu0 %v3999
    %4706 = vmatmul.mubr.bf16.gmra.mrb[0].mxu0 %v3998
    %v4707 = vpop.f32.mrb[0].mxu0
    %v4708 = vadd.f32 %v4515, %v4707
    %v4709 = vpop.f32.mrb[0].mxu0
    %v4710 = vadd.f32 %v4517, %v4709
    %v4711 = vpop.f32.mrb[0].mxu0
    %v4712 = vadd.f32 %v4519, %v4711
    %v4713 = vpop.f32.mrb[0].mxu0
    %v4714 = vadd.f32 %v4521, %v4713
    %4715 = vmatprep.mubr.bf16.mxu0 %v4003
    %4716 = vmatmul.mubr.bf16.gmra.mrb[0].mxu0 %v4002
    %v4717 = vpop.f32.mrb[0].mxu0
    %v4718 = vadd.f32 %v4525, %v4717
    %v4719 = vpop.f32.mrb[0].mxu0
    %v4720 = vadd.f32 %v4527, %v4719
    %v4721 = vpop.f32.mrb[0].mxu0
    %v4722 = vadd.f32 %v4529, %v4721
    %v4723 = vpop.f32.mrb[0].mxu0
    %v4724 = vadd.f32 %v4531, %v4723
    %4725 = vmatprep.mubr.bf16.mxu0 %v4007
    %4726 = vmatmul.mubr.bf16.gmra.mrb[0].mxu0 %v4006
    %v4727 = vpop.f32.mrb[0].mxu0
    %v4728 = vadd.f32 %v4535, %v4727
    %v4729 = vpop.f32.mrb[0].mxu0
    %v4730 = vadd.f32 %v4537, %v4729
    %v4731 = vpop.f32.mrb[0].mxu0
    %v4732 = vadd.f32 %v4539, %v4731
    %v4733 = vpop.f32.mrb[0].mxu0
    %v4734 = vadd.f32 %v4541, %v4733
    %4735 = vmatprep.mubr.bf16.mxu0 %v4011
    %4736 = vmatmul.mubr.bf16.gmra.mrb[0].mxu0 %v4010
    %v4737 = vpop.f32.mrb[0].mxu0
    %v4738 = vadd.f32 %v4545, %v4737
    %v4739 = vpop.f32.mrb[0].mxu0
    %v4740 = vadd.f32 %v4547, %v4739
    %v4741 = vpop.f32.mrb[0].mxu0
    %v4742 = vadd.f32 %v4549, %v4741
    %v4743 = vpop.f32.mrb[0].mxu0
    %v4744 = vadd.f32 %v4551, %v4743
    %4745 = vmatprep.mubr.bf16.mxu0 %v4015
    %4746 = vmatmul.mubr.bf16.gmra.mrb[0].mxu0 %v4014
    %v4747 = vpop.f32.mrb[0].mxu0
    %v4748 = vadd.f32 %v4555, %v4747
    %v4749 = vpop.f32.mrb[0].mxu0
    %v4750 = vadd.f32 %v4557, %v4749
    %v4751 = vpop.f32.mrb[0].mxu0
    %v4752 = vadd.f32 %v4559, %v4751
    %v4753 = vpop.f32.mrb[0].mxu0
    %v4754 = vadd.f32 %v4561, %v4753
    %4755 = vmatprep.mubr.bf16.mxu0 %v4019
    %4756 = vmatmul.mubr.bf16.gmra.mrb[0].mxu0 %v4018
    %v4757 = vpop.f32.mrb[0].mxu0
    %v4758 = vadd.f32 %v4565, %v4757
    %v4759 = vpop.f32.mrb[0].mxu0
    %v4760 = vadd.f32 %v4567, %v4759
    %v4761 = vpop.f32.mrb[0].mxu0
    %v4762 = vadd.f32 %v4569, %v4761
    %v4763 = vpop.f32.mrb[0].mxu0
    %v4764 = vadd.f32 %v4571, %v4763
    %4765 = vmatprep.mubr.bf16.mxu0 %v4023
    %4766 = vmatmul.mubr.bf16.gmra.mrb[0].mxu0 %v4022
    %v4767 = vpop.f32.mrb[0].mxu0
    %v4768 = vadd.f32 %v4575, %v4767
    %v4769 = vpop.f32.mrb[0].mxu0
    %v4770 = vadd.f32 %v4577, %v4769
    %v4771 = vpop.f32.mrb[0].mxu0
    %v4772 = vadd.f32 %v4579, %v4771
    %v4773 = vpop.f32.mrb[0].mxu0
    %v4774 = vadd.f32 %v4581, %v4773
    %4775 = vmatprep.mubr.bf16.mxu0 %v4027
    %4776 = vmatmul.mubr.bf16.gmra.mrb[0].mxu0 %v4026
    %v4777 = vpop.f32.mrb[0].mxu0
    %v4778 = vadd.f32 %v4585, %v4777
    %v4779 = vpop.f32.mrb[0].mxu0
    %v4780 = vadd.f32 %v4587, %v4779
    %v4781 = vpop.f32.mrb[0].mxu0
    %v4782 = vadd.f32 %v4589, %v4781
    %v4783 = vpop.f32.mrb[0].mxu0
    %v4784 = vadd.f32 %v4591, %v4783
    %4785 = vmatprep.mubr.bf16.mxu0 %v4031
    %4786 = vmatmul.mubr.bf16.gmra.mrb[0].mxu0 %v4030
    %v4787 = vpop.f32.mrb[0].mxu0
    %v4788 = vadd.f32 %v4595, %v4787
    %v4789 = vpop.f32.mrb[0].mxu0
    %v4790 = vadd.f32 %v4597, %v4789
    %v4791 = vpop.f32.mrb[0].mxu0
    %v4792 = vadd.f32 %v4599, %v4791
    %v4793 = vpop.f32.mrb[0].mxu0
    %v4794 = vadd.f32 %v4601, %v4793
    %4795 = vmatprep.mubr.bf16.mxu0 %v4035
    %4796 = vmatmul.mubr.bf16.gmra.mrb[0].mxu0 %v4034
    %v4797 = vpop.f32.mrb[0].mxu0
    %v4798 = vadd.f32 %v4605, %v4797
    %v4799 = vpop.f32.mrb[0].mxu0
    %v4800 = vadd.f32 %v4607, %v4799
    %v4801 = vpop.f32.mrb[0].mxu0
    %v4802 = vadd.f32 %v4609, %v4801
    %v4803 = vpop.f32.mrb[0].mxu0
    %v4804 = vadd.f32 %v4611, %v4803
    %4805 = vmatprep.mubr.bf16.mxu0 %v4039
    %4806 = vmatmul.mubr.bf16.gmra.mrb[0].mxu0 %v4038
    %v4807 = vpop.f32.mrb[0].mxu0
    %v4808 = vadd.f32 %v4615, %v4807
    %v4809 = vpop.f32.mrb[0].mxu0
    %v4810 = vadd.f32 %v4617, %v4809
    %v4811 = vpop.f32.mrb[0].mxu0
    %v4812 = vadd.f32 %v4619, %v4811
    %v4813 = vpop.f32.mrb[0].mxu0
    %v4814 = vadd.f32 %v4621, %v4813
    %4815 = vmatprep.mubr.bf16.mxu0 %v4043
    %4816 = vmatmul.mubr.bf16.gmra.mrb[0].mxu0 %v4042
    %v4817 = vpop.f32.mrb[0].mxu0
    %v4818 = vadd.f32 %v4625, %v4817
    %v4819 = vpop.f32.mrb[0].mxu0
    %v4820 = vadd.f32 %v4627, %v4819
    %v4821 = vpop.f32.mrb[0].mxu0
    %v4822 = vadd.f32 %v4629, %v4821
    %v4823 = vpop.f32.mrb[0].mxu0
    %v4824 = vadd.f32 %v4631, %v4823
    %4825 = vdwg.mxu0
    %v4826 = vmax.f32 %v4668, 0.0
    %v4827 = vmax.f32 %v4670, 0.0
    %v4828 = vmax.f32 %v4672, 0.0
    %v4829 = vmax.f32 %v4674, 0.0
    %v4830 = vmax.f32 %v4678, 0.0
    %v4831 = vmax.f32 %v4680, 0.0
    %v4832 = vmax.f32 %v4682, 0.0
    %v4833 = vmax.f32 %v4684, 0.0
    %v4834 = vmax.f32 %v4688, 0.0
    %v4835 = vmax.f32 %v4690, 0.0
    %v4836 = vmax.f32 %v4692, 0.0
    %v4837 = vmax.f32 %v4694, 0.0
    %v4838 = vmax.f32 %v4698, 0.0
    %v4839 = vmax.f32 %v4700, 0.0
    %v4840 = vmax.f32 %v4702, 0.0
    %v4841 = vmax.f32 %v4704, 0.0
    %v4842 = vmax.f32 %v4708, 0.0
    %v4843 = vmax.f32 %v4710, 0.0
    %v4844 = vmax.f32 %v4712, 0.0
    %v4845 = vmax.f32 %v4714, 0.0
    %v4846 = vmax.f32 %v4718, 0.0
    %v4847 = vmax.f32 %v4720, 0.0
    %v4848 = vmax.f32 %v4722, 0.0
    %v4849 = vmax.f32 %v4724, 0.0
    %v4850 = vmax.f32 %v4728, 0.0
    %v4851 = vmax.f32 %v4730, 0.0
    %v4852 = vmax.f32 %v4732, 0.0
    %v4853 = vmax.f32 %v4734, 0.0
    %v4854 = vmax.f32 %v4738, 0.0
    %v4855 = vmax.f32 %v4740, 0.0
    %v4856 = vmax.f32 %v4742, 0.0
    %v4857 = vmax.f32 %v4744, 0.0
    %v4858 = vmax.f32 %v4748, 0.0
    %v4859 = vmax.f32 %v4750, 0.0
    %v4860 = vmax.f32 %v4752, 0.0
    %v4861 = vmax.f32 %v4754, 0.0
    %v4862 = vmax.f32 %v4758, 0.0
    %v4863 = vmax.f32 %v4760, 0.0
    %v4864 = vmax.f32 %v4762, 0.0
    %v4865 = vmax.f32 %v4764, 0.0
    %v4866 = vmax.f32 %v4768, 0.0
    %v4867 = vmax.f32 %v4770, 0.0
    %v4868 = vmax.f32 %v4772, 0.0
    %v4869 = vmax.f32 %v4774, 0.0
    %v4870 = vmax.f32 %v4778, 0.0
    %v4871 = vmax.f32 %v4780, 0.0
    %v4872 = vmax.f32 %v4782, 0.0
    %v4873 = vmax.f32 %v4784, 0.0
    %v4874 = vmax.f32 %v4788, 0.0
    %v4875 = vmax.f32 %v4790, 0.0
    %v4876 = vmax.f32 %v4792, 0.0
    %v4877 = vmax.f32 %v4794, 0.0
    %v4878 = vmax.f32 %v4798, 0.0
    %v4879 = vmax.f32 %v4800, 0.0
    %v4880 = vmax.f32 %v4802, 0.0
    %v4881 = vmax.f32 %v4804, 0.0
    %v4882 = vmax.f32 %v4808, 0.0
    %v4883 = vmax.f32 %v4810, 0.0
    %v4884 = vmax.f32 %v4812, 0.0
    %v4885 = vmax.f32 %v4814, 0.0
    %v4886 = vmax.f32 %v4818, 0.0
    %v4887 = vmax.f32 %v4820, 0.0
    %v4888 = vmax.f32 %v4822, 0.0
    %v4889 = vmax.f32 %v4824, 0.0
    %4890 = vst [vmem:[#allocation5] sm:$0xff] %v4826
    %4891 = vst [vmem:[#allocation5 + $0x8] sm:$0xff] %v4827
    %4892 = vst [vmem:[#allocation5 + $0x10] sm:$0xff] %v4828
    %4893 = vst [vmem:[#allocation5 + $0x18] sm:$0xff] %v4829
    %4894 = vst [vmem:[#allocation5 + $0x20] sm:$0xff] %v4830
    %4895 = vst [vmem:[#allocation5 + $0x28] sm:$0xff] %v4831
    %4896 = vst [vmem:[#allocation5 + $0x30] sm:$0xff] %v4832
    %4897 = vst [vmem:[#allocation5 + $0x38] sm:$0xff] %v4833
    %4898 = vst [vmem:[#allocation5 + $0x40] sm:$0xff] %v4834
    %4899 = vst [vmem:[#allocation5 + $0x48] sm:$0xff] %v4835
    %4900 = vst [vmem:[#allocation5 + $0x50] sm:$0xff] %v4836
    %4901 = vst [vmem:[#allocation5 + $0x58] sm:$0xff] %v4837
    %4902 = vst [vmem:[#allocation5 + $0x60] sm:$0xff] %v4838
    %4903 = vst [vmem:[#allocation5 + $0x68] sm:$0xff] %v4839
    %4904 = vst [vmem:[#allocation5 + $0x70] sm:$0xff] %v4840
    %4905 = vst [vmem:[#allocation5 + $0x78] sm:$0xff] %v4841
    %4906 = vst [vmem:[#allocation5 + $0x80] sm:$0xff] %v4842
    %4907 = vst [vmem:[#allocation5 + $0x88] sm:$0xff] %v4843
    %4908 = vst [vmem:[#allocation5 + $0x90] sm:$0xff] %v4844
    %4909 = vst [vmem:[#allocation5 + $0x98] sm:$0xff] %v4845
    %4910 = vst [vmem:[#allocation5 + $0xa0] sm:$0xff] %v4846
    %4911 = vst [vmem:[#allocation5 + $0xa8] sm:$0xff] %v4847
    %4912 = vst [vmem:[#allocation5 + $0xb0] sm:$0xff] %v4848
    %4913 = vst [vmem:[#allocation5 + $0xb8] sm:$0xff] %v4849
    %4914 = vst [vmem:[#allocation5 + $0xc0] sm:$0xff] %v4850
    %4915 = vst [vmem:[#allocation5 + $0xc8] sm:$0xff] %v4851
    %4916 = vst [vmem:[#allocation5 + $0xd0] sm:$0xff] %v4852
    %4917 = vst [vmem:[#allocation5 + $0xd8] sm:$0xff] %v4853
    %4918 = vst [vmem:[#allocation5 + $0xe0] sm:$0xff] %v4854
    %4919 = vst [vmem:[#allocation5 + $0xe8] sm:$0xff] %v4855
    %4920 = vst [vmem:[#allocation5 + $0xf0] sm:$0xff] %v4856
    %4921 = vst [vmem:[#allocation5 + $0xf8] sm:$0xff] %v4857
    %4922 = vst [vmem:[#allocation5 + $0x100] sm:$0xff] %v4858
    %4923 = vst [vmem:[#allocation5 + $0x108] sm:$0xff] %v4859
    %4924 = vst [vmem:[#allocation5 + $0x110] sm:$0xff] %v4860
    %4925 = vst [vmem:[#allocation5 + $0x118] sm:$0xff] %v4861
    %4926 = vst [vmem:[#allocation5 + $0x120] sm:$0xff] %v4862
    %4927 = vst [vmem:[#allocation5 + $0x128] sm:$0xff] %v4863
    %4928 = vst [vmem:[#allocation5 + $0x130] sm:$0xff] %v4864
    %4929 = vst [vmem:[#allocation5 + $0x138] sm:$0xff] %v4865
    %4930 = vst [vmem:[#allocation5 + $0x140] sm:$0xff] %v4866
    %4931 = vst [vmem:[#allocation5 + $0x148] sm:$0xff] %v4867
    %4932 = vst [vmem:[#allocation5 + $0x150] sm:$0xff] %v4868
    %4933 = vst [vmem:[#allocation5 + $0x158] sm:$0xff] %v4869
    %4934 = vst [vmem:[#allocation5 + $0x160] sm:$0xff] %v4870
    %4935 = vst [vmem:[#allocation5 + $0x168] sm:$0xff] %v4871
    %4936 = vst [vmem:[#allocation5 + $0x170] sm:$0xff] %v4872
    %4937 = vst [vmem:[#allocation5 + $0x178] sm:$0xff] %v4873
    %4938 = vst [vmem:[#allocation5 + $0x180] sm:$0xff] %v4874
    %4939 = vst [vmem:[#allocation5 + $0x188] sm:$0xff] %v4875
    %4940 = vst [vmem:[#allocation5 + $0x190] sm:$0xff] %v4876
    %4941 = vst [vmem:[#allocation5 + $0x198] sm:$0xff] %v4877
    %4942 = vst [vmem:[#allocation5 + $0x1a0] sm:$0xff] %v4878
    %4943 = vst [vmem:[#allocation5 + $0x1a8] sm:$0xff] %v4879
    %4944 = vst [vmem:[#allocation5 + $0x1b0] sm:$0xff] %v4880
    %4945 = vst [vmem:[#allocation5 + $0x1b8] sm:$0xff] %v4881
    %4946 = vst [vmem:[#allocation5 + $0x1c0] sm:$0xff] %v4882
    %4947 = vst [vmem:[#allocation5 + $0x1c8] sm:$0xff] %v4883
    %4948 = vst [vmem:[#allocation5 + $0x1d0] sm:$0xff] %v4884
    %4949 = vst [vmem:[#allocation5 + $0x1d8] sm:$0xff] %v4885
    %4950 = vst [vmem:[#allocation5 + $0x1e0] sm:$0xff] %v4886
    %4951 = vst [vmem:[#allocation5 + $0x1e8] sm:$0xff] %v4887
    %4952 = vst [vmem:[#allocation5 + $0x1f0] sm:$0xff] %v4888
    %4953 = vst [vmem:[#allocation5 + $0x1f8] sm:$0xff] %v4889
    // Predicated region
    $region26: #{tpu_custom_call.1} parent=1 // pred_check
      _
    $region27: #{tpu_custom_call.1} parent=1 // pred_check_branch
      %4955 = sbr.rel (0) target = $region29
    $region28: #{tpu_custom_call.1} parent=1 // pred_region
      %s4957 = ssub.s32 8192, 8192
      %4958 = vsyncadd [#allocation4], %s4957
      %s4959 = sshll.u32 [#allocation5], 4
      %s4960 = int_to_ptr.vmem [resolvable:$true] %s4959
      %4965 = dma.vmem_to_hbm [thread:$0]  %s4960, 8192, %s5, [#allocation4], 256, 256, 16
    $region29: #{tpu_custom_call.1} parent=1 // pred_fallthru
      _
    // Predicated region
    $region30: #{tpu_custom_call.1} parent=1 // pred_check
      _
    $region31: #{tpu_custom_call.1} parent=1 // pred_check_branch
      %4967 = sbr.rel (0) target = $region33
    $region32: #{tpu_custom_call.1} parent=1 // pred_region
      %4968 = dma.done [#allocation4], 8192
    $region33: #{tpu_custom_call.1} parent=1 // pred_fallthru
      _
    %4969 = vsyncpa [#allocation3], 1
    %4970 = vsyncpa [#allocation4], 1

</llo_original>
